<compile_context>
chip_gen: v6e
topology: v6e:2x2x1
jax: 0.10.0
libtpu: 0.0.40
codegen_flags: <defaults>
</compile_context>

<pallas_src>
import functools
import math

import jax
import jax.numpy as jnp
import numpy as np
from jax.experimental import pallas as pl
from jax.experimental.pallas import tpu as pltpu


# --------------------------------------------------------------------------- #
# Constant "parameter" matrices (module __init__: freq[e] = 2**e).
# --------------------------------------------------------------------------- #
@functools.lru_cache(maxsize=None)
def _build_constants(D, embed_dim):
    F = embed_dim * D
    TOT = (D + 1) * 2 * F

    # phase_mat [D, 2F]: p2 = x @ phase_mat, p2[:, j2] = freq[(j2%F)//D] * x[:, (j2%F)%D]
    j2 = np.arange(2 * F)
    jm = j2 % F
    freq_j = (2.0 ** (jm // D)).astype(np.float32)
    phase_mat = np.where((jm % D)[None, :] == np.arange(D)[:, None],
                         freq_j[None, :], 0.0).astype(np.float32)

    # Output-column bookkeeping: columns [0, 2F) are y, column 2F + i*2F + k is G[:, i, k].
    c = np.arange(TOT)
    is_y = c < 2 * F
    k = np.where(is_y, c, (c - 2 * F) % (2 * F))

    # trig_mat [2F, TOT] (entries 0/+1/-1): wslab = (scale2*sin_cos) @ trig_mat gives
    #   wslab[:, :2F]          = y                       (identity block)
    #   wslab[:, 2F+i*2F+k]    = scale*cos(p_k)  (k <  F)
    #                          = -scale*sin(p_j) (k >= F, j = k-F)
    src = np.where(is_y, k, np.where(k < F, k + F, k - F))
    sgn = np.where(is_y, 1.0, np.where(k < F, 1.0, -1.0)).astype(np.float32)
    trig_mat = (np.equal(np.arange(2 * F)[:, None], src[None, :]) *
                sgn[None, :]).astype(np.float32)

    # jac_mat [D*D, TOT] with freq folded in: lin = jf @ jac_mat gives
    #   lin[:, 2F+i*2F+k] = freq[(k%F)//D] * J[:, i, k%D],   lin[:, :2F] = 0.
    i_c = np.where(is_y, -1, (c - 2 * F) // (2 * F))
    d_c = k % D
    freq_c = (2.0 ** ((k % F) // D)).astype(np.float32)
    r_i = np.arange(D * D) // D
    r_d = np.arange(D * D) % D
    jac_mat = np.where((r_i[:, None] == i_c[None, :]) & (r_d[:, None] == d_c[None, :]),
                       freq_c[None, :], 0.0).astype(np.float32)

    return phase_mat, jac_mat, trig_mat


# --------------------------------------------------------------------------- #
# Kernel
# --------------------------------------------------------------------------- #
def _pe_grad_kernel(x_ref, jf_ref, scale_ref, pmat_ref, jmat_ref, tmat_ref,
                    out_ref, *, F, TOT):
    """One batch tile. Produces the combined [TB, (D+1)*2F] slab [y | g_flat]."""
    f32 = jnp.float32
    hp = jax.lax.Precision.HIGHEST  # tiny matmuls, MXU has slack; keep f32 accuracy

    # --- phases for [sin | cos]: single sin over 2F lanes (cos x = sin(x+pi/2)) ---
    col2 = jax.lax.broadcasted_iota(jnp.int32, (1, 2 * F), 1)
    phase_off = jnp.where(col2 >= F, f32(0.5 * math.pi), f32(0.0))
    p2 = jnp.dot(x_ref[...], pmat_ref[...],
                 preferred_element_type=f32, precision=hp) + phase_off   # [TB, 2F]
    s2 = jnp.sin(p2)                                                     # ONE transcendental

    # y slab: ws = [scale*sin(p) | scale*cos(p)]
    scale = scale_ref[...]
    scale2 = jnp.concatenate([scale, scale], axis=-1)                    # [TB, 2F]
    ws = scale2 * s2                                                     # == y

    # trig/scale weight slab for the whole output, via one MXU matmul (no lane concat)
    wslab = jnp.dot(ws, tmat_ref[...],
                    preferred_element_type=f32, precision=hp)            # [TB, TOT]

    # linear slab: [1 ... 1 | freq * replicated Jacobian]
    colt = jax.lax.broadcasted_iota(jnp.int32, (1, TOT), 1)
    lead = jnp.where(colt < 2 * F, f32(1.0), f32(0.0))
    lin = jnp.dot(jf_ref[...], jmat_ref[...],
                  preferred_element_type=f32, precision=hp) + lead       # [TB, TOT]

    # single lane-dense store of [y | g_flat]
    out_ref[...] = lin * wslab


# --------------------------------------------------------------------------- #
# Tiling heuristics (generation-aware, per review)
# --------------------------------------------------------------------------- #
_MAX_TB = 1024


def _num_tensorcores_per_device():
    """Best-effort: 2 for megacore-style devices (v4/v5p/v7*), else 1."""
    try:
        kind = jax.devices()[0].device_kind.lower()
    except Exception:
        return 1
    if any(tag in kind for tag in ("v4", "v5p", "v7")):
        return 2
    return 1


def _pick_batch_tile(B, n_tc):
    if B <= 8:
        return B
    if n_tc <= 1:
        # Single-TC chips (v5e/v6e): one grid step for small/medium B.
        if B <= _MAX_TB:
            return B
        steps = pl.cdiv(B, _MAX_TB)
    else:
        # 2-TC chips: keep an even number of "parallel" steps so neither core idles.
        steps = max(2, pl.cdiv(B, _MAX_TB))
        if steps % 2:
            steps += 1
    tb = ((pl.cdiv(B, steps) + 7) // 8) * 8
    return min(tb, _MAX_TB, B)


# --------------------------------------------------------------------------- #
# Wrapper
# --------------------------------------------------------------------------- #
def positional_encoding_grad(x, J, scale=None, *, embed_dim, block_rows=None):
    """Pallas-backed forward of PositionalEncodingGradLayer. Returns (y, G)."""
    B, D = x.shape
    F = embed_dim * D
    TOT = (D + 1) * 2 * F

    if scale is None:
        scale = jnp.ones((B, F), dtype=jnp.float32)
    x = x.astype(jnp.float32)
    jf = J.astype(jnp.float32).reshape(B, D * D)
    scale = jnp.broadcast_to(scale.astype(jnp.float32), (B, F))

    pm_np, jm_np, tm_np = _build_constants(D, embed_dim)
    phase_mat = jnp.asarray(pm_np)
    jac_mat = jnp.asarray(jm_np)
    trig_mat = jnp.asarray(tm_np)

    TB = block_rows if block_rows is not None else _pick_batch_tile(B, _num_tensorcores_per_device())
    grid = (pl.cdiv(B, TB),)

    kernel = functools.partial(_pe_grad_kernel, F=F, TOT=TOT)
    out = pl.pallas_call(
        kernel,
        grid=grid,
        in_specs=[
            pl.BlockSpec((TB, D), lambda i: (i, 0)),
            pl.BlockSpec((TB, D * D), lambda i: (i, 0)),
            pl.BlockSpec((TB, F), lambda i: (i, 0)),
            pl.BlockSpec((D, 2 * F), lambda i: (0, 0)),
            pl.BlockSpec((D * D, TOT), lambda i: (0, 0)),
            pl.BlockSpec((2 * F, TOT), lambda i: (0, 0)),
        ],
        out_specs=pl.BlockSpec((TB, TOT), lambda i: (i, 0)),
        out_shape=jax.ShapeDtypeStruct((B, TOT), jnp.float32),
        compiler_params=pltpu.CompilerParams(
            dimension_semantics=("parallel",),
            vmem_limit_bytes=32 * 1024 * 1024),
        cost_estimate=pl.CostEstimate(
            flops=2 * B * (D * 2 * F + D * D * TOT + 2 * F * TOT),
            transcendentals=B * 2 * F,
            bytes_accessed=4 * B * (D + D * D + F + TOT)),
    )(x, jf, scale, phase_mat, jac_mat, trig_mat)

    y = out[:, : 2 * F]
    G = out[:, 2 * F:].reshape(B, D, 2 * F)   # contiguous reshape
    return y, G


# --------------------------------------------------------------------------- #
# Pure-JAX reference mirroring the PyTorch module exactly
# --------------------------------------------------------------------------- #
def _reference_forward(x, J, scale, embed_dim):
    B, D = x.shape
    F = embed_dim * D
    freq = 2.0 ** jnp.arange(embed_dim, dtype=jnp.float32)
    p = (freq[:, None] * x[:, None, :]).reshape(B, F)
    pG = jnp.broadcast_to(J[:, :, None, :], (B, D, embed_dim, D)).reshape(B, D, F)
    freq_row = jnp.repeat(freq, D).reshape(1, 1, F)
    scale_G = freq_row * scale[:, None, :] * pG
    y = jnp.concatenate([scale * jnp.sin(p), scale * jnp.cos(p)], axis=1)
    G = jnp.concatenate([scale_G * jnp.cos(p)[:, None, :],
                         -scale_G * jnp.sin(p)[:, None, :]], axis=2)
    return y, G


if __name__ == "__main__":
    B, D, EMBED_DIM = 128, 3, 8
    F = EMBED_DIM * D

    key = jax.random.PRNGKey(0)
    kx, kj, ks = jax.random.split(key, 3)
    x = jax.random.uniform(kx, (B, D), jnp.float32, minval=-1.0, maxval=1.0)
    J = jax.random.normal(kj, (B, D, D), jnp.float32)
    scale = jax.random.uniform(ks, (B, F), jnp.float32, minval=0.5, maxval=1.5)

    y, G = positional_encoding_grad(x, J, scale, embed_dim=EMBED_DIM)
    jax.block_until_ready((y, G))
    y_ref, G_ref = _reference_forward(x, J, scale, EMBED_DIM)
    np.testing.assert_allclose(np.asarray(y), np.asarray(y_ref), rtol=1e-3, atol=1e-3)
    np.testing.assert_allclose(np.asarray(G), np.asarray(G_ref), rtol=1e-3, atol=1e-2)

    # scale=None default path on a tiny, non-multiple-of-8 batch (single full-shape block).
    y2, G2 = positional_encoding_grad(x[:5], J[:5], None, embed_dim=EMBED_DIM)
    jax.block_until_ready((y2, G2))
    y2_ref, G2_ref = _reference_forward(x[:5], J[:5], jnp.ones((5, F), jnp.float32), EMBED_DIM)
    np.testing.assert_allclose(np.asarray(y2), np.asarray(y2_ref), rtol=1e-3, atol=1e-3)
    np.testing.assert_allclose(np.asarray(G2), np.asarray(G2_ref), rtol=1e-3, atol=1e-2)

    # Multi-step grid with a ragged last block (exercises the masked-writeback path).
    y3, G3 = positional_encoding_grad(x[:40], J[:40], scale[:40],
                                      embed_dim=EMBED_DIM, block_rows=16)
    jax.block_until_ready((y3, G3))
    y3_ref, G3_ref = _reference_forward(x[:40], J[:40], scale[:40], EMBED_DIM)
    np.testing.assert_allclose(np.asarray(y3), np.asarray(y3_ref), rtol=1e-3, atol=1e-3)
    np.testing.assert_allclose(np.asarray(G3), np.asarray(G3_ref), rtol=1e-3, atol=1e-2)

    assert y.shape == (B, 2 * F) and G.shape == (B, D, 2 * F)
    print("KERNEL_OK")
</pallas_src>

<mosaic_0001>
module attributes {stable_mosaic.version = 11 : i64} {
  func.func @_pe_grad_kernel(%arg0: i32, %arg1: memref<128x3xf32, #tpu.memory_space<vmem>>, %arg2: memref<128x9xf32, #tpu.memory_space<vmem>>, %arg3: memref<128x24xf32, #tpu.memory_space<vmem>>, %arg4: memref<3x48xf32, #tpu.memory_space<vmem>>, %arg5: memref<9x192xf32, #tpu.memory_space<vmem>>, %arg6: memref<48x192xf32, #tpu.memory_space<vmem>>, %arg7: memref<128x192xf32, #tpu.memory_space<vmem>>) attributes {dimension_semantics = [#tpu.dimension_semantics<parallel>], iteration_bounds = array<i64: 1>, scalar_prefetch = 0 : i64, scratch_operands = 0 : i64, tpu.core_type = #tpu.core_type<tc>, window_params = [{transform_indices = @transform_0, window_bounds = array<i64: 128, 3>}, {transform_indices = @transform_1, window_bounds = array<i64: 128, 9>}, {transform_indices = @transform_2, window_bounds = array<i64: 128, 24>}, {pipeline_mode = #tpu.pipeline_mode<synchronous>, transform_indices = @transform_3, window_bounds = array<i64: 3, 48>}, {pipeline_mode = #tpu.pipeline_mode<synchronous>, transform_indices = @transform_4, window_bounds = array<i64: 9, 192>}, {pipeline_mode = #tpu.pipeline_mode<synchronous>, transform_indices = @transform_5, window_bounds = array<i64: 48, 192>}, {transform_indices = @transform_6, window_bounds = array<i64: 128, 192>}]} {
    %0 = tpu.iota {dimensions = array<i32: 1>} : vector<1x48xi32>
    %c24_i32 = arith.constant 24 : i32
    %1 = vector.broadcast %c24_i32 : i32 to vector<1x48xi32>
    %2 = arith.cmpi sge, %0, %1 : vector<1x48xi32>
    %cst = arith.constant 1.57079637 : f32
    %cst_0 = arith.constant 0.000000e+00 : f32
    %3 = vector.broadcast %cst : f32 to vector<1x48xf32>
    %4 = vector.broadcast %cst_0 : f32 to vector<1x48xf32>
    %5 = arith.select %2, %3, %4 : vector<1x48xi1>, vector<1x48xf32>
    %c0 = arith.constant 0 : index
    %c0_1 = arith.constant 0 : index
    %6 = vector.load %arg1[%c0, %c0_1] : memref<128x3xf32, #tpu.memory_space<vmem>>, vector<128x3xf32>
    %c0_2 = arith.constant 0 : index
    %c0_3 = arith.constant 0 : index
    %7 = vector.load %arg4[%c0_2, %c0_3] : memref<3x48xf32, #tpu.memory_space<vmem>>, vector<3x48xf32>
    %cst_4 = arith.constant dense<0.000000e+00> : vector<128x48xf32>
    %8 = tpu.matmul %6, %7, %cst_4 {dimension_numbers = #tpu.dot_dimension_numbers<[1], [0], [0], [1], [0, 0, 1, 1], [], []>, precision = #tpu.contract_precision<fp32>} : vector<128x3xf32>, vector<3x48xf32>, vector<128x48xf32> -> vector<128x48xf32>
    %9 = vector.broadcast %5 : vector<1x48xf32> to vector<128x48xf32>
    %10 = arith.addf %8, %9 : vector<128x48xf32>
    %11 = math.sin %10 : vector<128x48xf32>
    %c0_5 = arith.constant 0 : index
    %c0_6 = arith.constant 0 : index
    %12 = vector.load %arg3[%c0_5, %c0_6] : memref<128x24xf32, #tpu.memory_space<vmem>>, vector<128x24xf32>
    %13 = tpu.concatenate %12, %12 in 1 : vector<128x24xf32>, vector<128x24xf32> -> vector<128x48xf32>
    %14 = arith.mulf %13, %11 : vector<128x48xf32>
    %c0_7 = arith.constant 0 : index
    %c0_8 = arith.constant 0 : index
    %15 = vector.load %arg6[%c0_7, %c0_8] : memref<48x192xf32, #tpu.memory_space<vmem>>, vector<48x192xf32>
    %cst_9 = arith.constant dense<0.000000e+00> : vector<128x192xf32>
    %16 = tpu.matmul %14, %15, %cst_9 {dimension_numbers = #tpu.dot_dimension_numbers<[1], [0], [0], [1], [0, 0, 1, 1], [], []>, precision = #tpu.contract_precision<fp32>} : vector<128x48xf32>, vector<48x192xf32>, vector<128x192xf32> -> vector<128x192xf32>
    %17 = tpu.iota {dimensions = array<i32: 1>} : vector<1x192xi32>
    %c48_i32 = arith.constant 48 : i32
    %18 = vector.broadcast %c48_i32 : i32 to vector<1x192xi32>
    %19 = arith.cmpi slt, %17, %18 : vector<1x192xi32>
    %cst_10 = arith.constant 1.000000e+00 : f32
    %cst_11 = arith.constant 0.000000e+00 : f32
    %20 = vector.broadcast %cst_10 : f32 to vector<1x192xf32>
    %21 = vector.broadcast %cst_11 : f32 to vector<1x192xf32>
    %22 = arith.select %19, %20, %21 : vector<1x192xi1>, vector<1x192xf32>
    %c0_12 = arith.constant 0 : index
    %c0_13 = arith.constant 0 : index
    %23 = vector.load %arg2[%c0_12, %c0_13] : memref<128x9xf32, #tpu.memory_space<vmem>>, vector<128x9xf32>
    %c0_14 = arith.constant 0 : index
    %c0_15 = arith.constant 0 : index
    %24 = vector.load %arg5[%c0_14, %c0_15] : memref<9x192xf32, #tpu.memory_space<vmem>>, vector<9x192xf32>
    %cst_16 = arith.constant dense<0.000000e+00> : vector<128x192xf32>
    %25 = tpu.matmul %23, %24, %cst_16 {dimension_numbers = #tpu.dot_dimension_numbers<[1], [0], [0], [1], [0, 0, 1, 1], [], []>, precision = #tpu.contract_precision<fp32>} : vector<128x9xf32>, vector<9x192xf32>, vector<128x192xf32> -> vector<128x192xf32>
    %26 = vector.broadcast %22 : vector<1x192xf32> to vector<128x192xf32>
    %27 = arith.addf %25, %26 : vector<128x192xf32>
    %28 = arith.mulf %27, %16 : vector<128x192xf32>
    %c0_17 = arith.constant 0 : index
    %c0_18 = arith.constant 0 : index
    %29 = vector.load %arg7[%c0_17, %c0_18] : memref<128x192xf32, #tpu.memory_space<vmem>>, vector<128x192xf32>
    tpu.vector_store %arg7[%c0_17, %c0_18], %28 {strides = array<i32>} : memref<128x192xf32, #tpu.memory_space<vmem>>, vector<128x192xf32>,
    return
  }
  func.func @transform_0(%arg0: i32) -> (i32, i32) {
    %c0_i32 = arith.constant 0 : i32
    %c0_i32_0 = arith.constant 0 : i32
    return %arg0, %c0_i32 : i32, i32
  }
  func.func @transform_1(%arg0: i32) -> (i32, i32) {
    %c0_i32 = arith.constant 0 : i32
    %c0_i32_0 = arith.constant 0 : i32
    return %arg0, %c0_i32 : i32, i32
  }
  func.func @transform_2(%arg0: i32) -> (i32, i32) {
    %c0_i32 = arith.constant 0 : i32
    %c0_i32_0 = arith.constant 0 : i32
    return %arg0, %c0_i32 : i32, i32
  }
  func.func @transform_3(%arg0: i32) -> (i32, i32) {
    %c0_i32 = arith.constant 0 : i32
    %c0_i32_0 = arith.constant 0 : i32
    %c0_i32_1 = arith.constant 0 : i32
    return %c0_i32, %c0_i32_0 : i32, i32
  }
  func.func @transform_4(%arg0: i32) -> (i32, i32) {
    %c0_i32 = arith.constant 0 : i32
    %c0_i32_0 = arith.constant 0 : i32
    %c0_i32_1 = arith.constant 0 : i32
    return %c0_i32, %c0_i32_0 : i32, i32
  }
  func.func @transform_5(%arg0: i32) -> (i32, i32) {
    %c0_i32 = arith.constant 0 : i32
    %c0_i32_0 = arith.constant 0 : i32
    %c0_i32_1 = arith.constant 0 : i32
    return %c0_i32, %c0_i32_0 : i32, i32
  }
  func.func @transform_6(%arg0: i32) -> (i32, i32) {
    %c0_i32 = arith.constant 0 : i32
    %c0_i32_0 = arith.constant 0 : i32
    return %arg0, %c0_i32 : i32, i32
  }
}

</mosaic_0001>

<llo_original>
// kernel: tpu_custom_call.1
$region0: #{tpu_custom_call.1}
  #allocation0 [shape = 'u32[]', space=smem, size = 0x4, offset = 0x4, fixed_abs, tag = 'smem constant byte address 0x4 - core index']
  #allocation1 [shape = 'u32[144,128]{1,0:T(1,128)}', space=vmem, size = 0x12000, scoped, tag = 'internal scratch']
  %s0 = inlined_call_operand.vmem [shape: f32[128,3], index: 0, kind: input, shape index: {}]
  %s1 = inlined_call_operand.vmem [shape: f32[128,9], index: 1, kind: input, shape index: {}]
  %s2 = inlined_call_operand.vmem [shape: f32[128,24], index: 2, kind: input, shape index: {}]
  %s3 = inlined_call_operand.vmem [shape: f32[3,48], index: 3, kind: input, shape index: {}]
  %s4 = inlined_call_operand.vmem [shape: f32[9,192], index: 4, kind: input, shape index: {}]
  %s5 = inlined_call_operand.vmem [shape: f32[48,192], index: 5, kind: input, shape index: {}]
  %s6 = inlined_call_operand.vmem [shape: f32[128,192], index: 6, kind: output, shape index: {}]
  %s7 = sld [smem:[#allocation0]]
  $region34: #{tpu_custom_call.1} parent=0
    _
  %s9 = ssub.s32 1, %s7
  %s10 = scalar_select 0, %s9, %s7
  // Predicated region
  $region2: #{tpu_custom_call.1} parent=0 // pred_check
    _
  $region3: #{tpu_custom_call.1} parent=0 // pred_check_branch
    %12 = sbr.rel (0) target = $region5
  $region4: #{tpu_custom_call.1} parent=0 // pred_region
    _
  $region5: #{tpu_custom_call.1} parent=0 // pred_fallthru
    _
  // Predicated region
  $region6: #{tpu_custom_call.1} parent=0 // pred_check
    _
  $region7: #{tpu_custom_call.1} parent=0 // pred_check_branch
    %14 = sbr.rel (0) target = $region9
  $region8: #{tpu_custom_call.1} parent=0 // pred_region
    _
  $region9: #{tpu_custom_call.1} parent=0 // pred_fallthru
    _
  // Predicated region
  $region10: #{tpu_custom_call.1} parent=0 // pred_check
    _
  $region11: #{tpu_custom_call.1} parent=0 // pred_check_branch
    %16 = sbr.rel (0) target = $region13
  $region12: #{tpu_custom_call.1} parent=0 // pred_region
    _
  $region13: #{tpu_custom_call.1} parent=0 // pred_fallthru
    _
  // Predicated region
  $region14: #{tpu_custom_call.1} parent=0 // pred_check
    _
  $region15: #{tpu_custom_call.1} parent=0 // pred_check_branch
    %18 = sbr.rel (0) target = $region17
  $region16: #{tpu_custom_call.1} parent=0 // pred_region
    _
  $region17: #{tpu_custom_call.1} parent=0 // pred_fallthru
    _
  // Predicated region
  $region18: #{tpu_custom_call.1} parent=0 // pred_check
    _
  $region19: #{tpu_custom_call.1} parent=0 // pred_check_branch
    %20 = sbr.rel (0) target = $region21
  $region20: #{tpu_custom_call.1} parent=0 // pred_region
    _
  $region21: #{tpu_custom_call.1} parent=0 // pred_fallthru
    _
  // Predicated region
  $region22: #{tpu_custom_call.1} parent=0 // pred_check
    _
  $region23: #{tpu_custom_call.1} parent=0 // pred_check_branch
    %22 = sbr.rel (0) target = $region25
  $region24: #{tpu_custom_call.1} parent=0 // pred_region
    _
  $region25: #{tpu_custom_call.1} parent=0 // pred_fallthru
    _
  %v23 = vlaneseq
  %v24 = vand.u32 %v23, 127
  %vm25 = vcmp.ge.s32.totalorder %v24, 24
  %v26 = vsel %vm25, 1.5707964, 0.0
  %v27 = vld [vmem:[%s0] sm:$0xff]
  %v28 = vld [vmem:[%s0 + $0x8] sm:$0xff]
  %v29 = vld [vmem:[%s0 + $0x10] sm:$0xff]
  %v30 = vld [vmem:[%s0 + $0x18] sm:$0xff]
  %v31 = vld [vmem:[%s0 + $0x20] sm:$0xff]
  %v32 = vld [vmem:[%s0 + $0x28] sm:$0xff]
  %v33 = vld [vmem:[%s0 + $0x30] sm:$0xff]
  %v34 = vld [vmem:[%s0 + $0x38] sm:$0xff]
  %v35 = vld [vmem:[%s0 + $0x40] sm:$0xff]
  %v36 = vld [vmem:[%s0 + $0x48] sm:$0xff]
  %v37 = vld [vmem:[%s0 + $0x50] sm:$0xff]
  %v38 = vld [vmem:[%s0 + $0x58] sm:$0xff]
  %v39 = vld [vmem:[%s0 + $0x60] sm:$0xff]
  %v40 = vld [vmem:[%s0 + $0x68] sm:$0xff]
  %v41 = vld [vmem:[%s0 + $0x70] sm:$0xff]
  %v42 = vld [vmem:[%s0 + $0x78] sm:$0xff]
  %v43 = vld [vmem:[%s3] sm:$0x7]
  %vm44 = vcmask 23552
  %v46 = vsel %vm44, %v27, 0
  %v49 = vsel %vm44, %v28, 0
  %v52 = vsel %vm44, %v29, 0
  %v55 = vsel %vm44, %v30, 0
  %v58 = vsel %vm44, %v31, 0
  %v61 = vsel %vm44, %v32, 0
  %v64 = vsel %vm44, %v33, 0
  %v67 = vsel %vm44, %v34, 0
  %v70 = vsel %vm44, %v35, 0
  %v73 = vsel %vm44, %v36, 0
  %v76 = vsel %vm44, %v37, 0
  %v79 = vsel %vm44, %v38, 0
  %v82 = vsel %vm44, %v39, 0
  %v85 = vsel %vm44, %v40, 0
  %v88 = vsel %vm44, %v41, 0
  %v91 = vsel %vm44, %v42, 0
  %vm93 = vcmask 1042432
  %v95 = vsel %vm93, %v43, 0
  %97 = vmatprep.subr.mxu0 0.0
  %98 = vmatpush1.msra.mxu0 0.0
  %99 = vmatprep.subr.mxu0 0.0
  %100 = vmatpush1.msra.mxu0 0.0
  %101 = vmatprep.subr.mxu0 0.0
  %102 = vmatpush1.msra.mxu0 0.0
  %103 = vmatprep.subr.mxu0 0.0
  %104 = vmatpush1.msra.mxu0 0.0
  %105 = vmatprep.subr.mxu0 0.0
  %106 = vmatpush1.msra.mxu0 0.0
  %107 = vmatprep.subr.mxu0 0.0
  %108 = vmatpush1.msra.mxu0 0.0
  %109 = vmatprep.subr.mxu0 0.0
  %110 = vmatpush1.msra.mxu0 0.0
  %111 = vmatprep.subr.mxu0 0.0
  %112 = vmatpush1.msra.mxu0 0.0
  %113 = vmatprep.subr.mxu0 0.0
  %114 = vmatpush1.msra.mxu0 0.0
  %115 = vmatprep.subr.mxu0 0.0
  %116 = vmatpush1.msra.mxu0 0.0
  %117 = vmatprep.subr.mxu0 0.0
  %118 = vmatpush1.msra.mxu0 0.0
  %119 = vmatprep.subr.mxu0 0.0
  %120 = vmatpush1.msra.mxu0 0.0
  %121 = vmatprep.subr.mxu0 0.0
  %122 = vmatpush1.msra.mxu0 0.0
  %123 = vmatprep.subr.mxu0 0.0
  %124 = vmatpush1.msra.mxu0 0.0
  %125 = vmatprep.subr.mxu0 0.0
  %126 = vmatpush1.msra.mxu0 0.0
  %127 = vmatprep.subr.mxu0 0.0
  %v128 = vand.u32 %v95, 4294901760
  %129 = vmatpush1.msra.mxu0 %v128
  %130 = vmatprep.subr.mxu0 0.0
  %131 = vmatpush2.msra.mxu0 0.0
  %132 = vmatprep.subr.mxu0 0.0
  %133 = vmatpush2.msra.mxu0 0.0
  %134 = vmatprep.subr.mxu0 0.0
  %135 = vmatpush2.msra.mxu0 0.0
  %136 = vmatprep.subr.mxu0 0.0
  %137 = vmatpush2.msra.mxu0 0.0
  %138 = vmatprep.subr.mxu0 0.0
  %139 = vmatpush2.msra.mxu0 0.0
  %140 = vmatprep.subr.mxu0 0.0
  %141 = vmatpush2.msra.mxu0 0.0
  %142 = vmatprep.subr.mxu0 0.0
  %143 = vmatpush2.msra.mxu0 0.0
  %144 = vmatprep.subr.mxu0 0.0
  %145 = vmatpush2.msra.mxu0 0.0
  %146 = vmatprep.subr.mxu0 0.0
  %147 = vmatpush2.msra.mxu0 0.0
  %148 = vmatprep.subr.mxu0 0.0
  %149 = vmatpush2.msra.mxu0 0.0
  %150 = vmatprep.subr.mxu0 0.0
  %151 = vmatpush2.msra.mxu0 0.0
  %152 = vmatprep.subr.mxu0 0.0
  %153 = vmatpush2.msra.mxu0 0.0
  %154 = vmatprep.subr.mxu0 0.0
  %155 = vmatpush2.msra.mxu0 0.0
  %156 = vmatprep.subr.mxu0 0.0
  %157 = vmatpush2.msra.mxu0 0.0
  %158 = vmatprep.subr.mxu0 0.0
  %159 = vmatpush2.msra.mxu0 0.0
  %160 = vmatprep.subr.mxu0 0.0
  %161 = vmatpush2.msra.mxu0 0.0
  %162 = vmatprep.mubr.f32.mxu0 0.0
  %v163 = vand.u32 %v46, 4294901760
  %v164 = vsub.f32 %v46, %v163
  %v165 = vand.u32 %v164, 4294901760
  %v166 = vsub.f32 %v164, %v165
  %v167 = vand.u32 %v166, 4294901760
  %168 = vmatmul.mubr.f32.gmra.mxu0 %v167
  %v169 = vpop.f32.mrf.mxu0
  %v170 = vadd.f32 %v26, %v169
  %v171 = vpop.f32.mrf.mxu0
  %172 = vmatprep.mubr.f32.mxu0 0.0
  %v173 = vand.u32 %v49, 4294901760
  %v174 = vsub.f32 %v49, %v173
  %v175 = vand.u32 %v174, 4294901760
  %v176 = vsub.f32 %v174, %v175
  %v177 = vand.u32 %v176, 4294901760
  %178 = vmatmul.mubr.f32.gmra.mxu0 %v177
  %v179 = vpop.f32.mrf.mxu0
  %v180 = vadd.f32 %v26, %v179
  %v181 = vpop.f32.mrf.mxu0
  %182 = vmatprep.mubr.f32.mxu0 0.0
  %v183 = vand.u32 %v52, 4294901760
  %v184 = vsub.f32 %v52, %v183
  %v185 = vand.u32 %v184, 4294901760
  %v186 = vsub.f32 %v184, %v185
  %v187 = vand.u32 %v186, 4294901760
  %188 = vmatmul.mubr.f32.gmra.mxu0 %v187
  %v189 = vpop.f32.mrf.mxu0
  %v190 = vadd.f32 %v26, %v189
  %v191 = vpop.f32.mrf.mxu0
  %192 = vmatprep.mubr.f32.mxu0 0.0
  %v193 = vand.u32 %v55, 4294901760
  %v194 = vsub.f32 %v55, %v193
  %v195 = vand.u32 %v194, 4294901760
  %v196 = vsub.f32 %v194, %v195
  %v197 = vand.u32 %v196, 4294901760
  %198 = vmatmul.mubr.f32.gmra.mxu0 %v197
  %v199 = vpop.f32.mrf.mxu0
  %v200 = vadd.f32 %v26, %v199
  %v201 = vpop.f32.mrf.mxu0
  %202 = vmatprep.mubr.f32.mxu0 0.0
  %v203 = vand.u32 %v58, 4294901760
  %v204 = vsub.f32 %v58, %v203
  %v205 = vand.u32 %v204, 4294901760
  %v206 = vsub.f32 %v204, %v205
  %v207 = vand.u32 %v206, 4294901760
  %208 = vmatmul.mubr.f32.gmra.mxu0 %v207
  %v209 = vpop.f32.mrf.mxu0
  %v210 = vadd.f32 %v26, %v209
  %v211 = vpop.f32.mrf.mxu0
  %212 = vmatprep.mubr.f32.mxu0 0.0
  %v213 = vand.u32 %v61, 4294901760
  %v214 = vsub.f32 %v61, %v213
  %v215 = vand.u32 %v214, 4294901760
  %v216 = vsub.f32 %v214, %v215
  %v217 = vand.u32 %v216, 4294901760
  %218 = vmatmul.mubr.f32.gmra.mxu0 %v217
  %v219 = vpop.f32.mrf.mxu0
  %v220 = vadd.f32 %v26, %v219
  %v221 = vpop.f32.mrf.mxu0
  %222 = vmatprep.mubr.f32.mxu0 0.0
  %v223 = vand.u32 %v64, 4294901760
  %v224 = vsub.f32 %v64, %v223
  %v225 = vand.u32 %v224, 4294901760
  %v226 = vsub.f32 %v224, %v225
  %v227 = vand.u32 %v226, 4294901760
  %228 = vmatmul.mubr.f32.gmra.mxu0 %v227
  %v229 = vpop.f32.mrf.mxu0
  %v230 = vadd.f32 %v26, %v229
  %v231 = vpop.f32.mrf.mxu0
  %232 = vmatprep.mubr.f32.mxu0 0.0
  %v233 = vand.u32 %v67, 4294901760
  %v234 = vsub.f32 %v67, %v233
  %v235 = vand.u32 %v234, 4294901760
  %v236 = vsub.f32 %v234, %v235
  %v237 = vand.u32 %v236, 4294901760
  %238 = vmatmul.mubr.f32.gmra.mxu0 %v237
  %v239 = vpop.f32.mrf.mxu0
  %v240 = vadd.f32 %v26, %v239
  %v241 = vpop.f32.mrf.mxu0
  %242 = vmatprep.mubr.f32.mxu0 0.0
  %v243 = vand.u32 %v70, 4294901760
  %v244 = vsub.f32 %v70, %v243
  %v245 = vand.u32 %v244, 4294901760
  %v246 = vsub.f32 %v244, %v245
  %v247 = vand.u32 %v246, 4294901760
  %248 = vmatmul.mubr.f32.gmra.mxu0 %v247
  %v249 = vpop.f32.mrf.mxu0
  %v250 = vadd.f32 %v26, %v249
  %v251 = vpop.f32.mrf.mxu0
  %252 = vmatprep.mubr.f32.mxu0 0.0
  %v253 = vand.u32 %v73, 4294901760
  %v254 = vsub.f32 %v73, %v253
  %v255 = vand.u32 %v254, 4294901760
  %v256 = vsub.f32 %v254, %v255
  %v257 = vand.u32 %v256, 4294901760
  %258 = vmatmul.mubr.f32.gmra.mxu0 %v257
  %v259 = vpop.f32.mrf.mxu0
  %v260 = vadd.f32 %v26, %v259
  %v261 = vpop.f32.mrf.mxu0
  %262 = vmatprep.mubr.f32.mxu0 0.0
  %v263 = vand.u32 %v76, 4294901760
  %v264 = vsub.f32 %v76, %v263
  %v265 = vand.u32 %v264, 4294901760
  %v266 = vsub.f32 %v264, %v265
  %v267 = vand.u32 %v266, 4294901760
  %268 = vmatmul.mubr.f32.gmra.mxu0 %v267
  %v269 = vpop.f32.mrf.mxu0
  %v270 = vadd.f32 %v26, %v269
  %v271 = vpop.f32.mrf.mxu0
  %272 = vmatprep.mubr.f32.mxu0 0.0
  %v273 = vand.u32 %v79, 4294901760
  %v274 = vsub.f32 %v79, %v273
  %v275 = vand.u32 %v274, 4294901760
  %v276 = vsub.f32 %v274, %v275
  %v277 = vand.u32 %v276, 4294901760
  %278 = vmatmul.mubr.f32.gmra.mxu0 %v277
  %v279 = vpop.f32.mrf.mxu0
  %v280 = vadd.f32 %v26, %v279
  %v281 = vpop.f32.mrf.mxu0
  %282 = vmatprep.mubr.f32.mxu0 0.0
  %v283 = vand.u32 %v82, 4294901760
  %v284 = vsub.f32 %v82, %v283
  %v285 = vand.u32 %v284, 4294901760
  %v286 = vsub.f32 %v284, %v285
  %v287 = vand.u32 %v286, 4294901760
  %288 = vmatmul.mubr.f32.gmra.mxu0 %v287
  %v289 = vpop.f32.mrf.mxu0
  %v290 = vadd.f32 %v26, %v289
  %v291 = vpop.f32.mrf.mxu0
  %292 = vmatprep.mubr.f32.mxu0 0.0
  %v293 = vand.u32 %v85, 4294901760
  %v294 = vsub.f32 %v85, %v293
  %v295 = vand.u32 %v294, 4294901760
  %v296 = vsub.f32 %v294, %v295
  %v297 = vand.u32 %v296, 4294901760
  %298 = vmatmul.mubr.f32.gmra.mxu0 %v297
  %v299 = vpop.f32.mrf.mxu0
  %v300 = vadd.f32 %v26, %v299
  %v301 = vpop.f32.mrf.mxu0
  %302 = vmatprep.mubr.f32.mxu0 0.0
  %v303 = vand.u32 %v88, 4294901760
  %v304 = vsub.f32 %v88, %v303
  %v305 = vand.u32 %v304, 4294901760
  %v306 = vsub.f32 %v304, %v305
  %v307 = vand.u32 %v306, 4294901760
  %308 = vmatmul.mubr.f32.gmra.mxu0 %v307
  %v309 = vpop.f32.mrf.mxu0
  %v310 = vadd.f32 %v26, %v309
  %v311 = vpop.f32.mrf.mxu0
  %312 = vmatprep.mubr.f32.mxu0 0.0
  %v313 = vand.u32 %v91, 4294901760
  %v314 = vsub.f32 %v91, %v313
  %v315 = vand.u32 %v314, 4294901760
  %v316 = vsub.f32 %v314, %v315
  %v317 = vand.u32 %v316, 4294901760
  %318 = vmatmul.mubr.f32.gmra.mxu0 %v317
  %v319 = vpop.f32.mrf.mxu0
  %v320 = vadd.f32 %v26, %v319
  %v321 = vpop.f32.mrf.mxu0
  %322 = vdwg.mxu0
  %323 = vmatprep.subr.mxu0 0.0
  %324 = vmatpush1.msra.mxu0 0.0
  %325 = vmatprep.subr.mxu0 0.0
  %326 = vmatpush1.msra.mxu0 0.0
  %327 = vmatprep.subr.mxu0 0.0
  %328 = vmatpush1.msra.mxu0 0.0
  %329 = vmatprep.subr.mxu0 0.0
  %330 = vmatpush1.msra.mxu0 0.0
  %331 = vmatprep.subr.mxu0 0.0
  %332 = vmatpush1.msra.mxu0 0.0
  %333 = vmatprep.subr.mxu0 0.0
  %334 = vmatpush1.msra.mxu0 0.0
  %335 = vmatprep.subr.mxu0 0.0
  %336 = vmatpush1.msra.mxu0 0.0
  %337 = vmatprep.subr.mxu0 0.0
  %338 = vmatpush1.msra.mxu0 0.0
  %339 = vmatprep.subr.mxu0 0.0
  %340 = vmatpush1.msra.mxu0 0.0
  %341 = vmatprep.subr.mxu0 0.0
  %342 = vmatpush1.msra.mxu0 0.0
  %343 = vmatprep.subr.mxu0 0.0
  %344 = vmatpush1.msra.mxu0 0.0
  %345 = vmatprep.subr.mxu0 0.0
  %346 = vmatpush1.msra.mxu0 0.0
  %347 = vmatprep.subr.mxu0 0.0
  %348 = vmatpush1.msra.mxu0 0.0
  %349 = vmatprep.subr.mxu0 0.0
  %350 = vmatpush1.msra.mxu0 0.0
  %351 = vmatprep.subr.mxu0 0.0
  %352 = vmatpush1.msra.mxu0 0.0
  %353 = vmatprep.subr.mxu0 0.0
  %v354 = vand.u32 %v95, 4294901760
  %v355 = vsub.f32 %v95, %v354
  %v356 = vand.u32 %v355, 4294901760
  %v357 = vsub.f32 %v355, %v356
  %v358 = vand.u32 %v357, 4294901760
  %359 = vmatpush1.msra.mxu0 %v358
  %360 = vmatprep.subr.mxu0 0.0
  %361 = vmatpush2.msra.mxu0 0.0
  %362 = vmatprep.subr.mxu0 0.0
  %363 = vmatpush2.msra.mxu0 0.0
  %364 = vmatprep.subr.mxu0 0.0
  %365 = vmatpush2.msra.mxu0 0.0
  %366 = vmatprep.subr.mxu0 0.0
  %367 = vmatpush2.msra.mxu0 0.0
  %368 = vmatprep.subr.mxu0 0.0
  %369 = vmatpush2.msra.mxu0 0.0
  %370 = vmatprep.subr.mxu0 0.0
  %371 = vmatpush2.msra.mxu0 0.0
  %372 = vmatprep.subr.mxu0 0.0
  %373 = vmatpush2.msra.mxu0 0.0
  %374 = vmatprep.subr.mxu0 0.0
  %375 = vmatpush2.msra.mxu0 0.0
  %376 = vmatprep.subr.mxu0 0.0
  %377 = vmatpush2.msra.mxu0 0.0
  %378 = vmatprep.subr.mxu0 0.0
  %379 = vmatpush2.msra.mxu0 0.0
  %380 = vmatprep.subr.mxu0 0.0
  %381 = vmatpush2.msra.mxu0 0.0
  %382 = vmatprep.subr.mxu0 0.0
  %383 = vmatpush2.msra.mxu0 0.0
  %384 = vmatprep.subr.mxu0 0.0
  %385 = vmatpush2.msra.mxu0 0.0
  %386 = vmatprep.subr.mxu0 0.0
  %387 = vmatpush2.msra.mxu0 0.0
  %388 = vmatprep.subr.mxu0 0.0
  %389 = vmatpush2.msra.mxu0 0.0
  %390 = vmatprep.subr.mxu0 0.0
  %391 = vmatpush2.msra.mxu0 0.0
  %392 = vmatprep.mubr.f32.mxu0 0.0
  %v393 = vand.u32 %v46, 4294901760
  %394 = vmatmul.mubr.f32.gmra.mxu0 %v393
  %v395 = vpop.f32.mrf.mxu0
  %v396 = vadd.f32 %v170, %v395
  %v397 = vpop.f32.mrf.mxu0
  %398 = vmatprep.mubr.f32.mxu0 0.0
  %v399 = vand.u32 %v49, 4294901760
  %400 = vmatmul.mubr.f32.gmra.mxu0 %v399
  %v401 = vpop.f32.mrf.mxu0
  %v402 = vadd.f32 %v180, %v401
  %v403 = vpop.f32.mrf.mxu0
  %404 = vmatprep.mubr.f32.mxu0 0.0
  %v405 = vand.u32 %v52, 4294901760
  %406 = vmatmul.mubr.f32.gmra.mxu0 %v405
  %v407 = vpop.f32.mrf.mxu0
  %v408 = vadd.f32 %v190, %v407
  %v409 = vpop.f32.mrf.mxu0
  %410 = vmatprep.mubr.f32.mxu0 0.0
  %v411 = vand.u32 %v55, 4294901760
  %412 = vmatmul.mubr.f32.gmra.mxu0 %v411
  %v413 = vpop.f32.mrf.mxu0
  %v414 = vadd.f32 %v200, %v413
  %v415 = vpop.f32.mrf.mxu0
  %416 = vmatprep.mubr.f32.mxu0 0.0
  %v417 = vand.u32 %v58, 4294901760
  %418 = vmatmul.mubr.f32.gmra.mxu0 %v417
  %v419 = vpop.f32.mrf.mxu0
  %v420 = vadd.f32 %v210, %v419
  %v421 = vpop.f32.mrf.mxu0
  %422 = vmatprep.mubr.f32.mxu0 0.0
  %v423 = vand.u32 %v61, 4294901760
  %424 = vmatmul.mubr.f32.gmra.mxu0 %v423
  %v425 = vpop.f32.mrf.mxu0
  %v426 = vadd.f32 %v220, %v425
  %v427 = vpop.f32.mrf.mxu0
  %428 = vmatprep.mubr.f32.mxu0 0.0
  %v429 = vand.u32 %v64, 4294901760
  %430 = vmatmul.mubr.f32.gmra.mxu0 %v429
  %v431 = vpop.f32.mrf.mxu0
  %v432 = vadd.f32 %v230, %v431
  %v433 = vpop.f32.mrf.mxu0
  %434 = vmatprep.mubr.f32.mxu0 0.0
  %v435 = vand.u32 %v67, 4294901760
  %436 = vmatmul.mubr.f32.gmra.mxu0 %v435
  %v437 = vpop.f32.mrf.mxu0
  %v438 = vadd.f32 %v240, %v437
  %v439 = vpop.f32.mrf.mxu0
  %440 = vmatprep.mubr.f32.mxu0 0.0
  %v441 = vand.u32 %v70, 4294901760
  %442 = vmatmul.mubr.f32.gmra.mxu0 %v441
  %v443 = vpop.f32.mrf.mxu0
  %v444 = vadd.f32 %v250, %v443
  %v445 = vpop.f32.mrf.mxu0
  %446 = vmatprep.mubr.f32.mxu0 0.0
  %v447 = vand.u32 %v73, 4294901760
  %448 = vmatmul.mubr.f32.gmra.mxu0 %v447
  %v449 = vpop.f32.mrf.mxu0
  %v450 = vadd.f32 %v260, %v449
  %v451 = vpop.f32.mrf.mxu0
  %452 = vmatprep.mubr.f32.mxu0 0.0
  %v453 = vand.u32 %v76, 4294901760
  %454 = vmatmul.mubr.f32.gmra.mxu0 %v453
  %v455 = vpop.f32.mrf.mxu0
  %v456 = vadd.f32 %v270, %v455
  %v457 = vpop.f32.mrf.mxu0
  %458 = vmatprep.mubr.f32.mxu0 0.0
  %v459 = vand.u32 %v79, 4294901760
  %460 = vmatmul.mubr.f32.gmra.mxu0 %v459
  %v461 = vpop.f32.mrf.mxu0
  %v462 = vadd.f32 %v280, %v461
  %v463 = vpop.f32.mrf.mxu0
  %464 = vmatprep.mubr.f32.mxu0 0.0
  %v465 = vand.u32 %v82, 4294901760
  %466 = vmatmul.mubr.f32.gmra.mxu0 %v465
  %v467 = vpop.f32.mrf.mxu0
  %v468 = vadd.f32 %v290, %v467
  %v469 = vpop.f32.mrf.mxu0
  %470 = vmatprep.mubr.f32.mxu0 0.0
  %v471 = vand.u32 %v85, 4294901760
  %472 = vmatmul.mubr.f32.gmra.mxu0 %v471
  %v473 = vpop.f32.mrf.mxu0
  %v474 = vadd.f32 %v300, %v473
  %v475 = vpop.f32.mrf.mxu0
  %476 = vmatprep.mubr.f32.mxu0 0.0
  %v477 = vand.u32 %v88, 4294901760
  %478 = vmatmul.mubr.f32.gmra.mxu0 %v477
  %v479 = vpop.f32.mrf.mxu0
  %v480 = vadd.f32 %v310, %v479
  %v481 = vpop.f32.mrf.mxu0
  %482 = vmatprep.mubr.f32.mxu0 0.0
  %v483 = vand.u32 %v91, 4294901760
  %484 = vmatmul.mubr.f32.gmra.mxu0 %v483
  %v485 = vpop.f32.mrf.mxu0
  %v486 = vadd.f32 %v320, %v485
  %v487 = vpop.f32.mrf.mxu0
  %488 = vdwg.mxu0
  %489 = vmatprep.subr.mxu0 0.0
  %490 = vmatpush1.msra.mxu0 0.0
  %491 = vmatprep.subr.mxu0 0.0
  %492 = vmatpush1.msra.mxu0 0.0
  %493 = vmatprep.subr.mxu0 0.0
  %494 = vmatpush1.msra.mxu0 0.0
  %495 = vmatprep.subr.mxu0 0.0
  %496 = vmatpush1.msra.mxu0 0.0
  %497 = vmatprep.subr.mxu0 0.0
  %498 = vmatpush1.msra.mxu0 0.0
  %499 = vmatprep.subr.mxu0 0.0
  %500 = vmatpush1.msra.mxu0 0.0
  %501 = vmatprep.subr.mxu0 0.0
  %502 = vmatpush1.msra.mxu0 0.0
  %503 = vmatprep.subr.mxu0 0.0
  %504 = vmatpush1.msra.mxu0 0.0
  %505 = vmatprep.subr.mxu0 0.0
  %506 = vmatpush1.msra.mxu0 0.0
  %507 = vmatprep.subr.mxu0 0.0
  %508 = vmatpush1.msra.mxu0 0.0
  %509 = vmatprep.subr.mxu0 0.0
  %510 = vmatpush1.msra.mxu0 0.0
  %511 = vmatprep.subr.mxu0 0.0
  %512 = vmatpush1.msra.mxu0 0.0
  %513 = vmatprep.subr.mxu0 0.0
  %514 = vmatpush1.msra.mxu0 0.0
  %515 = vmatprep.subr.mxu0 0.0
  %516 = vmatpush1.msra.mxu0 0.0
  %517 = vmatprep.subr.mxu0 0.0
  %518 = vmatpush1.msra.mxu0 0.0
  %519 = vmatprep.subr.mxu0 0.0
  %v520 = vand.u32 %v95, 4294901760
  %v521 = vsub.f32 %v95, %v520
  %522 = vmatpush1.msra.mxu0 %v521
  %523 = vmatprep.subr.mxu0 0.0
  %524 = vmatpush2.msra.mxu0 0.0
  %525 = vmatprep.subr.mxu0 0.0
  %526 = vmatpush2.msra.mxu0 0.0
  %527 = vmatprep.subr.mxu0 0.0
  %528 = vmatpush2.msra.mxu0 0.0
  %529 = vmatprep.subr.mxu0 0.0
  %530 = vmatpush2.msra.mxu0 0.0
  %531 = vmatprep.subr.mxu0 0.0
  %532 = vmatpush2.msra.mxu0 0.0
  %533 = vmatprep.subr.mxu0 0.0
  %534 = vmatpush2.msra.mxu0 0.0
  %535 = vmatprep.subr.mxu0 0.0
  %536 = vmatpush2.msra.mxu0 0.0
  %537 = vmatprep.subr.mxu0 0.0
  %538 = vmatpush2.msra.mxu0 0.0
  %539 = vmatprep.subr.mxu0 0.0
  %540 = vmatpush2.msra.mxu0 0.0
  %541 = vmatprep.subr.mxu0 0.0
  %542 = vmatpush2.msra.mxu0 0.0
  %543 = vmatprep.subr.mxu0 0.0
  %544 = vmatpush2.msra.mxu0 0.0
  %545 = vmatprep.subr.mxu0 0.0
  %546 = vmatpush2.msra.mxu0 0.0
  %547 = vmatprep.subr.mxu0 0.0
  %548 = vmatpush2.msra.mxu0 0.0
  %549 = vmatprep.subr.mxu0 0.0
  %550 = vmatpush2.msra.mxu0 0.0
  %551 = vmatprep.subr.mxu0 0.0
  %552 = vmatpush2.msra.mxu0 0.0
  %553 = vmatprep.subr.mxu0 0.0
  %554 = vmatpush2.msra.mxu0 0.0
  %555 = vmatprep.mubr.f32.mxu0 0.0
  %v556 = vand.u32 %v46, 4294901760
  %v557 = vsub.f32 %v46, %v556
  %558 = vmatmul.mubr.f32.gmra.mxu0 %v557
  %v559 = vpop.f32.mrf.mxu0
  %v560 = vadd.f32 %v396, %v559
  %v561 = vpop.f32.mrf.mxu0
  %562 = vmatprep.mubr.f32.mxu0 0.0
  %v563 = vand.u32 %v49, 4294901760
  %v564 = vsub.f32 %v49, %v563
  %565 = vmatmul.mubr.f32.gmra.mxu0 %v564
  %v566 = vpop.f32.mrf.mxu0
  %v567 = vadd.f32 %v402, %v566
  %v568 = vpop.f32.mrf.mxu0
  %569 = vmatprep.mubr.f32.mxu0 0.0
  %v570 = vand.u32 %v52, 4294901760
  %v571 = vsub.f32 %v52, %v570
  %572 = vmatmul.mubr.f32.gmra.mxu0 %v571
  %v573 = vpop.f32.mrf.mxu0
  %v574 = vadd.f32 %v408, %v573
  %v575 = vpop.f32.mrf.mxu0
  %576 = vmatprep.mubr.f32.mxu0 0.0
  %v577 = vand.u32 %v55, 4294901760
  %v578 = vsub.f32 %v55, %v577
  %579 = vmatmul.mubr.f32.gmra.mxu0 %v578
  %v580 = vpop.f32.mrf.mxu0
  %v581 = vadd.f32 %v414, %v580
  %v582 = vpop.f32.mrf.mxu0
  %583 = vmatprep.mubr.f32.mxu0 0.0
  %v584 = vand.u32 %v58, 4294901760
  %v585 = vsub.f32 %v58, %v584
  %586 = vmatmul.mubr.f32.gmra.mxu0 %v585
  %v587 = vpop.f32.mrf.mxu0
  %v588 = vadd.f32 %v420, %v587
  %v589 = vpop.f32.mrf.mxu0
  %590 = vmatprep.mubr.f32.mxu0 0.0
  %v591 = vand.u32 %v61, 4294901760
  %v592 = vsub.f32 %v61, %v591
  %593 = vmatmul.mubr.f32.gmra.mxu0 %v592
  %v594 = vpop.f32.mrf.mxu0
  %v595 = vadd.f32 %v426, %v594
  %v596 = vpop.f32.mrf.mxu0
  %597 = vmatprep.mubr.f32.mxu0 0.0
  %v598 = vand.u32 %v64, 4294901760
  %v599 = vsub.f32 %v64, %v598
  %600 = vmatmul.mubr.f32.gmra.mxu0 %v599
  %v601 = vpop.f32.mrf.mxu0
  %v602 = vadd.f32 %v432, %v601
  %v603 = vpop.f32.mrf.mxu0
  %604 = vmatprep.mubr.f32.mxu0 0.0
  %v605 = vand.u32 %v67, 4294901760
  %v606 = vsub.f32 %v67, %v605
  %607 = vmatmul.mubr.f32.gmra.mxu0 %v606
  %v608 = vpop.f32.mrf.mxu0
  %v609 = vadd.f32 %v438, %v608
  %v610 = vpop.f32.mrf.mxu0
  %611 = vmatprep.mubr.f32.mxu0 0.0
  %v612 = vand.u32 %v70, 4294901760
  %v613 = vsub.f32 %v70, %v612
  %614 = vmatmul.mubr.f32.gmra.mxu0 %v613
  %v615 = vpop.f32.mrf.mxu0
  %v616 = vadd.f32 %v444, %v615
  %v617 = vpop.f32.mrf.mxu0
  %618 = vmatprep.mubr.f32.mxu0 0.0
  %v619 = vand.u32 %v73, 4294901760
  %v620 = vsub.f32 %v73, %v619
  %621 = vmatmul.mubr.f32.gmra.mxu0 %v620
  %v622 = vpop.f32.mrf.mxu0
  %v623 = vadd.f32 %v450, %v622
  %v624 = vpop.f32.mrf.mxu0
  %625 = vmatprep.mubr.f32.mxu0 0.0
  %v626 = vand.u32 %v76, 4294901760
  %v627 = vsub.f32 %v76, %v626
  %628 = vmatmul.mubr.f32.gmra.mxu0 %v627
  %v629 = vpop.f32.mrf.mxu0
  %v630 = vadd.f32 %v456, %v629
  %v631 = vpop.f32.mrf.mxu0
  %632 = vmatprep.mubr.f32.mxu0 0.0
  %v633 = vand.u32 %v79, 4294901760
  %v634 = vsub.f32 %v79, %v633
  %635 = vmatmul.mubr.f32.gmra.mxu0 %v634
  %v636 = vpop.f32.mrf.mxu0
  %v637 = vadd.f32 %v462, %v636
  %v638 = vpop.f32.mrf.mxu0
  %639 = vmatprep.mubr.f32.mxu0 0.0
  %v640 = vand.u32 %v82, 4294901760
  %v641 = vsub.f32 %v82, %v640
  %642 = vmatmul.mubr.f32.gmra.mxu0 %v641
  %v643 = vpop.f32.mrf.mxu0
  %v644 = vadd.f32 %v468, %v643
  %v645 = vpop.f32.mrf.mxu0
  %646 = vmatprep.mubr.f32.mxu0 0.0
  %v647 = vand.u32 %v85, 4294901760
  %v648 = vsub.f32 %v85, %v647
  %649 = vmatmul.mubr.f32.gmra.mxu0 %v648
  %v650 = vpop.f32.mrf.mxu0
  %v651 = vadd.f32 %v474, %v650
  %v652 = vpop.f32.mrf.mxu0
  %653 = vmatprep.mubr.f32.mxu0 0.0
  %v654 = vand.u32 %v88, 4294901760
  %v655 = vsub.f32 %v88, %v654
  %656 = vmatmul.mubr.f32.gmra.mxu0 %v655
  %v657 = vpop.f32.mrf.mxu0
  %v658 = vadd.f32 %v480, %v657
  %v659 = vpop.f32.mrf.mxu0
  %660 = vmatprep.mubr.f32.mxu0 0.0
  %v661 = vand.u32 %v91, 4294901760
  %v662 = vsub.f32 %v91, %v661
  %663 = vmatmul.mubr.f32.gmra.mxu0 %v662
  %v664 = vpop.f32.mrf.mxu0
  %v665 = vadd.f32 %v486, %v664
  %v666 = vpop.f32.mrf.mxu0
  %667 = vdwg.mxu0
  %668 = vmatprep.subr.mxu0 0.0
  %669 = vmatpush1.msra.mxu0 0.0
  %670 = vmatprep.subr.mxu0 0.0
  %671 = vmatpush1.msra.mxu0 0.0
  %672 = vmatprep.subr.mxu0 0.0
  %673 = vmatpush1.msra.mxu0 0.0
  %674 = vmatprep.subr.mxu0 0.0
  %675 = vmatpush1.msra.mxu0 0.0
  %676 = vmatprep.subr.mxu0 0.0
  %677 = vmatpush1.msra.mxu0 0.0
  %678 = vmatprep.subr.mxu0 0.0
  %679 = vmatpush1.msra.mxu0 0.0
  %680 = vmatprep.subr.mxu0 0.0
  %681 = vmatpush1.msra.mxu0 0.0
  %682 = vmatprep.subr.mxu0 0.0
  %683 = vmatpush1.msra.mxu0 0.0
  %684 = vmatprep.subr.mxu0 0.0
  %685 = vmatpush1.msra.mxu0 0.0
  %686 = vmatprep.subr.mxu0 0.0
  %687 = vmatpush1.msra.mxu0 0.0
  %688 = vmatprep.subr.mxu0 0.0
  %689 = vmatpush1.msra.mxu0 0.0
  %690 = vmatprep.subr.mxu0 0.0
  %691 = vmatpush1.msra.mxu0 0.0
  %692 = vmatprep.subr.mxu0 0.0
  %693 = vmatpush1.msra.mxu0 0.0
  %694 = vmatprep.subr.mxu0 0.0
  %695 = vmatpush1.msra.mxu0 0.0
  %696 = vmatprep.subr.mxu0 0.0
  %697 = vmatpush1.msra.mxu0 0.0
  %698 = vmatprep.subr.mxu0 0.0
  %v699 = vand.u32 %v95, 4294901760
  %700 = vmatpush1.msra.mxu0 %v699
  %701 = vmatprep.subr.mxu0 0.0
  %702 = vmatpush2.msra.mxu0 0.0
  %703 = vmatprep.subr.mxu0 0.0
  %704 = vmatpush2.msra.mxu0 0.0
  %705 = vmatprep.subr.mxu0 0.0
  %706 = vmatpush2.msra.mxu0 0.0
  %707 = vmatprep.subr.mxu0 0.0
  %708 = vmatpush2.msra.mxu0 0.0
  %709 = vmatprep.subr.mxu0 0.0
  %710 = vmatpush2.msra.mxu0 0.0
  %711 = vmatprep.subr.mxu0 0.0
  %712 = vmatpush2.msra.mxu0 0.0
  %713 = vmatprep.subr.mxu0 0.0
  %714 = vmatpush2.msra.mxu0 0.0
  %715 = vmatprep.subr.mxu0 0.0
  %716 = vmatpush2.msra.mxu0 0.0
  %717 = vmatprep.subr.mxu0 0.0
  %718 = vmatpush2.msra.mxu0 0.0
  %719 = vmatprep.subr.mxu0 0.0
  %720 = vmatpush2.msra.mxu0 0.0
  %721 = vmatprep.subr.mxu0 0.0
  %722 = vmatpush2.msra.mxu0 0.0
  %723 = vmatprep.subr.mxu0 0.0
  %724 = vmatpush2.msra.mxu0 0.0
  %725 = vmatprep.subr.mxu0 0.0
  %726 = vmatpush2.msra.mxu0 0.0
  %727 = vmatprep.subr.mxu0 0.0
  %728 = vmatpush2.msra.mxu0 0.0
  %729 = vmatprep.subr.mxu0 0.0
  %730 = vmatpush2.msra.mxu0 0.0
  %731 = vmatprep.subr.mxu0 0.0
  %732 = vmatpush2.msra.mxu0 0.0
  %733 = vmatprep.mubr.f32.mxu0 0.0
  %v734 = vand.u32 %v46, 4294901760
  %v735 = vsub.f32 %v46, %v734
  %v736 = vand.u32 %v735, 4294901760
  %737 = vmatmul.mubr.f32.gmra.mxu0 %v736
  %v738 = vpop.f32.mrf.mxu0
  %v739 = vadd.f32 %v560, %v738
  %v740 = vpop.f32.mrf.mxu0
  %741 = vmatprep.mubr.f32.mxu0 0.0
  %v742 = vand.u32 %v49, 4294901760
  %v743 = vsub.f32 %v49, %v742
  %v744 = vand.u32 %v743, 4294901760
  %745 = vmatmul.mubr.f32.gmra.mxu0 %v744
  %v746 = vpop.f32.mrf.mxu0
  %v747 = vadd.f32 %v567, %v746
  %v748 = vpop.f32.mrf.mxu0
  %749 = vmatprep.mubr.f32.mxu0 0.0
  %v750 = vand.u32 %v52, 4294901760
  %v751 = vsub.f32 %v52, %v750
  %v752 = vand.u32 %v751, 4294901760
  %753 = vmatmul.mubr.f32.gmra.mxu0 %v752
  %v754 = vpop.f32.mrf.mxu0
  %v755 = vadd.f32 %v574, %v754
  %v756 = vpop.f32.mrf.mxu0
  %757 = vmatprep.mubr.f32.mxu0 0.0
  %v758 = vand.u32 %v55, 4294901760
  %v759 = vsub.f32 %v55, %v758
  %v760 = vand.u32 %v759, 4294901760
  %761 = vmatmul.mubr.f32.gmra.mxu0 %v760
  %v762 = vpop.f32.mrf.mxu0
  %v763 = vadd.f32 %v581, %v762
  %v764 = vpop.f32.mrf.mxu0
  %765 = vmatprep.mubr.f32.mxu0 0.0
  %v766 = vand.u32 %v58, 4294901760
  %v767 = vsub.f32 %v58, %v766
  %v768 = vand.u32 %v767, 4294901760
  %769 = vmatmul.mubr.f32.gmra.mxu0 %v768
  %v770 = vpop.f32.mrf.mxu0
  %v771 = vadd.f32 %v588, %v770
  %v772 = vpop.f32.mrf.mxu0
  %773 = vmatprep.mubr.f32.mxu0 0.0
  %v774 = vand.u32 %v61, 4294901760
  %v775 = vsub.f32 %v61, %v774
  %v776 = vand.u32 %v775, 4294901760
  %777 = vmatmul.mubr.f32.gmra.mxu0 %v776
  %v778 = vpop.f32.mrf.mxu0
  %v779 = vadd.f32 %v595, %v778
  %v780 = vpop.f32.mrf.mxu0
  %781 = vmatprep.mubr.f32.mxu0 0.0
  %v782 = vand.u32 %v64, 4294901760
  %v783 = vsub.f32 %v64, %v782
  %v784 = vand.u32 %v783, 4294901760
  %785 = vmatmul.mubr.f32.gmra.mxu0 %v784
  %v786 = vpop.f32.mrf.mxu0
  %v787 = vadd.f32 %v602, %v786
  %v788 = vpop.f32.mrf.mxu0
  %789 = vmatprep.mubr.f32.mxu0 0.0
  %v790 = vand.u32 %v67, 4294901760
  %v791 = vsub.f32 %v67, %v790
  %v792 = vand.u32 %v791, 4294901760
  %793 = vmatmul.mubr.f32.gmra.mxu0 %v792
  %v794 = vpop.f32.mrf.mxu0
  %v795 = vadd.f32 %v609, %v794
  %v796 = vpop.f32.mrf.mxu0
  %797 = vmatprep.mubr.f32.mxu0 0.0
  %v798 = vand.u32 %v70, 4294901760
  %v799 = vsub.f32 %v70, %v798
  %v800 = vand.u32 %v799, 4294901760
  %801 = vmatmul.mubr.f32.gmra.mxu0 %v800
  %v802 = vpop.f32.mrf.mxu0
  %v803 = vadd.f32 %v616, %v802
  %v804 = vpop.f32.mrf.mxu0
  %805 = vmatprep.mubr.f32.mxu0 0.0
  %v806 = vand.u32 %v73, 4294901760
  %v807 = vsub.f32 %v73, %v806
  %v808 = vand.u32 %v807, 4294901760
  %809 = vmatmul.mubr.f32.gmra.mxu0 %v808
  %v810 = vpop.f32.mrf.mxu0
  %v811 = vadd.f32 %v623, %v810
  %v812 = vpop.f32.mrf.mxu0
  %813 = vmatprep.mubr.f32.mxu0 0.0
  %v814 = vand.u32 %v76, 4294901760
  %v815 = vsub.f32 %v76, %v814
  %v816 = vand.u32 %v815, 4294901760
  %817 = vmatmul.mubr.f32.gmra.mxu0 %v816
  %v818 = vpop.f32.mrf.mxu0
  %v819 = vadd.f32 %v630, %v818
  %v820 = vpop.f32.mrf.mxu0
  %821 = vmatprep.mubr.f32.mxu0 0.0
  %v822 = vand.u32 %v79, 4294901760
  %v823 = vsub.f32 %v79, %v822
  %v824 = vand.u32 %v823, 4294901760
  %825 = vmatmul.mubr.f32.gmra.mxu0 %v824
  %v826 = vpop.f32.mrf.mxu0
  %v827 = vadd.f32 %v637, %v826
  %v828 = vpop.f32.mrf.mxu0
  %829 = vmatprep.mubr.f32.mxu0 0.0
  %v830 = vand.u32 %v82, 4294901760
  %v831 = vsub.f32 %v82, %v830
  %v832 = vand.u32 %v831, 4294901760
  %833 = vmatmul.mubr.f32.gmra.mxu0 %v832
  %v834 = vpop.f32.mrf.mxu0
  %v835 = vadd.f32 %v644, %v834
  %v836 = vpop.f32.mrf.mxu0
  %837 = vmatprep.mubr.f32.mxu0 0.0
  %v838 = vand.u32 %v85, 4294901760
  %v839 = vsub.f32 %v85, %v838
  %v840 = vand.u32 %v839, 4294901760
  %841 = vmatmul.mubr.f32.gmra.mxu0 %v840
  %v842 = vpop.f32.mrf.mxu0
  %v843 = vadd.f32 %v651, %v842
  %v844 = vpop.f32.mrf.mxu0
  %845 = vmatprep.mubr.f32.mxu0 0.0
  %v846 = vand.u32 %v88, 4294901760
  %v847 = vsub.f32 %v88, %v846
  %v848 = vand.u32 %v847, 4294901760
  %849 = vmatmul.mubr.f32.gmra.mxu0 %v848
  %v850 = vpop.f32.mrf.mxu0
  %v851 = vadd.f32 %v658, %v850
  %v852 = vpop.f32.mrf.mxu0
  %853 = vmatprep.mubr.f32.mxu0 0.0
  %v854 = vand.u32 %v91, 4294901760
  %v855 = vsub.f32 %v91, %v854
  %v856 = vand.u32 %v855, 4294901760
  %857 = vmatmul.mubr.f32.gmra.mxu0 %v856
  %v858 = vpop.f32.mrf.mxu0
  %v859 = vadd.f32 %v665, %v858
  %v860 = vpop.f32.mrf.mxu0
  %861 = vdwg.mxu0
  %862 = vmatprep.subr.mxu0 0.0
  %863 = vmatpush1.msra.mxu0 0.0
  %864 = vmatprep.subr.mxu0 0.0
  %865 = vmatpush1.msra.mxu0 0.0
  %866 = vmatprep.subr.mxu0 0.0
  %867 = vmatpush1.msra.mxu0 0.0
  %868 = vmatprep.subr.mxu0 0.0
  %869 = vmatpush1.msra.mxu0 0.0
  %870 = vmatprep.subr.mxu0 0.0
  %871 = vmatpush1.msra.mxu0 0.0
  %872 = vmatprep.subr.mxu0 0.0
  %873 = vmatpush1.msra.mxu0 0.0
  %874 = vmatprep.subr.mxu0 0.0
  %875 = vmatpush1.msra.mxu0 0.0
  %876 = vmatprep.subr.mxu0 0.0
  %877 = vmatpush1.msra.mxu0 0.0
  %878 = vmatprep.subr.mxu0 0.0
  %879 = vmatpush1.msra.mxu0 0.0
  %880 = vmatprep.subr.mxu0 0.0
  %881 = vmatpush1.msra.mxu0 0.0
  %882 = vmatprep.subr.mxu0 0.0
  %883 = vmatpush1.msra.mxu0 0.0
  %884 = vmatprep.subr.mxu0 0.0
  %885 = vmatpush1.msra.mxu0 0.0
  %886 = vmatprep.subr.mxu0 0.0
  %887 = vmatpush1.msra.mxu0 0.0
  %888 = vmatprep.subr.mxu0 0.0
  %889 = vmatpush1.msra.mxu0 0.0
  %890 = vmatprep.subr.mxu0 0.0
  %891 = vmatpush1.msra.mxu0 0.0
  %892 = vmatprep.subr.mxu0 0.0
  %v893 = vand.u32 %v95, 4294901760
  %v894 = vsub.f32 %v95, %v893
  %v895 = vand.u32 %v894, 4294901760
  %896 = vmatpush1.msra.mxu0 %v895
  %897 = vmatprep.subr.mxu0 0.0
  %898 = vmatpush2.msra.mxu0 0.0
  %899 = vmatprep.subr.mxu0 0.0
  %900 = vmatpush2.msra.mxu0 0.0
  %901 = vmatprep.subr.mxu0 0.0
  %902 = vmatpush2.msra.mxu0 0.0
  %903 = vmatprep.subr.mxu0 0.0
  %904 = vmatpush2.msra.mxu0 0.0
  %905 = vmatprep.subr.mxu0 0.0
  %906 = vmatpush2.msra.mxu0 0.0
  %907 = vmatprep.subr.mxu0 0.0
  %908 = vmatpush2.msra.mxu0 0.0
  %909 = vmatprep.subr.mxu0 0.0
  %910 = vmatpush2.msra.mxu0 0.0
  %911 = vmatprep.subr.mxu0 0.0
  %912 = vmatpush2.msra.mxu0 0.0
  %913 = vmatprep.subr.mxu0 0.0
  %914 = vmatpush2.msra.mxu0 0.0
  %915 = vmatprep.subr.mxu0 0.0
  %916 = vmatpush2.msra.mxu0 0.0
  %917 = vmatprep.subr.mxu0 0.0
  %918 = vmatpush2.msra.mxu0 0.0
  %919 = vmatprep.subr.mxu0 0.0
  %920 = vmatpush2.msra.mxu0 0.0
  %921 = vmatprep.subr.mxu0 0.0
  %922 = vmatpush2.msra.mxu0 0.0
  %923 = vmatprep.subr.mxu0 0.0
  %924 = vmatpush2.msra.mxu0 0.0
  %925 = vmatprep.subr.mxu0 0.0
  %926 = vmatpush2.msra.mxu0 0.0
  %927 = vmatprep.subr.mxu0 0.0
  %928 = vmatpush2.msra.mxu0 0.0
  %929 = vmatprep.mubr.f32.mxu0 0.0
  %v930 = vand.u32 %v46, 4294901760
  %931 = vmatmul.mubr.f32.gmra.mxu0 %v930
  %v932 = vpop.f32.mrf.mxu0
  %v933 = vadd.f32 %v739, %v932
  %v934 = vpop.f32.mrf.mxu0
  %935 = vmatprep.mubr.f32.mxu0 0.0
  %v936 = vand.u32 %v49, 4294901760
  %937 = vmatmul.mubr.f32.gmra.mxu0 %v936
  %v938 = vpop.f32.mrf.mxu0
  %v939 = vadd.f32 %v747, %v938
  %v940 = vpop.f32.mrf.mxu0
  %941 = vmatprep.mubr.f32.mxu0 0.0
  %v942 = vand.u32 %v52, 4294901760
  %943 = vmatmul.mubr.f32.gmra.mxu0 %v942
  %v944 = vpop.f32.mrf.mxu0
  %v945 = vadd.f32 %v755, %v944
  %v946 = vpop.f32.mrf.mxu0
  %947 = vmatprep.mubr.f32.mxu0 0.0
  %v948 = vand.u32 %v55, 4294901760
  %949 = vmatmul.mubr.f32.gmra.mxu0 %v948
  %v950 = vpop.f32.mrf.mxu0
  %v951 = vadd.f32 %v763, %v950
  %v952 = vpop.f32.mrf.mxu0
  %953 = vmatprep.mubr.f32.mxu0 0.0
  %v954 = vand.u32 %v58, 4294901760
  %955 = vmatmul.mubr.f32.gmra.mxu0 %v954
  %v956 = vpop.f32.mrf.mxu0
  %v957 = vadd.f32 %v771, %v956
  %v958 = vpop.f32.mrf.mxu0
  %959 = vmatprep.mubr.f32.mxu0 0.0
  %v960 = vand.u32 %v61, 4294901760
  %961 = vmatmul.mubr.f32.gmra.mxu0 %v960
  %v962 = vpop.f32.mrf.mxu0
  %v963 = vadd.f32 %v779, %v962
  %v964 = vpop.f32.mrf.mxu0
  %965 = vmatprep.mubr.f32.mxu0 0.0
  %v966 = vand.u32 %v64, 4294901760
  %967 = vmatmul.mubr.f32.gmra.mxu0 %v966
  %v968 = vpop.f32.mrf.mxu0
  %v969 = vadd.f32 %v787, %v968
  %v970 = vpop.f32.mrf.mxu0
  %971 = vmatprep.mubr.f32.mxu0 0.0
  %v972 = vand.u32 %v67, 4294901760
  %973 = vmatmul.mubr.f32.gmra.mxu0 %v972
  %v974 = vpop.f32.mrf.mxu0
  %v975 = vadd.f32 %v795, %v974
  %v976 = vpop.f32.mrf.mxu0
  %977 = vmatprep.mubr.f32.mxu0 0.0
  %v978 = vand.u32 %v70, 4294901760
  %979 = vmatmul.mubr.f32.gmra.mxu0 %v978
  %v980 = vpop.f32.mrf.mxu0
  %v981 = vadd.f32 %v803, %v980
  %v982 = vpop.f32.mrf.mxu0
  %983 = vmatprep.mubr.f32.mxu0 0.0
  %v984 = vand.u32 %v73, 4294901760
  %985 = vmatmul.mubr.f32.gmra.mxu0 %v984
  %v986 = vpop.f32.mrf.mxu0
  %v987 = vadd.f32 %v811, %v986
  %v988 = vpop.f32.mrf.mxu0
  %989 = vmatprep.mubr.f32.mxu0 0.0
  %v990 = vand.u32 %v76, 4294901760
  %991 = vmatmul.mubr.f32.gmra.mxu0 %v990
  %v992 = vpop.f32.mrf.mxu0
  %v993 = vadd.f32 %v819, %v992
  %v994 = vpop.f32.mrf.mxu0
  %995 = vmatprep.mubr.f32.mxu0 0.0
  %v996 = vand.u32 %v79, 4294901760
  %997 = vmatmul.mubr.f32.gmra.mxu0 %v996
  %v998 = vpop.f32.mrf.mxu0
  %v999 = vadd.f32 %v827, %v998
  %v1000 = vpop.f32.mrf.mxu0
  %1001 = vmatprep.mubr.f32.mxu0 0.0
  %v1002 = vand.u32 %v82, 4294901760
  %1003 = vmatmul.mubr.f32.gmra.mxu0 %v1002
  %v1004 = vpop.f32.mrf.mxu0
  %v1005 = vadd.f32 %v835, %v1004
  %v1006 = vpop.f32.mrf.mxu0
  %1007 = vmatprep.mubr.f32.mxu0 0.0
  %v1008 = vand.u32 %v85, 4294901760
  %1009 = vmatmul.mubr.f32.gmra.mxu0 %v1008
  %v1010 = vpop.f32.mrf.mxu0
  %v1011 = vadd.f32 %v843, %v1010
  %v1012 = vpop.f32.mrf.mxu0
  %1013 = vmatprep.mubr.f32.mxu0 0.0
  %v1014 = vand.u32 %v88, 4294901760
  %1015 = vmatmul.mubr.f32.gmra.mxu0 %v1014
  %v1016 = vpop.f32.mrf.mxu0
  %v1017 = vadd.f32 %v851, %v1016
  %v1018 = vpop.f32.mrf.mxu0
  %1019 = vmatprep.mubr.f32.mxu0 0.0
  %v1020 = vand.u32 %v91, 4294901760
  %1021 = vmatmul.mubr.f32.gmra.mxu0 %v1020
  %v1022 = vpop.f32.mrf.mxu0
  %v1023 = vadd.f32 %v859, %v1022
  %v1024 = vpop.f32.mrf.mxu0
  %1025 = vdwg.mxu0
  %1026 = vmatprep.subr.mxu0 0.0
  %1027 = vmatpush1.msra.mxu0 0.0
  %1028 = vmatprep.subr.mxu0 0.0
  %1029 = vmatpush1.msra.mxu0 0.0
  %1030 = vmatprep.subr.mxu0 0.0
  %1031 = vmatpush1.msra.mxu0 0.0
  %1032 = vmatprep.subr.mxu0 0.0
  %1033 = vmatpush1.msra.mxu0 0.0
  %1034 = vmatprep.subr.mxu0 0.0
  %1035 = vmatpush1.msra.mxu0 0.0
  %1036 = vmatprep.subr.mxu0 0.0
  %1037 = vmatpush1.msra.mxu0 0.0
  %1038 = vmatprep.subr.mxu0 0.0
  %1039 = vmatpush1.msra.mxu0 0.0
  %1040 = vmatprep.subr.mxu0 0.0
  %1041 = vmatpush1.msra.mxu0 0.0
  %1042 = vmatprep.subr.mxu0 0.0
  %1043 = vmatpush1.msra.mxu0 0.0
  %1044 = vmatprep.subr.mxu0 0.0
  %1045 = vmatpush1.msra.mxu0 0.0
  %1046 = vmatprep.subr.mxu0 0.0
  %1047 = vmatpush1.msra.mxu0 0.0
  %1048 = vmatprep.subr.mxu0 0.0
  %1049 = vmatpush1.msra.mxu0 0.0
  %1050 = vmatprep.subr.mxu0 0.0
  %1051 = vmatpush1.msra.mxu0 0.0
  %1052 = vmatprep.subr.mxu0 0.0
  %1053 = vmatpush1.msra.mxu0 0.0
  %1054 = vmatprep.subr.mxu0 0.0
  %1055 = vmatpush1.msra.mxu0 0.0
  %1056 = vmatprep.subr.mxu0 0.0
  %v1057 = vand.u32 %v95, 4294901760
  %1058 = vmatpush1.msra.mxu0 %v1057
  %1059 = vmatprep.subr.mxu0 0.0
  %1060 = vmatpush2.msra.mxu0 0.0
  %1061 = vmatprep.subr.mxu0 0.0
  %1062 = vmatpush2.msra.mxu0 0.0
  %1063 = vmatprep.subr.mxu0 0.0
  %1064 = vmatpush2.msra.mxu0 0.0
  %1065 = vmatprep.subr.mxu0 0.0
  %1066 = vmatpush2.msra.mxu0 0.0
  %1067 = vmatprep.subr.mxu0 0.0
  %1068 = vmatpush2.msra.mxu0 0.0
  %1069 = vmatprep.subr.mxu0 0.0
  %1070 = vmatpush2.msra.mxu0 0.0
  %1071 = vmatprep.subr.mxu0 0.0
  %1072 = vmatpush2.msra.mxu0 0.0
  %1073 = vmatprep.subr.mxu0 0.0
  %1074 = vmatpush2.msra.mxu0 0.0
  %1075 = vmatprep.subr.mxu0 0.0
  %1076 = vmatpush2.msra.mxu0 0.0
  %1077 = vmatprep.subr.mxu0 0.0
  %1078 = vmatpush2.msra.mxu0 0.0
  %1079 = vmatprep.subr.mxu0 0.0
  %1080 = vmatpush2.msra.mxu0 0.0
  %1081 = vmatprep.subr.mxu0 0.0
  %1082 = vmatpush2.msra.mxu0 0.0
  %1083 = vmatprep.subr.mxu0 0.0
  %1084 = vmatpush2.msra.mxu0 0.0
  %1085 = vmatprep.subr.mxu0 0.0
  %1086 = vmatpush2.msra.mxu0 0.0
  %1087 = vmatprep.subr.mxu0 0.0
  %1088 = vmatpush2.msra.mxu0 0.0
  %1089 = vmatprep.subr.mxu0 0.0
  %1090 = vmatpush2.msra.mxu0 0.0
  %1091 = vmatprep.mubr.f32.mxu0 0.0
  %v1092 = vand.u32 %v46, 4294901760
  %1093 = vmatmul.mubr.f32.gmra.mxu0 %v1092
  %v1094 = vpop.f32.mrf.mxu0
  %v1095 = vadd.f32 %v933, %v1094
  %v1096 = vpop.f32.mrf.mxu0
  %1097 = vmatprep.mubr.f32.mxu0 0.0
  %v1098 = vand.u32 %v49, 4294901760
  %1099 = vmatmul.mubr.f32.gmra.mxu0 %v1098
  %v1100 = vpop.f32.mrf.mxu0
  %v1101 = vadd.f32 %v939, %v1100
  %v1102 = vpop.f32.mrf.mxu0
  %1103 = vmatprep.mubr.f32.mxu0 0.0
  %v1104 = vand.u32 %v52, 4294901760
  %1105 = vmatmul.mubr.f32.gmra.mxu0 %v1104
  %v1106 = vpop.f32.mrf.mxu0
  %v1107 = vadd.f32 %v945, %v1106
  %v1108 = vpop.f32.mrf.mxu0
  %1109 = vmatprep.mubr.f32.mxu0 0.0
  %v1110 = vand.u32 %v55, 4294901760
  %1111 = vmatmul.mubr.f32.gmra.mxu0 %v1110
  %v1112 = vpop.f32.mrf.mxu0
  %v1113 = vadd.f32 %v951, %v1112
  %v1114 = vpop.f32.mrf.mxu0
  %1115 = vmatprep.mubr.f32.mxu0 0.0
  %v1116 = vand.u32 %v58, 4294901760
  %1117 = vmatmul.mubr.f32.gmra.mxu0 %v1116
  %v1118 = vpop.f32.mrf.mxu0
  %v1119 = vadd.f32 %v957, %v1118
  %v1120 = vpop.f32.mrf.mxu0
  %1121 = vmatprep.mubr.f32.mxu0 0.0
  %v1122 = vand.u32 %v61, 4294901760
  %1123 = vmatmul.mubr.f32.gmra.mxu0 %v1122
  %v1124 = vpop.f32.mrf.mxu0
  %v1125 = vadd.f32 %v963, %v1124
  %v1126 = vpop.f32.mrf.mxu0
  %1127 = vmatprep.mubr.f32.mxu0 0.0
  %v1128 = vand.u32 %v64, 4294901760
  %1129 = vmatmul.mubr.f32.gmra.mxu0 %v1128
  %v1130 = vpop.f32.mrf.mxu0
  %v1131 = vadd.f32 %v969, %v1130
  %v1132 = vpop.f32.mrf.mxu0
  %1133 = vmatprep.mubr.f32.mxu0 0.0
  %v1134 = vand.u32 %v67, 4294901760
  %1135 = vmatmul.mubr.f32.gmra.mxu0 %v1134
  %v1136 = vpop.f32.mrf.mxu0
  %v1137 = vadd.f32 %v975, %v1136
  %v1138 = vpop.f32.mrf.mxu0
  %1139 = vmatprep.mubr.f32.mxu0 0.0
  %v1140 = vand.u32 %v70, 4294901760
  %1141 = vmatmul.mubr.f32.gmra.mxu0 %v1140
  %v1142 = vpop.f32.mrf.mxu0
  %v1143 = vadd.f32 %v981, %v1142
  %v1144 = vpop.f32.mrf.mxu0
  %1145 = vmatprep.mubr.f32.mxu0 0.0
  %v1146 = vand.u32 %v73, 4294901760
  %1147 = vmatmul.mubr.f32.gmra.mxu0 %v1146
  %v1148 = vpop.f32.mrf.mxu0
  %v1149 = vadd.f32 %v987, %v1148
  %v1150 = vpop.f32.mrf.mxu0
  %1151 = vmatprep.mubr.f32.mxu0 0.0
  %v1152 = vand.u32 %v76, 4294901760
  %1153 = vmatmul.mubr.f32.gmra.mxu0 %v1152
  %v1154 = vpop.f32.mrf.mxu0
  %v1155 = vadd.f32 %v993, %v1154
  %v1156 = vpop.f32.mrf.mxu0
  %1157 = vmatprep.mubr.f32.mxu0 0.0
  %v1158 = vand.u32 %v79, 4294901760
  %1159 = vmatmul.mubr.f32.gmra.mxu0 %v1158
  %v1160 = vpop.f32.mrf.mxu0
  %v1161 = vadd.f32 %v999, %v1160
  %v1162 = vpop.f32.mrf.mxu0
  %1163 = vmatprep.mubr.f32.mxu0 0.0
  %v1164 = vand.u32 %v82, 4294901760
  %1165 = vmatmul.mubr.f32.gmra.mxu0 %v1164
  %v1166 = vpop.f32.mrf.mxu0
  %v1167 = vadd.f32 %v1005, %v1166
  %v1168 = vpop.f32.mrf.mxu0
  %1169 = vmatprep.mubr.f32.mxu0 0.0
  %v1170 = vand.u32 %v85, 4294901760
  %1171 = vmatmul.mubr.f32.gmra.mxu0 %v1170
  %v1172 = vpop.f32.mrf.mxu0
  %v1173 = vadd.f32 %v1011, %v1172
  %v1174 = vpop.f32.mrf.mxu0
  %1175 = vmatprep.mubr.f32.mxu0 0.0
  %v1176 = vand.u32 %v88, 4294901760
  %1177 = vmatmul.mubr.f32.gmra.mxu0 %v1176
  %v1178 = vpop.f32.mrf.mxu0
  %v1179 = vadd.f32 %v1017, %v1178
  %v1180 = vpop.f32.mrf.mxu0
  %1181 = vmatprep.mubr.f32.mxu0 0.0
  %v1182 = vand.u32 %v91, 4294901760
  %1183 = vmatmul.mubr.f32.gmra.mxu0 %v1182
  %v1184 = vpop.f32.mrf.mxu0
  %v1185 = vadd.f32 %v1023, %v1184
  %v1186 = vpop.f32.mrf.mxu0
  %1187 = vdwg.mxu0
  %v1188 = vand.u32 2147483647, %v1095
  %vm1189 = vcmp.le.f32.partialorder %v1188, 0.7853982
  %vm1190 = vcmp.lt.s32.totalorder %v1095, 0
  %v1191 = vand.u32 %v1095, 2139095040
  %v1192 = vshrl.u32 %v1191, 23
  %v1193 = vsub.s32 %v1192, 127
  %v1194 = vand.u32 2147483647, %v1095
  %v1195 = vand.u32 %v1194, 8388607
  %v1196 = vor.u32 %v1195, 8388608
  %v1197 = vsub.s32 0, %v1196
  %v1198 = vadd.s32 %v1193, 1
  %vm1199 = vcmp.gt.s32.totalorder %v1198, 0
  %v1200 = vsel %vm1199, %v1198, 0
  %v1201 = vshrl.u32 %v1200, 5
  %v1202 = vand.u32 %v1200, 31
  %v1203 = vsub.s32 32, %v1202
  %v1204 = vshrl.u32 683565275, %v1203
  %v1205 = vshll.u32 683565275, %v1202
  %v1206 = vshrl.u32 2475754826, %v1203
  %v1207 = vor.u32 %v1205, %v1206
  %v1208 = vshll.u32 2475754826, %v1202
  %v1209 = vshrl.u32 2131351028, %v1203
  %v1210 = vor.u32 %v1208, %v1209
  %v1211 = vshll.u32 2131351028, %v1202
  %v1212 = vshrl.u32 2102212464, %v1203
  %v1213 = vor.u32 %v1211, %v1212
  %v1214 = vshll.u32 2102212464, %v1202
  %v1215 = vshrl.u32 920167782, %v1203
  %v1216 = vor.u32 %v1214, %v1215
  %v1217 = vshll.u32 920167782, %v1202
  %v1218 = vshrl.u32 1326507024, %v1203
  %v1219 = vor.u32 %v1217, %v1218
  %vm1220 = vcmp.lt.s32.totalorder %v1201, 1
  %vm1221 = vcmp.lt.s32.totalorder %v1201, 2
  %vm1222 = vcmp.lt.s32.totalorder %v1201, 3
  %vm1223 = vcmp.lt.s32.totalorder %v1201, 4
  %v1224 = vsel %vm1220, %v1204, %v1207
  %v1225 = vsel %vm1223, %v1213, 2102212464
  %v1226 = vsel %vm1222, %v1210, %v1225
  %v1227 = vsel %vm1221, %v1224, %v1226
  %v1228 = vsel %vm1220, %v1207, %v1210
  %v1229 = vsel %vm1223, %v1216, 920167782
  %v1230 = vsel %vm1222, %v1213, %v1229
  %v1231 = vsel %vm1221, %v1228, %v1230
  %v1232 = vsel %vm1220, %v1210, %v1213
  %v1233 = vsel %vm1223, %v1219, 1326507024
  %v1234 = vsel %vm1222, %v1216, %v1233
  %v1235 = vsel %vm1221, %v1232, %v1234
  %v1236 = vshll.u32 %v1196, 8
  %v1237 = vmul.u32.u64.compose %v1236, %v1235
  %v1238 = vextract.low.u32 %v1237
  %v1239 = vextract.high.u32 %v1237
  %v1240 = vmul.u32.u64.compose %v1236, %v1231
  %v1241 = vextract.low.u32 %v1240
  %v1242 = vextract.high.u32 %v1240
  %v1243 = vmul.u32 %v1236, %v1227
  %v1244 = vadd.s32 %v1239, %v1241
  %vm1245 = vc.u32 %v1239, %v1241
  %v1246 = vadd.s32 %v1242, 1
  %v1247 = vsel %vm1245, %v1246, %v1242
  %v1248 = vadd.s32 %v1243, %v1247
  %v1249 = vadd.s32 %v1248, 536870912
  %v1250 = vshrl.u32 %v1249, 30
  %v1251 = vshll.u32 %v1250, 30
  %v1252 = vsub.s32 %v1248, %v1251
  %vm1253 = vcmp.lt.s32.totalorder %v1252, 0
  %v1254 = vsub.s32 0, %v1252
  %v1255 = vsel %vm1253, %v1254, %v1252
  %v1256 = vclz %v1255
  %v1257 = vsub.s32 %v1256, 2
  %vm1258 = vcmp.gt.s32.totalorder 0, %v1257
  %v1259 = vsel %vm1258, 0, %v1257
  %v1260 = vsub.s32 32, %v1259
  %v1261 = vshll.u32 %v1252, %v1259
  %v1262 = vshrl.u32 %v1244, %v1260
  %v1263 = vor.u32 %v1261, %v1262
  %v1264 = vsub.s32 4294967266, %v1259
  %v1265 = vadd.s32 %v1264, 127
  %v1266 = vshll.u32 %v1265, 23
  %v1267 = vor.u32 4788187, %v1266
  %v1268 = vand.u32 2147483647, %v1267
  %v1270 = vcvt.s32.f32 %v1263
  %v1271 = vmul.f32 %v1270, %v1268
  %v1272 = vxor.u32 %v1271, 2147483648
  %v1273 = vsel %vm1190, %v1272, %v1271
  %v1274 = vsub.s32 4, %v1250
  %v1275 = vsel %vm1190, %v1274, %v1250
  %v1276 = vsel %vm1189, %v1095, %v1273
  %v1277 = vsel %vm1189, 0, %v1275
  %v1278 = vcosq.f32.pop %v1276
  %v1279 = vsinq.f32.pop %v1276
  %vm1280 = vweird.f32 %v1095
  %v1281 = vadd.s32 %v1277, 3
  %v1282 = vand.u32 %v1281, 3
  %vm1283 = vcmp.lt.s32.totalorder %v1282, 2
  %vm1284 = vcmp.eq.s32.totalorder %v1282, 0
  %v1285 = vxor.u32 %v1279, 2147483648
  %v1286 = vsel %vm1284, %v1278, %v1285
  %vm1287 = vcmp.eq.s32.totalorder %v1282, 2
  %v1288 = vxor.u32 %v1278, 2147483648
  %v1289 = vsel %vm1287, %v1288, %v1279
  %v1290 = vsel %vm1283, %v1286, %v1289
  %v1291 = vsel %vm1280, nan, %v1290
  %v1292 = vand.u32 2147483647, %v1101
  %vm1293 = vcmp.le.f32.partialorder %v1292, 0.7853982
  %vm1294 = vcmp.lt.s32.totalorder %v1101, 0
  %v1295 = vand.u32 %v1101, 2139095040
  %v1296 = vshrl.u32 %v1295, 23
  %v1297 = vsub.s32 %v1296, 127
  %v1298 = vand.u32 2147483647, %v1101
  %v1299 = vand.u32 %v1298, 8388607
  %v1300 = vor.u32 %v1299, 8388608
  %v1301 = vsub.s32 0, %v1300
  %v1302 = vadd.s32 %v1297, 1
  %vm1303 = vcmp.gt.s32.totalorder %v1302, 0
  %v1304 = vsel %vm1303, %v1302, 0
  %v1305 = vshrl.u32 %v1304, 5
  %v1306 = vand.u32 %v1304, 31
  %v1307 = vsub.s32 32, %v1306
  %v1308 = vshrl.u32 683565275, %v1307
  %v1309 = vshll.u32 683565275, %v1306
  %v1310 = vshrl.u32 2475754826, %v1307
  %v1311 = vor.u32 %v1309, %v1310
  %v1312 = vshll.u32 2475754826, %v1306
  %v1313 = vshrl.u32 2131351028, %v1307
  %v1314 = vor.u32 %v1312, %v1313
  %v1315 = vshll.u32 2131351028, %v1306
  %v1316 = vshrl.u32 2102212464, %v1307
  %v1317 = vor.u32 %v1315, %v1316
  %v1318 = vshll.u32 2102212464, %v1306
  %v1319 = vshrl.u32 920167782, %v1307
  %v1320 = vor.u32 %v1318, %v1319
  %v1321 = vshll.u32 920167782, %v1306
  %v1322 = vshrl.u32 1326507024, %v1307
  %v1323 = vor.u32 %v1321, %v1322
  %vm1324 = vcmp.lt.s32.totalorder %v1305, 1
  %vm1325 = vcmp.lt.s32.totalorder %v1305, 2
  %vm1326 = vcmp.lt.s32.totalorder %v1305, 3
  %vm1327 = vcmp.lt.s32.totalorder %v1305, 4
  %v1328 = vsel %vm1324, %v1308, %v1311
  %v1329 = vsel %vm1327, %v1317, 2102212464
  %v1330 = vsel %vm1326, %v1314, %v1329
  %v1331 = vsel %vm1325, %v1328, %v1330
  %v1332 = vsel %vm1324, %v1311, %v1314
  %v1333 = vsel %vm1327, %v1320, 920167782
  %v1334 = vsel %vm1326, %v1317, %v1333
  %v1335 = vsel %vm1325, %v1332, %v1334
  %v1336 = vsel %vm1324, %v1314, %v1317
  %v1337 = vsel %vm1327, %v1323, 1326507024
  %v1338 = vsel %vm1326, %v1320, %v1337
  %v1339 = vsel %vm1325, %v1336, %v1338
  %v1340 = vshll.u32 %v1300, 8
  %v1341 = vmul.u32.u64.compose %v1340, %v1339
  %v1342 = vextract.low.u32 %v1341
  %v1343 = vextract.high.u32 %v1341
  %v1344 = vmul.u32.u64.compose %v1340, %v1335
  %v1345 = vextract.low.u32 %v1344
  %v1346 = vextract.high.u32 %v1344
  %v1347 = vmul.u32 %v1340, %v1331
  %v1348 = vadd.s32 %v1343, %v1345
  %vm1349 = vc.u32 %v1343, %v1345
  %v1350 = vadd.s32 %v1346, 1
  %v1351 = vsel %vm1349, %v1350, %v1346
  %v1352 = vadd.s32 %v1347, %v1351
  %v1353 = vadd.s32 %v1352, 536870912
  %v1354 = vshrl.u32 %v1353, 30
  %v1355 = vshll.u32 %v1354, 30
  %v1356 = vsub.s32 %v1352, %v1355
  %vm1357 = vcmp.lt.s32.totalorder %v1356, 0
  %v1358 = vsub.s32 0, %v1356
  %v1359 = vsel %vm1357, %v1358, %v1356
  %v1360 = vclz %v1359
  %v1361 = vsub.s32 %v1360, 2
  %vm1362 = vcmp.gt.s32.totalorder 0, %v1361
  %v1363 = vsel %vm1362, 0, %v1361
  %v1364 = vsub.s32 32, %v1363
  %v1365 = vshll.u32 %v1356, %v1363
  %v1366 = vshrl.u32 %v1348, %v1364
  %v1367 = vor.u32 %v1365, %v1366
  %v1368 = vsub.s32 4294967266, %v1363
  %v1369 = vadd.s32 %v1368, 127
  %v1370 = vshll.u32 %v1369, 23
  %v1371 = vor.u32 4788187, %v1370
  %v1372 = vand.u32 2147483647, %v1371
  %v1374 = vcvt.s32.f32 %v1367
  %v1375 = vmul.f32 %v1374, %v1372
  %v1376 = vxor.u32 %v1375, 2147483648
  %v1377 = vsel %vm1294, %v1376, %v1375
  %v1378 = vsub.s32 4, %v1354
  %v1379 = vsel %vm1294, %v1378, %v1354
  %v1380 = vsel %vm1293, %v1101, %v1377
  %v1381 = vsel %vm1293, 0, %v1379
  %v1382 = vcosq.f32.pop %v1380
  %v1383 = vsinq.f32.pop %v1380
  %vm1384 = vweird.f32 %v1101
  %v1385 = vadd.s32 %v1381, 3
  %v1386 = vand.u32 %v1385, 3
  %vm1387 = vcmp.lt.s32.totalorder %v1386, 2
  %vm1388 = vcmp.eq.s32.totalorder %v1386, 0
  %v1389 = vxor.u32 %v1383, 2147483648
  %v1390 = vsel %vm1388, %v1382, %v1389
  %vm1391 = vcmp.eq.s32.totalorder %v1386, 2
  %v1392 = vxor.u32 %v1382, 2147483648
  %v1393 = vsel %vm1391, %v1392, %v1383
  %v1394 = vsel %vm1387, %v1390, %v1393
  %v1395 = vsel %vm1384, nan, %v1394
  %v1396 = vand.u32 2147483647, %v1107
  %vm1397 = vcmp.le.f32.partialorder %v1396, 0.7853982
  %vm1398 = vcmp.lt.s32.totalorder %v1107, 0
  %v1399 = vand.u32 %v1107, 2139095040
  %v1400 = vshrl.u32 %v1399, 23
  %v1401 = vsub.s32 %v1400, 127
  %v1402 = vand.u32 2147483647, %v1107
  %v1403 = vand.u32 %v1402, 8388607
  %v1404 = vor.u32 %v1403, 8388608
  %v1405 = vsub.s32 0, %v1404
  %v1406 = vadd.s32 %v1401, 1
  %vm1407 = vcmp.gt.s32.totalorder %v1406, 0
  %v1408 = vsel %vm1407, %v1406, 0
  %v1409 = vshrl.u32 %v1408, 5
  %v1410 = vand.u32 %v1408, 31
  %v1411 = vsub.s32 32, %v1410
  %v1412 = vshrl.u32 683565275, %v1411
  %v1413 = vshll.u32 683565275, %v1410
  %v1414 = vshrl.u32 2475754826, %v1411
  %v1415 = vor.u32 %v1413, %v1414
  %v1416 = vshll.u32 2475754826, %v1410
  %v1417 = vshrl.u32 2131351028, %v1411
  %v1418 = vor.u32 %v1416, %v1417
  %v1419 = vshll.u32 2131351028, %v1410
  %v1420 = vshrl.u32 2102212464, %v1411
  %v1421 = vor.u32 %v1419, %v1420
  %v1422 = vshll.u32 2102212464, %v1410
  %v1423 = vshrl.u32 920167782, %v1411
  %v1424 = vor.u32 %v1422, %v1423
  %v1425 = vshll.u32 920167782, %v1410
  %v1426 = vshrl.u32 1326507024, %v1411
  %v1427 = vor.u32 %v1425, %v1426
  %vm1428 = vcmp.lt.s32.totalorder %v1409, 1
  %vm1429 = vcmp.lt.s32.totalorder %v1409, 2
  %vm1430 = vcmp.lt.s32.totalorder %v1409, 3
  %vm1431 = vcmp.lt.s32.totalorder %v1409, 4
  %v1432 = vsel %vm1428, %v1412, %v1415
  %v1433 = vsel %vm1431, %v1421, 2102212464
  %v1434 = vsel %vm1430, %v1418, %v1433
  %v1435 = vsel %vm1429, %v1432, %v1434
  %v1436 = vsel %vm1428, %v1415, %v1418
  %v1437 = vsel %vm1431, %v1424, 920167782
  %v1438 = vsel %vm1430, %v1421, %v1437
  %v1439 = vsel %vm1429, %v1436, %v1438
  %v1440 = vsel %vm1428, %v1418, %v1421
  %v1441 = vsel %vm1431, %v1427, 1326507024
  %v1442 = vsel %vm1430, %v1424, %v1441
  %v1443 = vsel %vm1429, %v1440, %v1442
  %v1444 = vshll.u32 %v1404, 8
  %v1445 = vmul.u32.u64.compose %v1444, %v1443
  %v1446 = vextract.low.u32 %v1445
  %v1447 = vextract.high.u32 %v1445
  %v1448 = vmul.u32.u64.compose %v1444, %v1439
  %v1449 = vextract.low.u32 %v1448
  %v1450 = vextract.high.u32 %v1448
  %v1451 = vmul.u32 %v1444, %v1435
  %v1452 = vadd.s32 %v1447, %v1449
  %vm1453 = vc.u32 %v1447, %v1449
  %v1454 = vadd.s32 %v1450, 1
  %v1455 = vsel %vm1453, %v1454, %v1450
  %v1456 = vadd.s32 %v1451, %v1455
  %v1457 = vadd.s32 %v1456, 536870912
  %v1458 = vshrl.u32 %v1457, 30
  %v1459 = vshll.u32 %v1458, 30
  %v1460 = vsub.s32 %v1456, %v1459
  %vm1461 = vcmp.lt.s32.totalorder %v1460, 0
  %v1462 = vsub.s32 0, %v1460
  %v1463 = vsel %vm1461, %v1462, %v1460
  %v1464 = vclz %v1463
  %v1465 = vsub.s32 %v1464, 2
  %vm1466 = vcmp.gt.s32.totalorder 0, %v1465
  %v1467 = vsel %vm1466, 0, %v1465
  %v1468 = vsub.s32 32, %v1467
  %v1469 = vshll.u32 %v1460, %v1467
  %v1470 = vshrl.u32 %v1452, %v1468
  %v1471 = vor.u32 %v1469, %v1470
  %v1472 = vsub.s32 4294967266, %v1467
  %v1473 = vadd.s32 %v1472, 127
  %v1474 = vshll.u32 %v1473, 23
  %v1475 = vor.u32 4788187, %v1474
  %v1476 = vand.u32 2147483647, %v1475
  %v1478 = vcvt.s32.f32 %v1471
  %v1479 = vmul.f32 %v1478, %v1476
  %v1480 = vxor.u32 %v1479, 2147483648
  %v1481 = vsel %vm1398, %v1480, %v1479
  %v1482 = vsub.s32 4, %v1458
  %v1483 = vsel %vm1398, %v1482, %v1458
  %v1484 = vsel %vm1397, %v1107, %v1481
  %v1485 = vsel %vm1397, 0, %v1483
  %v1486 = vcosq.f32.pop %v1484
  %v1487 = vsinq.f32.pop %v1484
  %vm1488 = vweird.f32 %v1107
  %v1489 = vadd.s32 %v1485, 3
  %v1490 = vand.u32 %v1489, 3
  %vm1491 = vcmp.lt.s32.totalorder %v1490, 2
  %vm1492 = vcmp.eq.s32.totalorder %v1490, 0
  %v1493 = vxor.u32 %v1487, 2147483648
  %v1494 = vsel %vm1492, %v1486, %v1493
  %vm1495 = vcmp.eq.s32.totalorder %v1490, 2
  %v1496 = vxor.u32 %v1486, 2147483648
  %v1497 = vsel %vm1495, %v1496, %v1487
  %v1498 = vsel %vm1491, %v1494, %v1497
  %v1499 = vsel %vm1488, nan, %v1498
  %v1500 = vand.u32 2147483647, %v1113
  %vm1501 = vcmp.le.f32.partialorder %v1500, 0.7853982
  %vm1502 = vcmp.lt.s32.totalorder %v1113, 0
  %v1503 = vand.u32 %v1113, 2139095040
  %v1504 = vshrl.u32 %v1503, 23
  %v1505 = vsub.s32 %v1504, 127
  %v1506 = vand.u32 2147483647, %v1113
  %v1507 = vand.u32 %v1506, 8388607
  %v1508 = vor.u32 %v1507, 8388608
  %v1509 = vsub.s32 0, %v1508
  %v1510 = vadd.s32 %v1505, 1
  %vm1511 = vcmp.gt.s32.totalorder %v1510, 0
  %v1512 = vsel %vm1511, %v1510, 0
  %v1513 = vshrl.u32 %v1512, 5
  %v1514 = vand.u32 %v1512, 31
  %v1515 = vsub.s32 32, %v1514
  %v1516 = vshrl.u32 683565275, %v1515
  %v1517 = vshll.u32 683565275, %v1514
  %v1518 = vshrl.u32 2475754826, %v1515
  %v1519 = vor.u32 %v1517, %v1518
  %v1520 = vshll.u32 2475754826, %v1514
  %v1521 = vshrl.u32 2131351028, %v1515
  %v1522 = vor.u32 %v1520, %v1521
  %v1523 = vshll.u32 2131351028, %v1514
  %v1524 = vshrl.u32 2102212464, %v1515
  %v1525 = vor.u32 %v1523, %v1524
  %v1526 = vshll.u32 2102212464, %v1514
  %v1527 = vshrl.u32 920167782, %v1515
  %v1528 = vor.u32 %v1526, %v1527
  %v1529 = vshll.u32 920167782, %v1514
  %v1530 = vshrl.u32 1326507024, %v1515
  %v1531 = vor.u32 %v1529, %v1530
  %vm1532 = vcmp.lt.s32.totalorder %v1513, 1
  %vm1533 = vcmp.lt.s32.totalorder %v1513, 2
  %vm1534 = vcmp.lt.s32.totalorder %v1513, 3
  %vm1535 = vcmp.lt.s32.totalorder %v1513, 4
  %v1536 = vsel %vm1532, %v1516, %v1519
  %v1537 = vsel %vm1535, %v1525, 2102212464
  %v1538 = vsel %vm1534, %v1522, %v1537
  %v1539 = vsel %vm1533, %v1536, %v1538
  %v1540 = vsel %vm1532, %v1519, %v1522
  %v1541 = vsel %vm1535, %v1528, 920167782
  %v1542 = vsel %vm1534, %v1525, %v1541
  %v1543 = vsel %vm1533, %v1540, %v1542
  %v1544 = vsel %vm1532, %v1522, %v1525
  %v1545 = vsel %vm1535, %v1531, 1326507024
  %v1546 = vsel %vm1534, %v1528, %v1545
  %v1547 = vsel %vm1533, %v1544, %v1546
  %v1548 = vshll.u32 %v1508, 8
  %v1549 = vmul.u32.u64.compose %v1548, %v1547
  %v1550 = vextract.low.u32 %v1549
  %v1551 = vextract.high.u32 %v1549
  %v1552 = vmul.u32.u64.compose %v1548, %v1543
  %v1553 = vextract.low.u32 %v1552
  %v1554 = vextract.high.u32 %v1552
  %v1555 = vmul.u32 %v1548, %v1539
  %v1556 = vadd.s32 %v1551, %v1553
  %vm1557 = vc.u32 %v1551, %v1553
  %v1558 = vadd.s32 %v1554, 1
  %v1559 = vsel %vm1557, %v1558, %v1554
  %v1560 = vadd.s32 %v1555, %v1559
  %v1561 = vadd.s32 %v1560, 536870912
  %v1562 = vshrl.u32 %v1561, 30
  %v1563 = vshll.u32 %v1562, 30
  %v1564 = vsub.s32 %v1560, %v1563
  %vm1565 = vcmp.lt.s32.totalorder %v1564, 0
  %v1566 = vsub.s32 0, %v1564
  %v1567 = vsel %vm1565, %v1566, %v1564
  %v1568 = vclz %v1567
  %v1569 = vsub.s32 %v1568, 2
  %vm1570 = vcmp.gt.s32.totalorder 0, %v1569
  %v1571 = vsel %vm1570, 0, %v1569
  %v1572 = vsub.s32 32, %v1571
  %v1573 = vshll.u32 %v1564, %v1571
  %v1574 = vshrl.u32 %v1556, %v1572
  %v1575 = vor.u32 %v1573, %v1574
  %v1576 = vsub.s32 4294967266, %v1571
  %v1577 = vadd.s32 %v1576, 127
  %v1578 = vshll.u32 %v1577, 23
  %v1579 = vor.u32 4788187, %v1578
  %v1580 = vand.u32 2147483647, %v1579
  %v1582 = vcvt.s32.f32 %v1575
  %v1583 = vmul.f32 %v1582, %v1580
  %v1584 = vxor.u32 %v1583, 2147483648
  %v1585 = vsel %vm1502, %v1584, %v1583
  %v1586 = vsub.s32 4, %v1562
  %v1587 = vsel %vm1502, %v1586, %v1562
  %v1588 = vsel %vm1501, %v1113, %v1585
  %v1589 = vsel %vm1501, 0, %v1587
  %v1590 = vcosq.f32.pop %v1588
  %v1591 = vsinq.f32.pop %v1588
  %vm1592 = vweird.f32 %v1113
  %v1593 = vadd.s32 %v1589, 3
  %v1594 = vand.u32 %v1593, 3
  %vm1595 = vcmp.lt.s32.totalorder %v1594, 2
  %vm1596 = vcmp.eq.s32.totalorder %v1594, 0
  %v1597 = vxor.u32 %v1591, 2147483648
  %v1598 = vsel %vm1596, %v1590, %v1597
  %vm1599 = vcmp.eq.s32.totalorder %v1594, 2
  %v1600 = vxor.u32 %v1590, 2147483648
  %v1601 = vsel %vm1599, %v1600, %v1591
  %v1602 = vsel %vm1595, %v1598, %v1601
  %v1603 = vsel %vm1592, nan, %v1602
  %v1604 = vand.u32 2147483647, %v1119
  %vm1605 = vcmp.le.f32.partialorder %v1604, 0.7853982
  %vm1606 = vcmp.lt.s32.totalorder %v1119, 0
  %v1607 = vand.u32 %v1119, 2139095040
  %v1608 = vshrl.u32 %v1607, 23
  %v1609 = vsub.s32 %v1608, 127
  %v1610 = vand.u32 2147483647, %v1119
  %v1611 = vand.u32 %v1610, 8388607
  %v1612 = vor.u32 %v1611, 8388608
  %v1613 = vsub.s32 0, %v1612
  %v1614 = vadd.s32 %v1609, 1
  %vm1615 = vcmp.gt.s32.totalorder %v1614, 0
  %v1616 = vsel %vm1615, %v1614, 0
  %v1617 = vshrl.u32 %v1616, 5
  %v1618 = vand.u32 %v1616, 31
  %v1619 = vsub.s32 32, %v1618
  %v1620 = vshrl.u32 683565275, %v1619
  %v1621 = vshll.u32 683565275, %v1618
  %v1622 = vshrl.u32 2475754826, %v1619
  %v1623 = vor.u32 %v1621, %v1622
  %v1624 = vshll.u32 2475754826, %v1618
  %v1625 = vshrl.u32 2131351028, %v1619
  %v1626 = vor.u32 %v1624, %v1625
  %v1627 = vshll.u32 2131351028, %v1618
  %v1628 = vshrl.u32 2102212464, %v1619
  %v1629 = vor.u32 %v1627, %v1628
  %v1630 = vshll.u32 2102212464, %v1618
  %v1631 = vshrl.u32 920167782, %v1619
  %v1632 = vor.u32 %v1630, %v1631
  %v1633 = vshll.u32 920167782, %v1618
  %v1634 = vshrl.u32 1326507024, %v1619
  %v1635 = vor.u32 %v1633, %v1634
  %vm1636 = vcmp.lt.s32.totalorder %v1617, 1
  %vm1637 = vcmp.lt.s32.totalorder %v1617, 2
  %vm1638 = vcmp.lt.s32.totalorder %v1617, 3
  %vm1639 = vcmp.lt.s32.totalorder %v1617, 4
  %v1640 = vsel %vm1636, %v1620, %v1623
  %v1641 = vsel %vm1639, %v1629, 2102212464
  %v1642 = vsel %vm1638, %v1626, %v1641
  %v1643 = vsel %vm1637, %v1640, %v1642
  %v1644 = vsel %vm1636, %v1623, %v1626
  %v1645 = vsel %vm1639, %v1632, 920167782
  %v1646 = vsel %vm1638, %v1629, %v1645
  %v1647 = vsel %vm1637, %v1644, %v1646
  %v1648 = vsel %vm1636, %v1626, %v1629
  %v1649 = vsel %vm1639, %v1635, 1326507024
  %v1650 = vsel %vm1638, %v1632, %v1649
  %v1651 = vsel %vm1637, %v1648, %v1650
  %v1652 = vshll.u32 %v1612, 8
  %v1653 = vmul.u32.u64.compose %v1652, %v1651
  %v1654 = vextract.low.u32 %v1653
  %v1655 = vextract.high.u32 %v1653
  %v1656 = vmul.u32.u64.compose %v1652, %v1647
  %v1657 = vextract.low.u32 %v1656
  %v1658 = vextract.high.u32 %v1656
  %v1659 = vmul.u32 %v1652, %v1643
  %v1660 = vadd.s32 %v1655, %v1657
  %vm1661 = vc.u32 %v1655, %v1657
  %v1662 = vadd.s32 %v1658, 1
  %v1663 = vsel %vm1661, %v1662, %v1658
  %v1664 = vadd.s32 %v1659, %v1663
  %v1665 = vadd.s32 %v1664, 536870912
  %v1666 = vshrl.u32 %v1665, 30
  %v1667 = vshll.u32 %v1666, 30
  %v1668 = vsub.s32 %v1664, %v1667
  %vm1669 = vcmp.lt.s32.totalorder %v1668, 0
  %v1670 = vsub.s32 0, %v1668
  %v1671 = vsel %vm1669, %v1670, %v1668
  %v1672 = vclz %v1671
  %v1673 = vsub.s32 %v1672, 2
  %vm1674 = vcmp.gt.s32.totalorder 0, %v1673
  %v1675 = vsel %vm1674, 0, %v1673
  %v1676 = vsub.s32 32, %v1675
  %v1677 = vshll.u32 %v1668, %v1675
  %v1678 = vshrl.u32 %v1660, %v1676
  %v1679 = vor.u32 %v1677, %v1678
  %v1680 = vsub.s32 4294967266, %v1675
  %v1681 = vadd.s32 %v1680, 127
  %v1682 = vshll.u32 %v1681, 23
  %v1683 = vor.u32 4788187, %v1682
  %v1684 = vand.u32 2147483647, %v1683
  %v1686 = vcvt.s32.f32 %v1679
  %v1687 = vmul.f32 %v1686, %v1684
  %v1688 = vxor.u32 %v1687, 2147483648
  %v1689 = vsel %vm1606, %v1688, %v1687
  %v1690 = vsub.s32 4, %v1666
  %v1691 = vsel %vm1606, %v1690, %v1666
  %v1692 = vsel %vm1605, %v1119, %v1689
  %v1693 = vsel %vm1605, 0, %v1691
  %v1694 = vcosq.f32.pop %v1692
  %v1695 = vsinq.f32.pop %v1692
  %vm1696 = vweird.f32 %v1119
  %v1697 = vadd.s32 %v1693, 3
  %v1698 = vand.u32 %v1697, 3
  %vm1699 = vcmp.lt.s32.totalorder %v1698, 2
  %vm1700 = vcmp.eq.s32.totalorder %v1698, 0
  %v1701 = vxor.u32 %v1695, 2147483648
  %v1702 = vsel %vm1700, %v1694, %v1701
  %vm1703 = vcmp.eq.s32.totalorder %v1698, 2
  %v1704 = vxor.u32 %v1694, 2147483648
  %v1705 = vsel %vm1703, %v1704, %v1695
  %v1706 = vsel %vm1699, %v1702, %v1705
  %v1707 = vsel %vm1696, nan, %v1706
  %v1708 = vand.u32 2147483647, %v1125
  %vm1709 = vcmp.le.f32.partialorder %v1708, 0.7853982
  %vm1710 = vcmp.lt.s32.totalorder %v1125, 0
  %v1711 = vand.u32 %v1125, 2139095040
  %v1712 = vshrl.u32 %v1711, 23
  %v1713 = vsub.s32 %v1712, 127
  %v1714 = vand.u32 2147483647, %v1125
  %v1715 = vand.u32 %v1714, 8388607
  %v1716 = vor.u32 %v1715, 8388608
  %v1717 = vsub.s32 0, %v1716
  %v1718 = vadd.s32 %v1713, 1
  %vm1719 = vcmp.gt.s32.totalorder %v1718, 0
  %v1720 = vsel %vm1719, %v1718, 0
  %v1721 = vshrl.u32 %v1720, 5
  %v1722 = vand.u32 %v1720, 31
  %v1723 = vsub.s32 32, %v1722
  %v1724 = vshrl.u32 683565275, %v1723
  %v1725 = vshll.u32 683565275, %v1722
  %v1726 = vshrl.u32 2475754826, %v1723
  %v1727 = vor.u32 %v1725, %v1726
  %v1728 = vshll.u32 2475754826, %v1722
  %v1729 = vshrl.u32 2131351028, %v1723
  %v1730 = vor.u32 %v1728, %v1729
  %v1731 = vshll.u32 2131351028, %v1722
  %v1732 = vshrl.u32 2102212464, %v1723
  %v1733 = vor.u32 %v1731, %v1732
  %v1734 = vshll.u32 2102212464, %v1722
  %v1735 = vshrl.u32 920167782, %v1723
  %v1736 = vor.u32 %v1734, %v1735
  %v1737 = vshll.u32 920167782, %v1722
  %v1738 = vshrl.u32 1326507024, %v1723
  %v1739 = vor.u32 %v1737, %v1738
  %vm1740 = vcmp.lt.s32.totalorder %v1721, 1
  %vm1741 = vcmp.lt.s32.totalorder %v1721, 2
  %vm1742 = vcmp.lt.s32.totalorder %v1721, 3
  %vm1743 = vcmp.lt.s32.totalorder %v1721, 4
  %v1744 = vsel %vm1740, %v1724, %v1727
  %v1745 = vsel %vm1743, %v1733, 2102212464
  %v1746 = vsel %vm1742, %v1730, %v1745
  %v1747 = vsel %vm1741, %v1744, %v1746
  %v1748 = vsel %vm1740, %v1727, %v1730
  %v1749 = vsel %vm1743, %v1736, 920167782
  %v1750 = vsel %vm1742, %v1733, %v1749
  %v1751 = vsel %vm1741, %v1748, %v1750
  %v1752 = vsel %vm1740, %v1730, %v1733
  %v1753 = vsel %vm1743, %v1739, 1326507024
  %v1754 = vsel %vm1742, %v1736, %v1753
  %v1755 = vsel %vm1741, %v1752, %v1754
  %v1756 = vshll.u32 %v1716, 8
  %v1757 = vmul.u32.u64.compose %v1756, %v1755
  %v1758 = vextract.low.u32 %v1757
  %v1759 = vextract.high.u32 %v1757
  %v1760 = vmul.u32.u64.compose %v1756, %v1751
  %v1761 = vextract.low.u32 %v1760
  %v1762 = vextract.high.u32 %v1760
  %v1763 = vmul.u32 %v1756, %v1747
  %v1764 = vadd.s32 %v1759, %v1761
  %vm1765 = vc.u32 %v1759, %v1761
  %v1766 = vadd.s32 %v1762, 1
  %v1767 = vsel %vm1765, %v1766, %v1762
  %v1768 = vadd.s32 %v1763, %v1767
  %v1769 = vadd.s32 %v1768, 536870912
  %v1770 = vshrl.u32 %v1769, 30
  %v1771 = vshll.u32 %v1770, 30
  %v1772 = vsub.s32 %v1768, %v1771
  %vm1773 = vcmp.lt.s32.totalorder %v1772, 0
  %v1774 = vsub.s32 0, %v1772
  %v1775 = vsel %vm1773, %v1774, %v1772
  %v1776 = vclz %v1775
  %v1777 = vsub.s32 %v1776, 2
  %vm1778 = vcmp.gt.s32.totalorder 0, %v1777
  %v1779 = vsel %vm1778, 0, %v1777
  %v1780 = vsub.s32 32, %v1779
  %v1781 = vshll.u32 %v1772, %v1779
  %v1782 = vshrl.u32 %v1764, %v1780
  %v1783 = vor.u32 %v1781, %v1782
  %v1784 = vsub.s32 4294967266, %v1779
  %v1785 = vadd.s32 %v1784, 127
  %v1786 = vshll.u32 %v1785, 23
  %v1787 = vor.u32 4788187, %v1786
  %v1788 = vand.u32 2147483647, %v1787
  %v1790 = vcvt.s32.f32 %v1783
  %v1791 = vmul.f32 %v1790, %v1788
  %v1792 = vxor.u32 %v1791, 2147483648
  %v1793 = vsel %vm1710, %v1792, %v1791
  %v1794 = vsub.s32 4, %v1770
  %v1795 = vsel %vm1710, %v1794, %v1770
  %v1796 = vsel %vm1709, %v1125, %v1793
  %v1797 = vsel %vm1709, 0, %v1795
  %v1798 = vcosq.f32.pop %v1796
  %v1799 = vsinq.f32.pop %v1796
  %vm1800 = vweird.f32 %v1125
  %v1801 = vadd.s32 %v1797, 3
  %v1802 = vand.u32 %v1801, 3
  %vm1803 = vcmp.lt.s32.totalorder %v1802, 2
  %vm1804 = vcmp.eq.s32.totalorder %v1802, 0
  %v1805 = vxor.u32 %v1799, 2147483648
  %v1806 = vsel %vm1804, %v1798, %v1805
  %vm1807 = vcmp.eq.s32.totalorder %v1802, 2
  %v1808 = vxor.u32 %v1798, 2147483648
  %v1809 = vsel %vm1807, %v1808, %v1799
  %v1810 = vsel %vm1803, %v1806, %v1809
  %v1811 = vsel %vm1800, nan, %v1810
  %v1812 = vand.u32 2147483647, %v1131
  %vm1813 = vcmp.le.f32.partialorder %v1812, 0.7853982
  %vm1814 = vcmp.lt.s32.totalorder %v1131, 0
  %v1815 = vand.u32 %v1131, 2139095040
  %v1816 = vshrl.u32 %v1815, 23
  %v1817 = vsub.s32 %v1816, 127
  %v1818 = vand.u32 2147483647, %v1131
  %v1819 = vand.u32 %v1818, 8388607
  %v1820 = vor.u32 %v1819, 8388608
  %v1821 = vsub.s32 0, %v1820
  %v1822 = vadd.s32 %v1817, 1
  %vm1823 = vcmp.gt.s32.totalorder %v1822, 0
  %v1824 = vsel %vm1823, %v1822, 0
  %v1825 = vshrl.u32 %v1824, 5
  %v1826 = vand.u32 %v1824, 31
  %v1827 = vsub.s32 32, %v1826
  %v1828 = vshrl.u32 683565275, %v1827
  %v1829 = vshll.u32 683565275, %v1826
  %v1830 = vshrl.u32 2475754826, %v1827
  %v1831 = vor.u32 %v1829, %v1830
  %v1832 = vshll.u32 2475754826, %v1826
  %v1833 = vshrl.u32 2131351028, %v1827
  %v1834 = vor.u32 %v1832, %v1833
  %v1835 = vshll.u32 2131351028, %v1826
  %v1836 = vshrl.u32 2102212464, %v1827
  %v1837 = vor.u32 %v1835, %v1836
  %v1838 = vshll.u32 2102212464, %v1826
  %v1839 = vshrl.u32 920167782, %v1827
  %v1840 = vor.u32 %v1838, %v1839
  %v1841 = vshll.u32 920167782, %v1826
  %v1842 = vshrl.u32 1326507024, %v1827
  %v1843 = vor.u32 %v1841, %v1842
  %vm1844 = vcmp.lt.s32.totalorder %v1825, 1
  %vm1845 = vcmp.lt.s32.totalorder %v1825, 2
  %vm1846 = vcmp.lt.s32.totalorder %v1825, 3
  %vm1847 = vcmp.lt.s32.totalorder %v1825, 4
  %v1848 = vsel %vm1844, %v1828, %v1831
  %v1849 = vsel %vm1847, %v1837, 2102212464
  %v1850 = vsel %vm1846, %v1834, %v1849
  %v1851 = vsel %vm1845, %v1848, %v1850
  %v1852 = vsel %vm1844, %v1831, %v1834
  %v1853 = vsel %vm1847, %v1840, 920167782
  %v1854 = vsel %vm1846, %v1837, %v1853
  %v1855 = vsel %vm1845, %v1852, %v1854
  %v1856 = vsel %vm1844, %v1834, %v1837
  %v1857 = vsel %vm1847, %v1843, 1326507024
  %v1858 = vsel %vm1846, %v1840, %v1857
  %v1859 = vsel %vm1845, %v1856, %v1858
  %v1860 = vshll.u32 %v1820, 8
  %v1861 = vmul.u32.u64.compose %v1860, %v1859
  %v1862 = vextract.low.u32 %v1861
  %v1863 = vextract.high.u32 %v1861
  %v1864 = vmul.u32.u64.compose %v1860, %v1855
  %v1865 = vextract.low.u32 %v1864
  %v1866 = vextract.high.u32 %v1864
  %v1867 = vmul.u32 %v1860, %v1851
  %v1868 = vadd.s32 %v1863, %v1865
  %vm1869 = vc.u32 %v1863, %v1865
  %v1870 = vadd.s32 %v1866, 1
  %v1871 = vsel %vm1869, %v1870, %v1866
  %v1872 = vadd.s32 %v1867, %v1871
  %v1873 = vadd.s32 %v1872, 536870912
  %v1874 = vshrl.u32 %v1873, 30
  %v1875 = vshll.u32 %v1874, 30
  %v1876 = vsub.s32 %v1872, %v1875
  %vm1877 = vcmp.lt.s32.totalorder %v1876, 0
  %v1878 = vsub.s32 0, %v1876
  %v1879 = vsel %vm1877, %v1878, %v1876
  %v1880 = vclz %v1879
  %v1881 = vsub.s32 %v1880, 2
  %vm1882 = vcmp.gt.s32.totalorder 0, %v1881
  %v1883 = vsel %vm1882, 0, %v1881
  %v1884 = vsub.s32 32, %v1883
  %v1885 = vshll.u32 %v1876, %v1883
  %v1886 = vshrl.u32 %v1868, %v1884
  %v1887 = vor.u32 %v1885, %v1886
  %v1888 = vsub.s32 4294967266, %v1883
  %v1889 = vadd.s32 %v1888, 127
  %v1890 = vshll.u32 %v1889, 23
  %v1891 = vor.u32 4788187, %v1890
  %v1892 = vand.u32 2147483647, %v1891
  %v1894 = vcvt.s32.f32 %v1887
  %v1895 = vmul.f32 %v1894, %v1892
  %v1896 = vxor.u32 %v1895, 2147483648
  %v1897 = vsel %vm1814, %v1896, %v1895
  %v1898 = vsub.s32 4, %v1874
  %v1899 = vsel %vm1814, %v1898, %v1874
  %v1900 = vsel %vm1813, %v1131, %v1897
  %v1901 = vsel %vm1813, 0, %v1899
  %v1902 = vcosq.f32.pop %v1900
  %v1903 = vsinq.f32.pop %v1900
  %vm1904 = vweird.f32 %v1131
  %v1905 = vadd.s32 %v1901, 3
  %v1906 = vand.u32 %v1905, 3
  %vm1907 = vcmp.lt.s32.totalorder %v1906, 2
  %vm1908 = vcmp.eq.s32.totalorder %v1906, 0
  %v1909 = vxor.u32 %v1903, 2147483648
  %v1910 = vsel %vm1908, %v1902, %v1909
  %vm1911 = vcmp.eq.s32.totalorder %v1906, 2
  %v1912 = vxor.u32 %v1902, 2147483648
  %v1913 = vsel %vm1911, %v1912, %v1903
  %v1914 = vsel %vm1907, %v1910, %v1913
  %v1915 = vsel %vm1904, nan, %v1914
  %v1916 = vand.u32 2147483647, %v1137
  %vm1917 = vcmp.le.f32.partialorder %v1916, 0.7853982
  %vm1918 = vcmp.lt.s32.totalorder %v1137, 0
  %v1919 = vand.u32 %v1137, 2139095040
  %v1920 = vshrl.u32 %v1919, 23
  %v1921 = vsub.s32 %v1920, 127
  %v1922 = vand.u32 2147483647, %v1137
  %v1923 = vand.u32 %v1922, 8388607
  %v1924 = vor.u32 %v1923, 8388608
  %v1925 = vsub.s32 0, %v1924
  %v1926 = vadd.s32 %v1921, 1
  %vm1927 = vcmp.gt.s32.totalorder %v1926, 0
  %v1928 = vsel %vm1927, %v1926, 0
  %v1929 = vshrl.u32 %v1928, 5
  %v1930 = vand.u32 %v1928, 31
  %v1931 = vsub.s32 32, %v1930
  %v1932 = vshrl.u32 683565275, %v1931
  %v1933 = vshll.u32 683565275, %v1930
  %v1934 = vshrl.u32 2475754826, %v1931
  %v1935 = vor.u32 %v1933, %v1934
  %v1936 = vshll.u32 2475754826, %v1930
  %v1937 = vshrl.u32 2131351028, %v1931
  %v1938 = vor.u32 %v1936, %v1937
  %v1939 = vshll.u32 2131351028, %v1930
  %v1940 = vshrl.u32 2102212464, %v1931
  %v1941 = vor.u32 %v1939, %v1940
  %v1942 = vshll.u32 2102212464, %v1930
  %v1943 = vshrl.u32 920167782, %v1931
  %v1944 = vor.u32 %v1942, %v1943
  %v1945 = vshll.u32 920167782, %v1930
  %v1946 = vshrl.u32 1326507024, %v1931
  %v1947 = vor.u32 %v1945, %v1946
  %vm1948 = vcmp.lt.s32.totalorder %v1929, 1
  %vm1949 = vcmp.lt.s32.totalorder %v1929, 2
  %vm1950 = vcmp.lt.s32.totalorder %v1929, 3
  %vm1951 = vcmp.lt.s32.totalorder %v1929, 4
  %v1952 = vsel %vm1948, %v1932, %v1935
  %v1953 = vsel %vm1951, %v1941, 2102212464
  %v1954 = vsel %vm1950, %v1938, %v1953
  %v1955 = vsel %vm1949, %v1952, %v1954
  %v1956 = vsel %vm1948, %v1935, %v1938
  %v1957 = vsel %vm1951, %v1944, 920167782
  %v1958 = vsel %vm1950, %v1941, %v1957
  %v1959 = vsel %vm1949, %v1956, %v1958
  %v1960 = vsel %vm1948, %v1938, %v1941
  %v1961 = vsel %vm1951, %v1947, 1326507024
  %v1962 = vsel %vm1950, %v1944, %v1961
  %v1963 = vsel %vm1949, %v1960, %v1962
  %v1964 = vshll.u32 %v1924, 8
  %v1965 = vmul.u32.u64.compose %v1964, %v1963
  %v1966 = vextract.low.u32 %v1965
  %v1967 = vextract.high.u32 %v1965
  %v1968 = vmul.u32.u64.compose %v1964, %v1959
  %v1969 = vextract.low.u32 %v1968
  %v1970 = vextract.high.u32 %v1968
  %v1971 = vmul.u32 %v1964, %v1955
  %v1972 = vadd.s32 %v1967, %v1969
  %vm1973 = vc.u32 %v1967, %v1969
  %v1974 = vadd.s32 %v1970, 1
  %v1975 = vsel %vm1973, %v1974, %v1970
  %v1976 = vadd.s32 %v1971, %v1975
  %v1977 = vadd.s32 %v1976, 536870912
  %v1978 = vshrl.u32 %v1977, 30
  %v1979 = vshll.u32 %v1978, 30
  %v1980 = vsub.s32 %v1976, %v1979
  %vm1981 = vcmp.lt.s32.totalorder %v1980, 0
  %v1982 = vsub.s32 0, %v1980
  %v1983 = vsel %vm1981, %v1982, %v1980
  %v1984 = vclz %v1983
  %v1985 = vsub.s32 %v1984, 2
  %vm1986 = vcmp.gt.s32.totalorder 0, %v1985
  %v1987 = vsel %vm1986, 0, %v1985
  %v1988 = vsub.s32 32, %v1987
  %v1989 = vshll.u32 %v1980, %v1987
  %v1990 = vshrl.u32 %v1972, %v1988
  %v1991 = vor.u32 %v1989, %v1990
  %v1992 = vsub.s32 4294967266, %v1987
  %v1993 = vadd.s32 %v1992, 127
  %v1994 = vshll.u32 %v1993, 23
  %v1995 = vor.u32 4788187, %v1994
  %v1996 = vand.u32 2147483647, %v1995
  %v1998 = vcvt.s32.f32 %v1991
  %v1999 = vmul.f32 %v1998, %v1996
  %v2000 = vxor.u32 %v1999, 2147483648
  %v2001 = vsel %vm1918, %v2000, %v1999
  %v2002 = vsub.s32 4, %v1978
  %v2003 = vsel %vm1918, %v2002, %v1978
  %v2004 = vsel %vm1917, %v1137, %v2001
  %v2005 = vsel %vm1917, 0, %v2003
  %v2006 = vcosq.f32.pop %v2004
  %v2007 = vsinq.f32.pop %v2004
  %vm2008 = vweird.f32 %v1137
  %v2009 = vadd.s32 %v2005, 3
  %v2010 = vand.u32 %v2009, 3
  %vm2011 = vcmp.lt.s32.totalorder %v2010, 2
  %vm2012 = vcmp.eq.s32.totalorder %v2010, 0
  %v2013 = vxor.u32 %v2007, 2147483648
  %v2014 = vsel %vm2012, %v2006, %v2013
  %vm2015 = vcmp.eq.s32.totalorder %v2010, 2
  %v2016 = vxor.u32 %v2006, 2147483648
  %v2017 = vsel %vm2015, %v2016, %v2007
  %v2018 = vsel %vm2011, %v2014, %v2017
  %v2019 = vsel %vm2008, nan, %v2018
  %v2020 = vand.u32 2147483647, %v1143
  %vm2021 = vcmp.le.f32.partialorder %v2020, 0.7853982
  %vm2022 = vcmp.lt.s32.totalorder %v1143, 0
  %v2023 = vand.u32 %v1143, 2139095040
  %v2024 = vshrl.u32 %v2023, 23
  %v2025 = vsub.s32 %v2024, 127
  %v2026 = vand.u32 2147483647, %v1143
  %v2027 = vand.u32 %v2026, 8388607
  %v2028 = vor.u32 %v2027, 8388608
  %v2029 = vsub.s32 0, %v2028
  %v2030 = vadd.s32 %v2025, 1
  %vm2031 = vcmp.gt.s32.totalorder %v2030, 0
  %v2032 = vsel %vm2031, %v2030, 0
  %v2033 = vshrl.u32 %v2032, 5
  %v2034 = vand.u32 %v2032, 31
  %v2035 = vsub.s32 32, %v2034
  %v2036 = vshrl.u32 683565275, %v2035
  %v2037 = vshll.u32 683565275, %v2034
  %v2038 = vshrl.u32 2475754826, %v2035
  %v2039 = vor.u32 %v2037, %v2038
  %v2040 = vshll.u32 2475754826, %v2034
  %v2041 = vshrl.u32 2131351028, %v2035
  %v2042 = vor.u32 %v2040, %v2041
  %v2043 = vshll.u32 2131351028, %v2034
  %v2044 = vshrl.u32 2102212464, %v2035
  %v2045 = vor.u32 %v2043, %v2044
  %v2046 = vshll.u32 2102212464, %v2034
  %v2047 = vshrl.u32 920167782, %v2035
  %v2048 = vor.u32 %v2046, %v2047
  %v2049 = vshll.u32 920167782, %v2034
  %v2050 = vshrl.u32 1326507024, %v2035
  %v2051 = vor.u32 %v2049, %v2050
  %vm2052 = vcmp.lt.s32.totalorder %v2033, 1
  %vm2053 = vcmp.lt.s32.totalorder %v2033, 2
  %vm2054 = vcmp.lt.s32.totalorder %v2033, 3
  %vm2055 = vcmp.lt.s32.totalorder %v2033, 4
  %v2056 = vsel %vm2052, %v2036, %v2039
  %v2057 = vsel %vm2055, %v2045, 2102212464
  %v2058 = vsel %vm2054, %v2042, %v2057
  %v2059 = vsel %vm2053, %v2056, %v2058
  %v2060 = vsel %vm2052, %v2039, %v2042
  %v2061 = vsel %vm2055, %v2048, 920167782
  %v2062 = vsel %vm2054, %v2045, %v2061
  %v2063 = vsel %vm2053, %v2060, %v2062
  %v2064 = vsel %vm2052, %v2042, %v2045
  %v2065 = vsel %vm2055, %v2051, 1326507024
  %v2066 = vsel %vm2054, %v2048, %v2065
  %v2067 = vsel %vm2053, %v2064, %v2066
  %v2068 = vshll.u32 %v2028, 8
  %v2069 = vmul.u32.u64.compose %v2068, %v2067
  %v2070 = vextract.low.u32 %v2069
  %v2071 = vextract.high.u32 %v2069
  %v2072 = vmul.u32.u64.compose %v2068, %v2063
  %v2073 = vextract.low.u32 %v2072
  %v2074 = vextract.high.u32 %v2072
  %v2075 = vmul.u32 %v2068, %v2059
  %v2076 = vadd.s32 %v2071, %v2073
  %vm2077 = vc.u32 %v2071, %v2073
  %v2078 = vadd.s32 %v2074, 1
  %v2079 = vsel %vm2077, %v2078, %v2074
  %v2080 = vadd.s32 %v2075, %v2079
  %v2081 = vadd.s32 %v2080, 536870912
  %v2082 = vshrl.u32 %v2081, 30
  %v2083 = vshll.u32 %v2082, 30
  %v2084 = vsub.s32 %v2080, %v2083
  %vm2085 = vcmp.lt.s32.totalorder %v2084, 0
  %v2086 = vsub.s32 0, %v2084
  %v2087 = vsel %vm2085, %v2086, %v2084
  %v2088 = vclz %v2087
  %v2089 = vsub.s32 %v2088, 2
  %vm2090 = vcmp.gt.s32.totalorder 0, %v2089
  %v2091 = vsel %vm2090, 0, %v2089
  %v2092 = vsub.s32 32, %v2091
  %v2093 = vshll.u32 %v2084, %v2091
  %v2094 = vshrl.u32 %v2076, %v2092
  %v2095 = vor.u32 %v2093, %v2094
  %v2096 = vsub.s32 4294967266, %v2091
  %v2097 = vadd.s32 %v2096, 127
  %v2098 = vshll.u32 %v2097, 23
  %v2099 = vor.u32 4788187, %v2098
  %v2100 = vand.u32 2147483647, %v2099
  %v2102 = vcvt.s32.f32 %v2095
  %v2103 = vmul.f32 %v2102, %v2100
  %v2104 = vxor.u32 %v2103, 2147483648
  %v2105 = vsel %vm2022, %v2104, %v2103
  %v2106 = vsub.s32 4, %v2082
  %v2107 = vsel %vm2022, %v2106, %v2082
  %v2108 = vsel %vm2021, %v1143, %v2105
  %v2109 = vsel %vm2021, 0, %v2107
  %v2110 = vcosq.f32.pop %v2108
  %v2111 = vsinq.f32.pop %v2108
  %vm2112 = vweird.f32 %v1143
  %v2113 = vadd.s32 %v2109, 3
  %v2114 = vand.u32 %v2113, 3
  %vm2115 = vcmp.lt.s32.totalorder %v2114, 2
  %vm2116 = vcmp.eq.s32.totalorder %v2114, 0
  %v2117 = vxor.u32 %v2111, 2147483648
  %v2118 = vsel %vm2116, %v2110, %v2117
  %vm2119 = vcmp.eq.s32.totalorder %v2114, 2
  %v2120 = vxor.u32 %v2110, 2147483648
  %v2121 = vsel %vm2119, %v2120, %v2111
  %v2122 = vsel %vm2115, %v2118, %v2121
  %v2123 = vsel %vm2112, nan, %v2122
  %v2124 = vand.u32 2147483647, %v1149
  %vm2125 = vcmp.le.f32.partialorder %v2124, 0.7853982
  %vm2126 = vcmp.lt.s32.totalorder %v1149, 0
  %v2127 = vand.u32 %v1149, 2139095040
  %v2128 = vshrl.u32 %v2127, 23
  %v2129 = vsub.s32 %v2128, 127
  %v2130 = vand.u32 2147483647, %v1149
  %v2131 = vand.u32 %v2130, 8388607
  %v2132 = vor.u32 %v2131, 8388608
  %v2133 = vsub.s32 0, %v2132
  %v2134 = vadd.s32 %v2129, 1
  %vm2135 = vcmp.gt.s32.totalorder %v2134, 0
  %v2136 = vsel %vm2135, %v2134, 0
  %v2137 = vshrl.u32 %v2136, 5
  %v2138 = vand.u32 %v2136, 31
  %v2139 = vsub.s32 32, %v2138
  %v2140 = vshrl.u32 683565275, %v2139
  %v2141 = vshll.u32 683565275, %v2138
  %v2142 = vshrl.u32 2475754826, %v2139
  %v2143 = vor.u32 %v2141, %v2142
  %v2144 = vshll.u32 2475754826, %v2138
  %v2145 = vshrl.u32 2131351028, %v2139
  %v2146 = vor.u32 %v2144, %v2145
  %v2147 = vshll.u32 2131351028, %v2138
  %v2148 = vshrl.u32 2102212464, %v2139
  %v2149 = vor.u32 %v2147, %v2148
  %v2150 = vshll.u32 2102212464, %v2138
  %v2151 = vshrl.u32 920167782, %v2139
  %v2152 = vor.u32 %v2150, %v2151
  %v2153 = vshll.u32 920167782, %v2138
  %v2154 = vshrl.u32 1326507024, %v2139
  %v2155 = vor.u32 %v2153, %v2154
  %vm2156 = vcmp.lt.s32.totalorder %v2137, 1
  %vm2157 = vcmp.lt.s32.totalorder %v2137, 2
  %vm2158 = vcmp.lt.s32.totalorder %v2137, 3
  %vm2159 = vcmp.lt.s32.totalorder %v2137, 4
  %v2160 = vsel %vm2156, %v2140, %v2143
  %v2161 = vsel %vm2159, %v2149, 2102212464
  %v2162 = vsel %vm2158, %v2146, %v2161
  %v2163 = vsel %vm2157, %v2160, %v2162
  %v2164 = vsel %vm2156, %v2143, %v2146
  %v2165 = vsel %vm2159, %v2152, 920167782
  %v2166 = vsel %vm2158, %v2149, %v2165
  %v2167 = vsel %vm2157, %v2164, %v2166
  %v2168 = vsel %vm2156, %v2146, %v2149
  %v2169 = vsel %vm2159, %v2155, 1326507024
  %v2170 = vsel %vm2158, %v2152, %v2169
  %v2171 = vsel %vm2157, %v2168, %v2170
  %v2172 = vshll.u32 %v2132, 8
  %v2173 = vmul.u32.u64.compose %v2172, %v2171
  %v2174 = vextract.low.u32 %v2173
  %v2175 = vextract.high.u32 %v2173
  %v2176 = vmul.u32.u64.compose %v2172, %v2167
  %v2177 = vextract.low.u32 %v2176
  %v2178 = vextract.high.u32 %v2176
  %v2179 = vmul.u32 %v2172, %v2163
  %v2180 = vadd.s32 %v2175, %v2177
  %vm2181 = vc.u32 %v2175, %v2177
  %v2182 = vadd.s32 %v2178, 1
  %v2183 = vsel %vm2181, %v2182, %v2178
  %v2184 = vadd.s32 %v2179, %v2183
  %v2185 = vadd.s32 %v2184, 536870912
  %v2186 = vshrl.u32 %v2185, 30
  %v2187 = vshll.u32 %v2186, 30
  %v2188 = vsub.s32 %v2184, %v2187
  %vm2189 = vcmp.lt.s32.totalorder %v2188, 0
  %v2190 = vsub.s32 0, %v2188
  %v2191 = vsel %vm2189, %v2190, %v2188
  %v2192 = vclz %v2191
  %v2193 = vsub.s32 %v2192, 2
  %vm2194 = vcmp.gt.s32.totalorder 0, %v2193
  %v2195 = vsel %vm2194, 0, %v2193
  %v2196 = vsub.s32 32, %v2195
  %v2197 = vshll.u32 %v2188, %v2195
  %v2198 = vshrl.u32 %v2180, %v2196
  %v2199 = vor.u32 %v2197, %v2198
  %v2200 = vsub.s32 4294967266, %v2195
  %v2201 = vadd.s32 %v2200, 127
  %v2202 = vshll.u32 %v2201, 23
  %v2203 = vor.u32 4788187, %v2202
  %v2204 = vand.u32 2147483647, %v2203
  %v2206 = vcvt.s32.f32 %v2199
  %v2207 = vmul.f32 %v2206, %v2204
  %v2208 = vxor.u32 %v2207, 2147483648
  %v2209 = vsel %vm2126, %v2208, %v2207
  %v2210 = vsub.s32 4, %v2186
  %v2211 = vsel %vm2126, %v2210, %v2186
  %v2212 = vsel %vm2125, %v1149, %v2209
  %v2213 = vsel %vm2125, 0, %v2211
  %v2214 = vcosq.f32.pop %v2212
  %v2215 = vsinq.f32.pop %v2212
  %vm2216 = vweird.f32 %v1149
  %v2217 = vadd.s32 %v2213, 3
  %v2218 = vand.u32 %v2217, 3
  %vm2219 = vcmp.lt.s32.totalorder %v2218, 2
  %vm2220 = vcmp.eq.s32.totalorder %v2218, 0
  %v2221 = vxor.u32 %v2215, 2147483648
  %v2222 = vsel %vm2220, %v2214, %v2221
  %vm2223 = vcmp.eq.s32.totalorder %v2218, 2
  %v2224 = vxor.u32 %v2214, 2147483648
  %v2225 = vsel %vm2223, %v2224, %v2215
  %v2226 = vsel %vm2219, %v2222, %v2225
  %v2227 = vsel %vm2216, nan, %v2226
  %v2228 = vand.u32 2147483647, %v1155
  %vm2229 = vcmp.le.f32.partialorder %v2228, 0.7853982
  %vm2230 = vcmp.lt.s32.totalorder %v1155, 0
  %v2231 = vand.u32 %v1155, 2139095040
  %v2232 = vshrl.u32 %v2231, 23
  %v2233 = vsub.s32 %v2232, 127
  %v2234 = vand.u32 2147483647, %v1155
  %v2235 = vand.u32 %v2234, 8388607
  %v2236 = vor.u32 %v2235, 8388608
  %v2237 = vsub.s32 0, %v2236
  %v2238 = vadd.s32 %v2233, 1
  %vm2239 = vcmp.gt.s32.totalorder %v2238, 0
  %v2240 = vsel %vm2239, %v2238, 0
  %v2241 = vshrl.u32 %v2240, 5
  %v2242 = vand.u32 %v2240, 31
  %v2243 = vsub.s32 32, %v2242
  %v2244 = vshrl.u32 683565275, %v2243
  %v2245 = vshll.u32 683565275, %v2242
  %v2246 = vshrl.u32 2475754826, %v2243
  %v2247 = vor.u32 %v2245, %v2246
  %v2248 = vshll.u32 2475754826, %v2242
  %v2249 = vshrl.u32 2131351028, %v2243
  %v2250 = vor.u32 %v2248, %v2249
  %v2251 = vshll.u32 2131351028, %v2242
  %v2252 = vshrl.u32 2102212464, %v2243
  %v2253 = vor.u32 %v2251, %v2252
  %v2254 = vshll.u32 2102212464, %v2242
  %v2255 = vshrl.u32 920167782, %v2243
  %v2256 = vor.u32 %v2254, %v2255
  %v2257 = vshll.u32 920167782, %v2242
  %v2258 = vshrl.u32 1326507024, %v2243
  %v2259 = vor.u32 %v2257, %v2258
  %vm2260 = vcmp.lt.s32.totalorder %v2241, 1
  %vm2261 = vcmp.lt.s32.totalorder %v2241, 2
  %vm2262 = vcmp.lt.s32.totalorder %v2241, 3
  %vm2263 = vcmp.lt.s32.totalorder %v2241, 4
  %v2264 = vsel %vm2260, %v2244, %v2247
  %v2265 = vsel %vm2263, %v2253, 2102212464
  %v2266 = vsel %vm2262, %v2250, %v2265
  %v2267 = vsel %vm2261, %v2264, %v2266
  %v2268 = vsel %vm2260, %v2247, %v2250
  %v2269 = vsel %vm2263, %v2256, 920167782
  %v2270 = vsel %vm2262, %v2253, %v2269
  %v2271 = vsel %vm2261, %v2268, %v2270
  %v2272 = vsel %vm2260, %v2250, %v2253
  %v2273 = vsel %vm2263, %v2259, 1326507024
  %v2274 = vsel %vm2262, %v2256, %v2273
  %v2275 = vsel %vm2261, %v2272, %v2274
  %v2276 = vshll.u32 %v2236, 8
  %v2277 = vmul.u32.u64.compose %v2276, %v2275
  %v2278 = vextract.low.u32 %v2277
  %v2279 = vextract.high.u32 %v2277
  %v2280 = vmul.u32.u64.compose %v2276, %v2271
  %v2281 = vextract.low.u32 %v2280
  %v2282 = vextract.high.u32 %v2280
  %v2283 = vmul.u32 %v2276, %v2267
  %v2284 = vadd.s32 %v2279, %v2281
  %vm2285 = vc.u32 %v2279, %v2281
  %v2286 = vadd.s32 %v2282, 1
  %v2287 = vsel %vm2285, %v2286, %v2282
  %v2288 = vadd.s32 %v2283, %v2287
  %v2289 = vadd.s32 %v2288, 536870912
  %v2290 = vshrl.u32 %v2289, 30
  %v2291 = vshll.u32 %v2290, 30
  %v2292 = vsub.s32 %v2288, %v2291
  %vm2293 = vcmp.lt.s32.totalorder %v2292, 0
  %v2294 = vsub.s32 0, %v2292
  %v2295 = vsel %vm2293, %v2294, %v2292
  %v2296 = vclz %v2295
  %v2297 = vsub.s32 %v2296, 2
  %vm2298 = vcmp.gt.s32.totalorder 0, %v2297
  %v2299 = vsel %vm2298, 0, %v2297
  %v2300 = vsub.s32 32, %v2299
  %v2301 = vshll.u32 %v2292, %v2299
  %v2302 = vshrl.u32 %v2284, %v2300
  %v2303 = vor.u32 %v2301, %v2302
  %v2304 = vsub.s32 4294967266, %v2299
  %v2305 = vadd.s32 %v2304, 127
  %v2306 = vshll.u32 %v2305, 23
  %v2307 = vor.u32 4788187, %v2306
  %v2308 = vand.u32 2147483647, %v2307
  %v2310 = vcvt.s32.f32 %v2303
  %v2311 = vmul.f32 %v2310, %v2308
  %v2312 = vxor.u32 %v2311, 2147483648
  %v2313 = vsel %vm2230, %v2312, %v2311
  %v2314 = vsub.s32 4, %v2290
  %v2315 = vsel %vm2230, %v2314, %v2290
  %v2316 = vsel %vm2229, %v1155, %v2313
  %v2317 = vsel %vm2229, 0, %v2315
  %v2318 = vcosq.f32.pop %v2316
  %v2319 = vsinq.f32.pop %v2316
  %vm2320 = vweird.f32 %v1155
  %v2321 = vadd.s32 %v2317, 3
  %v2322 = vand.u32 %v2321, 3
  %vm2323 = vcmp.lt.s32.totalorder %v2322, 2
  %vm2324 = vcmp.eq.s32.totalorder %v2322, 0
  %v2325 = vxor.u32 %v2319, 2147483648
  %v2326 = vsel %vm2324, %v2318, %v2325
  %vm2327 = vcmp.eq.s32.totalorder %v2322, 2
  %v2328 = vxor.u32 %v2318, 2147483648
  %v2329 = vsel %vm2327, %v2328, %v2319
  %v2330 = vsel %vm2323, %v2326, %v2329
  %v2331 = vsel %vm2320, nan, %v2330
  %v2332 = vand.u32 2147483647, %v1161
  %vm2333 = vcmp.le.f32.partialorder %v2332, 0.7853982
  %vm2334 = vcmp.lt.s32.totalorder %v1161, 0
  %v2335 = vand.u32 %v1161, 2139095040
  %v2336 = vshrl.u32 %v2335, 23
  %v2337 = vsub.s32 %v2336, 127
  %v2338 = vand.u32 2147483647, %v1161
  %v2339 = vand.u32 %v2338, 8388607
  %v2340 = vor.u32 %v2339, 8388608
  %v2341 = vsub.s32 0, %v2340
  %v2342 = vadd.s32 %v2337, 1
  %vm2343 = vcmp.gt.s32.totalorder %v2342, 0
  %v2344 = vsel %vm2343, %v2342, 0
  %v2345 = vshrl.u32 %v2344, 5
  %v2346 = vand.u32 %v2344, 31
  %v2347 = vsub.s32 32, %v2346
  %v2348 = vshrl.u32 683565275, %v2347
  %v2349 = vshll.u32 683565275, %v2346
  %v2350 = vshrl.u32 2475754826, %v2347
  %v2351 = vor.u32 %v2349, %v2350
  %v2352 = vshll.u32 2475754826, %v2346
  %v2353 = vshrl.u32 2131351028, %v2347
  %v2354 = vor.u32 %v2352, %v2353
  %v2355 = vshll.u32 2131351028, %v2346
  %v2356 = vshrl.u32 2102212464, %v2347
  %v2357 = vor.u32 %v2355, %v2356
  %v2358 = vshll.u32 2102212464, %v2346
  %v2359 = vshrl.u32 920167782, %v2347
  %v2360 = vor.u32 %v2358, %v2359
  %v2361 = vshll.u32 920167782, %v2346
  %v2362 = vshrl.u32 1326507024, %v2347
  %v2363 = vor.u32 %v2361, %v2362
  %vm2364 = vcmp.lt.s32.totalorder %v2345, 1
  %vm2365 = vcmp.lt.s32.totalorder %v2345, 2
  %vm2366 = vcmp.lt.s32.totalorder %v2345, 3
  %vm2367 = vcmp.lt.s32.totalorder %v2345, 4
  %v2368 = vsel %vm2364, %v2348, %v2351
  %v2369 = vsel %vm2367, %v2357, 2102212464
  %v2370 = vsel %vm2366, %v2354, %v2369
  %v2371 = vsel %vm2365, %v2368, %v2370
  %v2372 = vsel %vm2364, %v2351, %v2354
  %v2373 = vsel %vm2367, %v2360, 920167782
  %v2374 = vsel %vm2366, %v2357, %v2373
  %v2375 = vsel %vm2365, %v2372, %v2374
  %v2376 = vsel %vm2364, %v2354, %v2357
  %v2377 = vsel %vm2367, %v2363, 1326507024
  %v2378 = vsel %vm2366, %v2360, %v2377
  %v2379 = vsel %vm2365, %v2376, %v2378
  %v2380 = vshll.u32 %v2340, 8
  %v2381 = vmul.u32.u64.compose %v2380, %v2379
  %v2382 = vextract.low.u32 %v2381
  %v2383 = vextract.high.u32 %v2381
  %v2384 = vmul.u32.u64.compose %v2380, %v2375
  %v2385 = vextract.low.u32 %v2384
  %v2386 = vextract.high.u32 %v2384
  %v2387 = vmul.u32 %v2380, %v2371
  %v2388 = vadd.s32 %v2383, %v2385
  %vm2389 = vc.u32 %v2383, %v2385
  %v2390 = vadd.s32 %v2386, 1
  %v2391 = vsel %vm2389, %v2390, %v2386
  %v2392 = vadd.s32 %v2387, %v2391
  %v2393 = vadd.s32 %v2392, 536870912
  %v2394 = vshrl.u32 %v2393, 30
  %v2395 = vshll.u32 %v2394, 30
  %v2396 = vsub.s32 %v2392, %v2395
  %vm2397 = vcmp.lt.s32.totalorder %v2396, 0
  %v2398 = vsub.s32 0, %v2396
  %v2399 = vsel %vm2397, %v2398, %v2396
  %v2400 = vclz %v2399
  %v2401 = vsub.s32 %v2400, 2
  %vm2402 = vcmp.gt.s32.totalorder 0, %v2401
  %v2403 = vsel %vm2402, 0, %v2401
  %v2404 = vsub.s32 32, %v2403
  %v2405 = vshll.u32 %v2396, %v2403
  %v2406 = vshrl.u32 %v2388, %v2404
  %v2407 = vor.u32 %v2405, %v2406
  %v2408 = vsub.s32 4294967266, %v2403
  %v2409 = vadd.s32 %v2408, 127
  %v2410 = vshll.u32 %v2409, 23
  %v2411 = vor.u32 4788187, %v2410
  %v2412 = vand.u32 2147483647, %v2411
  %v2414 = vcvt.s32.f32 %v2407
  %v2415 = vmul.f32 %v2414, %v2412
  %v2416 = vxor.u32 %v2415, 2147483648
  %v2417 = vsel %vm2334, %v2416, %v2415
  %v2418 = vsub.s32 4, %v2394
  %v2419 = vsel %vm2334, %v2418, %v2394
  %v2420 = vsel %vm2333, %v1161, %v2417
  %v2421 = vsel %vm2333, 0, %v2419
  %v2422 = vcosq.f32.pop %v2420
  %v2423 = vsinq.f32.pop %v2420
  %vm2424 = vweird.f32 %v1161
  %v2425 = vadd.s32 %v2421, 3
  %v2426 = vand.u32 %v2425, 3
  %vm2427 = vcmp.lt.s32.totalorder %v2426, 2
  %vm2428 = vcmp.eq.s32.totalorder %v2426, 0
  %v2429 = vxor.u32 %v2423, 2147483648
  %v2430 = vsel %vm2428, %v2422, %v2429
  %vm2431 = vcmp.eq.s32.totalorder %v2426, 2
  %v2432 = vxor.u32 %v2422, 2147483648
  %v2433 = vsel %vm2431, %v2432, %v2423
  %v2434 = vsel %vm2427, %v2430, %v2433
  %v2435 = vsel %vm2424, nan, %v2434
  %v2436 = vand.u32 2147483647, %v1167
  %vm2437 = vcmp.le.f32.partialorder %v2436, 0.7853982
  %vm2438 = vcmp.lt.s32.totalorder %v1167, 0
  %v2439 = vand.u32 %v1167, 2139095040
  %v2440 = vshrl.u32 %v2439, 23
  %v2441 = vsub.s32 %v2440, 127
  %v2442 = vand.u32 2147483647, %v1167
  %v2443 = vand.u32 %v2442, 8388607
  %v2444 = vor.u32 %v2443, 8388608
  %v2445 = vsub.s32 0, %v2444
  %v2446 = vadd.s32 %v2441, 1
  %vm2447 = vcmp.gt.s32.totalorder %v2446, 0
  %v2448 = vsel %vm2447, %v2446, 0
  %v2449 = vshrl.u32 %v2448, 5
  %v2450 = vand.u32 %v2448, 31
  %v2451 = vsub.s32 32, %v2450
  %v2452 = vshrl.u32 683565275, %v2451
  %v2453 = vshll.u32 683565275, %v2450
  %v2454 = vshrl.u32 2475754826, %v2451
  %v2455 = vor.u32 %v2453, %v2454
  %v2456 = vshll.u32 2475754826, %v2450
  %v2457 = vshrl.u32 2131351028, %v2451
  %v2458 = vor.u32 %v2456, %v2457
  %v2459 = vshll.u32 2131351028, %v2450
  %v2460 = vshrl.u32 2102212464, %v2451
  %v2461 = vor.u32 %v2459, %v2460
  %v2462 = vshll.u32 2102212464, %v2450
  %v2463 = vshrl.u32 920167782, %v2451
  %v2464 = vor.u32 %v2462, %v2463
  %v2465 = vshll.u32 920167782, %v2450
  %v2466 = vshrl.u32 1326507024, %v2451
  %v2467 = vor.u32 %v2465, %v2466
  %vm2468 = vcmp.lt.s32.totalorder %v2449, 1
  %vm2469 = vcmp.lt.s32.totalorder %v2449, 2
  %vm2470 = vcmp.lt.s32.totalorder %v2449, 3
  %vm2471 = vcmp.lt.s32.totalorder %v2449, 4
  %v2472 = vsel %vm2468, %v2452, %v2455
  %v2473 = vsel %vm2471, %v2461, 2102212464
  %v2474 = vsel %vm2470, %v2458, %v2473
  %v2475 = vsel %vm2469, %v2472, %v2474
  %v2476 = vsel %vm2468, %v2455, %v2458
  %v2477 = vsel %vm2471, %v2464, 920167782
  %v2478 = vsel %vm2470, %v2461, %v2477
  %v2479 = vsel %vm2469, %v2476, %v2478
  %v2480 = vsel %vm2468, %v2458, %v2461
  %v2481 = vsel %vm2471, %v2467, 1326507024
  %v2482 = vsel %vm2470, %v2464, %v2481
  %v2483 = vsel %vm2469, %v2480, %v2482
  %v2484 = vshll.u32 %v2444, 8
  %v2485 = vmul.u32.u64.compose %v2484, %v2483
  %v2486 = vextract.low.u32 %v2485
  %v2487 = vextract.high.u32 %v2485
  %v2488 = vmul.u32.u64.compose %v2484, %v2479
  %v2489 = vextract.low.u32 %v2488
  %v2490 = vextract.high.u32 %v2488
  %v2491 = vmul.u32 %v2484, %v2475
  %v2492 = vadd.s32 %v2487, %v2489
  %vm2493 = vc.u32 %v2487, %v2489
  %v2494 = vadd.s32 %v2490, 1
  %v2495 = vsel %vm2493, %v2494, %v2490
  %v2496 = vadd.s32 %v2491, %v2495
  %v2497 = vadd.s32 %v2496, 536870912
  %v2498 = vshrl.u32 %v2497, 30
  %v2499 = vshll.u32 %v2498, 30
  %v2500 = vsub.s32 %v2496, %v2499
  %vm2501 = vcmp.lt.s32.totalorder %v2500, 0
  %v2502 = vsub.s32 0, %v2500
  %v2503 = vsel %vm2501, %v2502, %v2500
  %v2504 = vclz %v2503
  %v2505 = vsub.s32 %v2504, 2
  %vm2506 = vcmp.gt.s32.totalorder 0, %v2505
  %v2507 = vsel %vm2506, 0, %v2505
  %v2508 = vsub.s32 32, %v2507
  %v2509 = vshll.u32 %v2500, %v2507
  %v2510 = vshrl.u32 %v2492, %v2508
  %v2511 = vor.u32 %v2509, %v2510
  %v2512 = vsub.s32 4294967266, %v2507
  %v2513 = vadd.s32 %v2512, 127
  %v2514 = vshll.u32 %v2513, 23
  %v2515 = vor.u32 4788187, %v2514
  %v2516 = vand.u32 2147483647, %v2515
  %v2518 = vcvt.s32.f32 %v2511
  %v2519 = vmul.f32 %v2518, %v2516
  %v2520 = vxor.u32 %v2519, 2147483648
  %v2521 = vsel %vm2438, %v2520, %v2519
  %v2522 = vsub.s32 4, %v2498
  %v2523 = vsel %vm2438, %v2522, %v2498
  %v2524 = vsel %vm2437, %v1167, %v2521
  %v2525 = vsel %vm2437, 0, %v2523
  %v2526 = vcosq.f32.pop %v2524
  %v2527 = vsinq.f32.pop %v2524
  %vm2528 = vweird.f32 %v1167
  %v2529 = vadd.s32 %v2525, 3
  %v2530 = vand.u32 %v2529, 3
  %vm2531 = vcmp.lt.s32.totalorder %v2530, 2
  %vm2532 = vcmp.eq.s32.totalorder %v2530, 0
  %v2533 = vxor.u32 %v2527, 2147483648
  %v2534 = vsel %vm2532, %v2526, %v2533
  %vm2535 = vcmp.eq.s32.totalorder %v2530, 2
  %v2536 = vxor.u32 %v2526, 2147483648
  %v2537 = vsel %vm2535, %v2536, %v2527
  %v2538 = vsel %vm2531, %v2534, %v2537
  %v2539 = vsel %vm2528, nan, %v2538
  %v2540 = vand.u32 2147483647, %v1173
  %vm2541 = vcmp.le.f32.partialorder %v2540, 0.7853982
  %vm2542 = vcmp.lt.s32.totalorder %v1173, 0
  %v2543 = vand.u32 %v1173, 2139095040
  %v2544 = vshrl.u32 %v2543, 23
  %v2545 = vsub.s32 %v2544, 127
  %v2546 = vand.u32 2147483647, %v1173
  %v2547 = vand.u32 %v2546, 8388607
  %v2548 = vor.u32 %v2547, 8388608
  %v2549 = vsub.s32 0, %v2548
  %v2550 = vadd.s32 %v2545, 1
  %vm2551 = vcmp.gt.s32.totalorder %v2550, 0
  %v2552 = vsel %vm2551, %v2550, 0
  %v2553 = vshrl.u32 %v2552, 5
  %v2554 = vand.u32 %v2552, 31
  %v2555 = vsub.s32 32, %v2554
  %v2556 = vshrl.u32 683565275, %v2555
  %v2557 = vshll.u32 683565275, %v2554
  %v2558 = vshrl.u32 2475754826, %v2555
  %v2559 = vor.u32 %v2557, %v2558
  %v2560 = vshll.u32 2475754826, %v2554
  %v2561 = vshrl.u32 2131351028, %v2555
  %v2562 = vor.u32 %v2560, %v2561
  %v2563 = vshll.u32 2131351028, %v2554
  %v2564 = vshrl.u32 2102212464, %v2555
  %v2565 = vor.u32 %v2563, %v2564
  %v2566 = vshll.u32 2102212464, %v2554
  %v2567 = vshrl.u32 920167782, %v2555
  %v2568 = vor.u32 %v2566, %v2567
  %v2569 = vshll.u32 920167782, %v2554
  %v2570 = vshrl.u32 1326507024, %v2555
  %v2571 = vor.u32 %v2569, %v2570
  %vm2572 = vcmp.lt.s32.totalorder %v2553, 1
  %vm2573 = vcmp.lt.s32.totalorder %v2553, 2
  %vm2574 = vcmp.lt.s32.totalorder %v2553, 3
  %vm2575 = vcmp.lt.s32.totalorder %v2553, 4
  %v2576 = vsel %vm2572, %v2556, %v2559
  %v2577 = vsel %vm2575, %v2565, 2102212464
  %v2578 = vsel %vm2574, %v2562, %v2577
  %v2579 = vsel %vm2573, %v2576, %v2578
  %v2580 = vsel %vm2572, %v2559, %v2562
  %v2581 = vsel %vm2575, %v2568, 920167782
  %v2582 = vsel %vm2574, %v2565, %v2581
  %v2583 = vsel %vm2573, %v2580, %v2582
  %v2584 = vsel %vm2572, %v2562, %v2565
  %v2585 = vsel %vm2575, %v2571, 1326507024
  %v2586 = vsel %vm2574, %v2568, %v2585
  %v2587 = vsel %vm2573, %v2584, %v2586
  %v2588 = vshll.u32 %v2548, 8
  %v2589 = vmul.u32.u64.compose %v2588, %v2587
  %v2590 = vextract.low.u32 %v2589
  %v2591 = vextract.high.u32 %v2589
  %v2592 = vmul.u32.u64.compose %v2588, %v2583
  %v2593 = vextract.low.u32 %v2592
  %v2594 = vextract.high.u32 %v2592
  %v2595 = vmul.u32 %v2588, %v2579
  %v2596 = vadd.s32 %v2591, %v2593
  %vm2597 = vc.u32 %v2591, %v2593
  %v2598 = vadd.s32 %v2594, 1
  %v2599 = vsel %vm2597, %v2598, %v2594
  %v2600 = vadd.s32 %v2595, %v2599
  %v2601 = vadd.s32 %v2600, 536870912
  %v2602 = vshrl.u32 %v2601, 30
  %v2603 = vshll.u32 %v2602, 30
  %v2604 = vsub.s32 %v2600, %v2603
  %vm2605 = vcmp.lt.s32.totalorder %v2604, 0
  %v2606 = vsub.s32 0, %v2604
  %v2607 = vsel %vm2605, %v2606, %v2604
  %v2608 = vclz %v2607
  %v2609 = vsub.s32 %v2608, 2
  %vm2610 = vcmp.gt.s32.totalorder 0, %v2609
  %v2611 = vsel %vm2610, 0, %v2609
  %v2612 = vsub.s32 32, %v2611
  %v2613 = vshll.u32 %v2604, %v2611
  %v2614 = vshrl.u32 %v2596, %v2612
  %v2615 = vor.u32 %v2613, %v2614
  %v2616 = vsub.s32 4294967266, %v2611
  %v2617 = vadd.s32 %v2616, 127
  %v2618 = vshll.u32 %v2617, 23
  %v2619 = vor.u32 4788187, %v2618
  %v2620 = vand.u32 2147483647, %v2619
  %v2622 = vcvt.s32.f32 %v2615
  %v2623 = vmul.f32 %v2622, %v2620
  %v2624 = vxor.u32 %v2623, 2147483648
  %v2625 = vsel %vm2542, %v2624, %v2623
  %v2626 = vsub.s32 4, %v2602
  %v2627 = vsel %vm2542, %v2626, %v2602
  %v2628 = vsel %vm2541, %v1173, %v2625
  %v2629 = vsel %vm2541, 0, %v2627
  %v2630 = vcosq.f32.pop %v2628
  %v2631 = vsinq.f32.pop %v2628
  %vm2632 = vweird.f32 %v1173
  %v2633 = vadd.s32 %v2629, 3
  %v2634 = vand.u32 %v2633, 3
  %vm2635 = vcmp.lt.s32.totalorder %v2634, 2
  %vm2636 = vcmp.eq.s32.totalorder %v2634, 0
  %v2637 = vxor.u32 %v2631, 2147483648
  %v2638 = vsel %vm2636, %v2630, %v2637
  %vm2639 = vcmp.eq.s32.totalorder %v2634, 2
  %v2640 = vxor.u32 %v2630, 2147483648
  %v2641 = vsel %vm2639, %v2640, %v2631
  %v2642 = vsel %vm2635, %v2638, %v2641
  %v2643 = vsel %vm2632, nan, %v2642
  %v2644 = vand.u32 2147483647, %v1179
  %vm2645 = vcmp.le.f32.partialorder %v2644, 0.7853982
  %vm2646 = vcmp.lt.s32.totalorder %v1179, 0
  %v2647 = vand.u32 %v1179, 2139095040
  %v2648 = vshrl.u32 %v2647, 23
  %v2649 = vsub.s32 %v2648, 127
  %v2650 = vand.u32 2147483647, %v1179
  %v2651 = vand.u32 %v2650, 8388607
  %v2652 = vor.u32 %v2651, 8388608
  %v2653 = vsub.s32 0, %v2652
  %v2654 = vadd.s32 %v2649, 1
  %vm2655 = vcmp.gt.s32.totalorder %v2654, 0
  %v2656 = vsel %vm2655, %v2654, 0
  %v2657 = vshrl.u32 %v2656, 5
  %v2658 = vand.u32 %v2656, 31
  %v2659 = vsub.s32 32, %v2658
  %v2660 = vshrl.u32 683565275, %v2659
  %v2661 = vshll.u32 683565275, %v2658
  %v2662 = vshrl.u32 2475754826, %v2659
  %v2663 = vor.u32 %v2661, %v2662
  %v2664 = vshll.u32 2475754826, %v2658
  %v2665 = vshrl.u32 2131351028, %v2659
  %v2666 = vor.u32 %v2664, %v2665
  %v2667 = vshll.u32 2131351028, %v2658
  %v2668 = vshrl.u32 2102212464, %v2659
  %v2669 = vor.u32 %v2667, %v2668
  %v2670 = vshll.u32 2102212464, %v2658
  %v2671 = vshrl.u32 920167782, %v2659
  %v2672 = vor.u32 %v2670, %v2671
  %v2673 = vshll.u32 920167782, %v2658
  %v2674 = vshrl.u32 1326507024, %v2659
  %v2675 = vor.u32 %v2673, %v2674
  %vm2676 = vcmp.lt.s32.totalorder %v2657, 1
  %vm2677 = vcmp.lt.s32.totalorder %v2657, 2
  %vm2678 = vcmp.lt.s32.totalorder %v2657, 3
  %vm2679 = vcmp.lt.s32.totalorder %v2657, 4
  %v2680 = vsel %vm2676, %v2660, %v2663
  %v2681 = vsel %vm2679, %v2669, 2102212464
  %v2682 = vsel %vm2678, %v2666, %v2681
  %v2683 = vsel %vm2677, %v2680, %v2682
  %v2684 = vsel %vm2676, %v2663, %v2666
  %v2685 = vsel %vm2679, %v2672, 920167782
  %v2686 = vsel %vm2678, %v2669, %v2685
  %v2687 = vsel %vm2677, %v2684, %v2686
  %v2688 = vsel %vm2676, %v2666, %v2669
  %v2689 = vsel %vm2679, %v2675, 1326507024
  %v2690 = vsel %vm2678, %v2672, %v2689
  %v2691 = vsel %vm2677, %v2688, %v2690
  %v2692 = vshll.u32 %v2652, 8
  %v2693 = vmul.u32.u64.compose %v2692, %v2691
  %v2694 = vextract.low.u32 %v2693
  %v2695 = vextract.high.u32 %v2693
  %v2696 = vmul.u32.u64.compose %v2692, %v2687
  %v2697 = vextract.low.u32 %v2696
  %v2698 = vextract.high.u32 %v2696
  %v2699 = vmul.u32 %v2692, %v2683
  %v2700 = vadd.s32 %v2695, %v2697
  %vm2701 = vc.u32 %v2695, %v2697
  %v2702 = vadd.s32 %v2698, 1
  %v2703 = vsel %vm2701, %v2702, %v2698
  %v2704 = vadd.s32 %v2699, %v2703
  %v2705 = vadd.s32 %v2704, 536870912
  %v2706 = vshrl.u32 %v2705, 30
  %v2707 = vshll.u32 %v2706, 30
  %v2708 = vsub.s32 %v2704, %v2707
  %vm2709 = vcmp.lt.s32.totalorder %v2708, 0
  %v2710 = vsub.s32 0, %v2708
  %v2711 = vsel %vm2709, %v2710, %v2708
  %v2712 = vclz %v2711
  %v2713 = vsub.s32 %v2712, 2
  %vm2714 = vcmp.gt.s32.totalorder 0, %v2713
  %v2715 = vsel %vm2714, 0, %v2713
  %v2716 = vsub.s32 32, %v2715
  %v2717 = vshll.u32 %v2708, %v2715
  %v2718 = vshrl.u32 %v2700, %v2716
  %v2719 = vor.u32 %v2717, %v2718
  %v2720 = vsub.s32 4294967266, %v2715
  %v2721 = vadd.s32 %v2720, 127
  %v2722 = vshll.u32 %v2721, 23
  %v2723 = vor.u32 4788187, %v2722
  %v2724 = vand.u32 2147483647, %v2723
  %v2726 = vcvt.s32.f32 %v2719
  %v2727 = vmul.f32 %v2726, %v2724
  %v2728 = vxor.u32 %v2727, 2147483648
  %v2729 = vsel %vm2646, %v2728, %v2727
  %v2730 = vsub.s32 4, %v2706
  %v2731 = vsel %vm2646, %v2730, %v2706
  %v2732 = vsel %vm2645, %v1179, %v2729
  %v2733 = vsel %vm2645, 0, %v2731
  %v2734 = vcosq.f32.pop %v2732
  %v2735 = vsinq.f32.pop %v2732
  %vm2736 = vweird.f32 %v1179
  %v2737 = vadd.s32 %v2733, 3
  %v2738 = vand.u32 %v2737, 3
  %vm2739 = vcmp.lt.s32.totalorder %v2738, 2
  %vm2740 = vcmp.eq.s32.totalorder %v2738, 0
  %v2741 = vxor.u32 %v2735, 2147483648
  %v2742 = vsel %vm2740, %v2734, %v2741
  %vm2743 = vcmp.eq.s32.totalorder %v2738, 2
  %v2744 = vxor.u32 %v2734, 2147483648
  %v2745 = vsel %vm2743, %v2744, %v2735
  %v2746 = vsel %vm2739, %v2742, %v2745
  %v2747 = vsel %vm2736, nan, %v2746
  %v2748 = vand.u32 2147483647, %v1185
  %vm2749 = vcmp.le.f32.partialorder %v2748, 0.7853982
  %vm2750 = vcmp.lt.s32.totalorder %v1185, 0
  %v2751 = vand.u32 %v1185, 2139095040
  %v2752 = vshrl.u32 %v2751, 23
  %v2753 = vsub.s32 %v2752, 127
  %v2754 = vand.u32 2147483647, %v1185
  %v2755 = vand.u32 %v2754, 8388607
  %v2756 = vor.u32 %v2755, 8388608
  %v2757 = vsub.s32 0, %v2756
  %v2758 = vadd.s32 %v2753, 1
  %vm2759 = vcmp.gt.s32.totalorder %v2758, 0
  %v2760 = vsel %vm2759, %v2758, 0
  %v2761 = vshrl.u32 %v2760, 5
  %v2762 = vand.u32 %v2760, 31
  %v2763 = vsub.s32 32, %v2762
  %v2764 = vshrl.u32 683565275, %v2763
  %v2765 = vshll.u32 683565275, %v2762
  %v2766 = vshrl.u32 2475754826, %v2763
  %v2767 = vor.u32 %v2765, %v2766
  %v2768 = vshll.u32 2475754826, %v2762
  %v2769 = vshrl.u32 2131351028, %v2763
  %v2770 = vor.u32 %v2768, %v2769
  %v2771 = vshll.u32 2131351028, %v2762
  %v2772 = vshrl.u32 2102212464, %v2763
  %v2773 = vor.u32 %v2771, %v2772
  %v2774 = vshll.u32 2102212464, %v2762
  %v2775 = vshrl.u32 920167782, %v2763
  %v2776 = vor.u32 %v2774, %v2775
  %v2777 = vshll.u32 920167782, %v2762
  %v2778 = vshrl.u32 1326507024, %v2763
  %v2779 = vor.u32 %v2777, %v2778
  %vm2780 = vcmp.lt.s32.totalorder %v2761, 1
  %vm2781 = vcmp.lt.s32.totalorder %v2761, 2
  %vm2782 = vcmp.lt.s32.totalorder %v2761, 3
  %vm2783 = vcmp.lt.s32.totalorder %v2761, 4
  %v2784 = vsel %vm2780, %v2764, %v2767
  %v2785 = vsel %vm2783, %v2773, 2102212464
  %v2786 = vsel %vm2782, %v2770, %v2785
  %v2787 = vsel %vm2781, %v2784, %v2786
  %v2788 = vsel %vm2780, %v2767, %v2770
  %v2789 = vsel %vm2783, %v2776, 920167782
  %v2790 = vsel %vm2782, %v2773, %v2789
  %v2791 = vsel %vm2781, %v2788, %v2790
  %v2792 = vsel %vm2780, %v2770, %v2773
  %v2793 = vsel %vm2783, %v2779, 1326507024
  %v2794 = vsel %vm2782, %v2776, %v2793
  %v2795 = vsel %vm2781, %v2792, %v2794
  %v2796 = vshll.u32 %v2756, 8
  %v2797 = vmul.u32.u64.compose %v2796, %v2795
  %v2798 = vextract.low.u32 %v2797
  %v2799 = vextract.high.u32 %v2797
  %v2800 = vmul.u32.u64.compose %v2796, %v2791
  %v2801 = vextract.low.u32 %v2800
  %v2802 = vextract.high.u32 %v2800
  %v2803 = vmul.u32 %v2796, %v2787
  %v2804 = vadd.s32 %v2799, %v2801
  %vm2805 = vc.u32 %v2799, %v2801
  %v2806 = vadd.s32 %v2802, 1
  %v2807 = vsel %vm2805, %v2806, %v2802
  %v2808 = vadd.s32 %v2803, %v2807
  %v2809 = vadd.s32 %v2808, 536870912
  %v2810 = vshrl.u32 %v2809, 30
  %v2811 = vshll.u32 %v2810, 30
  %v2812 = vsub.s32 %v2808, %v2811
  %vm2813 = vcmp.lt.s32.totalorder %v2812, 0
  %v2814 = vsub.s32 0, %v2812
  %v2815 = vsel %vm2813, %v2814, %v2812
  %v2816 = vclz %v2815
  %v2817 = vsub.s32 %v2816, 2
  %vm2818 = vcmp.gt.s32.totalorder 0, %v2817
  %v2819 = vsel %vm2818, 0, %v2817
  %v2820 = vsub.s32 32, %v2819
  %v2821 = vshll.u32 %v2812, %v2819
  %v2822 = vshrl.u32 %v2804, %v2820
  %v2823 = vor.u32 %v2821, %v2822
  %v2824 = vsub.s32 4294967266, %v2819
  %v2825 = vadd.s32 %v2824, 127
  %v2826 = vshll.u32 %v2825, 23
  %v2827 = vor.u32 4788187, %v2826
  %v2828 = vand.u32 2147483647, %v2827
  %v2830 = vcvt.s32.f32 %v2823
  %v2831 = vmul.f32 %v2830, %v2828
  %v2832 = vxor.u32 %v2831, 2147483648
  %v2833 = vsel %vm2750, %v2832, %v2831
  %v2834 = vsub.s32 4, %v2810
  %v2835 = vsel %vm2750, %v2834, %v2810
  %v2836 = vsel %vm2749, %v1185, %v2833
  %v2837 = vsel %vm2749, 0, %v2835
  %v2838 = vcosq.f32.pop %v2836
  %v2839 = vsinq.f32.pop %v2836
  %vm2840 = vweird.f32 %v1185
  %v2841 = vadd.s32 %v2837, 3
  %v2842 = vand.u32 %v2841, 3
  %vm2843 = vcmp.lt.s32.totalorder %v2842, 2
  %vm2844 = vcmp.eq.s32.totalorder %v2842, 0
  %v2845 = vxor.u32 %v2839, 2147483648
  %v2846 = vsel %vm2844, %v2838, %v2845
  %vm2847 = vcmp.eq.s32.totalorder %v2842, 2
  %v2848 = vxor.u32 %v2838, 2147483648
  %v2849 = vsel %vm2847, %v2848, %v2839
  %v2850 = vsel %vm2843, %v2846, %v2849
  %v2851 = vsel %vm2840, nan, %v2850
  %v2852 = vld [vmem:[%s2] sm:$0xff]
  %v2853 = vld [vmem:[%s2 + $0x8] sm:$0xff]
  %v2854 = vld [vmem:[%s2 + $0x10] sm:$0xff]
  %v2855 = vld [vmem:[%s2 + $0x18] sm:$0xff]
  %v2856 = vld [vmem:[%s2 + $0x20] sm:$0xff]
  %v2857 = vld [vmem:[%s2 + $0x28] sm:$0xff]
  %v2858 = vld [vmem:[%s2 + $0x30] sm:$0xff]
  %v2859 = vld [vmem:[%s2 + $0x38] sm:$0xff]
  %v2860 = vld [vmem:[%s2 + $0x40] sm:$0xff]
  %v2861 = vld [vmem:[%s2 + $0x48] sm:$0xff]
  %v2862 = vld [vmem:[%s2 + $0x50] sm:$0xff]
  %v2863 = vld [vmem:[%s2 + $0x58] sm:$0xff]
  %v2864 = vld [vmem:[%s2 + $0x60] sm:$0xff]
  %v2865 = vld [vmem:[%s2 + $0x68] sm:$0xff]
  %v2866 = vld [vmem:[%s2 + $0x70] sm:$0xff]
  %v2867 = vld [vmem:[%s2 + $0x78] sm:$0xff]
  %2884 = vrot.lane.b32.xlu0 %v2852, 24
  %v2885 = vpop.permute.xlu0 %2884
  %2886 = vrot.lane.b32.xlu0 %v2853, 24
  %v2887 = vpop.permute.xlu0 %2886
  %2888 = vrot.lane.b32.xlu0 %v2854, 24
  %v2889 = vpop.permute.xlu0 %2888
  %2890 = vrot.lane.b32.xlu0 %v2855, 24
  %v2891 = vpop.permute.xlu0 %2890
  %2892 = vrot.lane.b32.xlu0 %v2856, 24
  %v2893 = vpop.permute.xlu0 %2892
  %2894 = vrot.lane.b32.xlu0 %v2857, 24
  %v2895 = vpop.permute.xlu0 %2894
  %2896 = vrot.lane.b32.xlu0 %v2858, 24
  %v2897 = vpop.permute.xlu0 %2896
  %2898 = vrot.lane.b32.xlu0 %v2859, 24
  %v2899 = vpop.permute.xlu0 %2898
  %2900 = vrot.lane.b32.xlu0 %v2860, 24
  %v2901 = vpop.permute.xlu0 %2900
  %2902 = vrot.lane.b32.xlu0 %v2861, 24
  %v2903 = vpop.permute.xlu0 %2902
  %2904 = vrot.lane.b32.xlu0 %v2862, 24
  %v2905 = vpop.permute.xlu0 %2904
  %2906 = vrot.lane.b32.xlu0 %v2863, 24
  %v2907 = vpop.permute.xlu0 %2906
  %2908 = vrot.lane.b32.xlu0 %v2864, 24
  %v2909 = vpop.permute.xlu0 %2908
  %2910 = vrot.lane.b32.xlu0 %v2865, 24
  %v2911 = vpop.permute.xlu0 %2910
  %2912 = vrot.lane.b32.xlu0 %v2866, 24
  %v2913 = vpop.permute.xlu0 %2912
  %2914 = vrot.lane.b32.xlu0 %v2867, 24
  %v2915 = vpop.permute.xlu0 %2914
  %vm2932 = vcmask 195584
  %v2933 = vsel %vm2932, %v2852, %v2885
  %v2934 = vsel %vm2932, %v2853, %v2887
  %v2935 = vsel %vm2932, %v2854, %v2889
  %v2936 = vsel %vm2932, %v2855, %v2891
  %v2937 = vsel %vm2932, %v2856, %v2893
  %v2938 = vsel %vm2932, %v2857, %v2895
  %v2939 = vsel %vm2932, %v2858, %v2897
  %v2940 = vsel %vm2932, %v2859, %v2899
  %v2941 = vsel %vm2932, %v2860, %v2901
  %v2942 = vsel %vm2932, %v2861, %v2903
  %v2943 = vsel %vm2932, %v2862, %v2905
  %v2944 = vsel %vm2932, %v2863, %v2907
  %v2945 = vsel %vm2932, %v2864, %v2909
  %v2946 = vsel %vm2932, %v2865, %v2911
  %v2947 = vsel %vm2932, %v2866, %v2913
  %v2948 = vsel %vm2932, %v2867, %v2915
  %v2949 = vmul.f32 %v2933, %v1291
  %v2950 = vmul.f32 %v2934, %v1395
  %v2951 = vmul.f32 %v2935, %v1499
  %v2952 = vmul.f32 %v2936, %v1603
  %v2953 = vmul.f32 %v2937, %v1707
  %v2954 = vmul.f32 %v2938, %v1811
  %v2955 = vmul.f32 %v2939, %v1915
  %v2956 = vmul.f32 %v2940, %v2019
  %v2957 = vmul.f32 %v2941, %v2123
  %v2958 = vmul.f32 %v2942, %v2227
  %v2959 = vmul.f32 %v2943, %v2331
  %v2960 = vmul.f32 %v2944, %v2435
  %v2961 = vmul.f32 %v2945, %v2539
  %v2962 = vmul.f32 %v2946, %v2643
  %v2963 = vmul.f32 %v2947, %v2747
  %v2964 = vmul.f32 %v2948, %v2851
  %v2965 = vld [vmem:[%s5] sm:$0xff]
  %v2966 = vld [vmem:[%s5 + $0x8] sm:$0xff]
  %v2967 = vld [vmem:[%s5 + $0x10] sm:$0xff]
  %v2968 = vld [vmem:[%s5 + $0x18] sm:$0xff]
  %v2969 = vld [vmem:[%s5 + $0x20] sm:$0xff]
  %v2970 = vld [vmem:[%s5 + $0x28] sm:$0xff]
  %v2971 = vld [vmem:[%s5 + $0x30] sm:$0xff]
  %v2972 = vld [vmem:[%s5 + $0x38] sm:$0xff]
  %v2973 = vld [vmem:[%s5 + $0x40] sm:$0xff]
  %v2974 = vld [vmem:[%s5 + $0x48] sm:$0xff]
  %v2975 = vld [vmem:[%s5 + $0x50] sm:$0xff]
  %v2976 = vld [vmem:[%s5 + $0x58] sm:$0xff]
  %vm2977 = vcmask 392192
  %v2979 = vsel %vm2977, %v2949, 0
  %v2982 = vsel %vm2977, %v2950, 0
  %v2985 = vsel %vm2977, %v2951, 0
  %v2988 = vsel %vm2977, %v2952, 0
  %v2991 = vsel %vm2977, %v2953, 0
  %v2994 = vsel %vm2977, %v2954, 0
  %v2997 = vsel %vm2977, %v2955, 0
  %v3000 = vsel %vm2977, %v2956, 0
  %v3003 = vsel %vm2977, %v2957, 0
  %v3006 = vsel %vm2977, %v2958, 0
  %v3009 = vsel %vm2977, %v2959, 0
  %v3012 = vsel %vm2977, %v2960, 0
  %v3015 = vsel %vm2977, %v2961, 0
  %v3018 = vsel %vm2977, %v2962, 0
  %v3021 = vsel %vm2977, %v2963, 0
  %v3024 = vsel %vm2977, %v2964, 0
  %3026 = vmatprep.subr.mxu0 0.0
  %3027 = vmatpush1.msra.mxu0 0.0
  %3028 = vmatprep.subr.mxu0 0.0
  %3029 = vmatpush1.msra.mxu0 0.0
  %3030 = vmatprep.subr.mxu0 0.0
  %3031 = vmatpush1.msra.mxu0 0.0
  %3032 = vmatprep.subr.mxu0 0.0
  %3033 = vmatpush1.msra.mxu0 0.0
  %3034 = vmatprep.subr.mxu0 0.0
  %3035 = vmatpush1.msra.mxu0 0.0
  %3036 = vmatprep.subr.mxu0 0.0
  %3037 = vmatpush1.msra.mxu0 0.0
  %3038 = vmatprep.subr.mxu0 0.0
  %3039 = vmatpush1.msra.mxu0 0.0
  %3040 = vmatprep.subr.mxu0 0.0
  %3041 = vmatpush1.msra.mxu0 0.0
  %3042 = vmatprep.subr.mxu0 0.0
  %3043 = vmatpush1.msra.mxu0 0.0
  %3044 = vmatprep.subr.mxu0 0.0
  %3045 = vmatpush1.msra.mxu0 0.0
  %v3046 = vand.u32 %v2976, 4294901760
  %3047 = vmatprep.subr.mxu0 %v3046
  %v3048 = vand.u32 %v2975, 4294901760
  %3049 = vmatpush1.msra.mxu0 %v3048
  %v3050 = vand.u32 %v2974, 4294901760
  %3051 = vmatprep.subr.mxu0 %v3050
  %v3052 = vand.u32 %v2973, 4294901760
  %3053 = vmatpush1.msra.mxu0 %v3052
  %v3054 = vand.u32 %v2972, 4294901760
  %3055 = vmatprep.subr.mxu0 %v3054
  %v3056 = vand.u32 %v2971, 4294901760
  %3057 = vmatpush1.msra.mxu0 %v3056
  %v3058 = vand.u32 %v2970, 4294901760
  %3059 = vmatprep.subr.mxu0 %v3058
  %v3060 = vand.u32 %v2969, 4294901760
  %3061 = vmatpush1.msra.mxu0 %v3060
  %v3062 = vand.u32 %v2968, 4294901760
  %3063 = vmatprep.subr.mxu0 %v3062
  %v3064 = vand.u32 %v2967, 4294901760
  %3065 = vmatpush1.msra.mxu0 %v3064
  %v3066 = vand.u32 %v2966, 4294901760
  %3067 = vmatprep.subr.mxu0 %v3066
  %v3068 = vand.u32 %v2965, 4294901760
  %3069 = vmatpush1.msra.mxu0 %v3068
  %3070 = vmatprep.subr.mxu0 0.0
  %3071 = vmatpush2.msra.mxu0 0.0
  %3072 = vmatprep.subr.mxu0 0.0
  %3073 = vmatpush2.msra.mxu0 0.0
  %3074 = vmatprep.subr.mxu0 0.0
  %3075 = vmatpush2.msra.mxu0 0.0
  %3076 = vmatprep.subr.mxu0 0.0
  %3077 = vmatpush2.msra.mxu0 0.0
  %3078 = vmatprep.subr.mxu0 0.0
  %3079 = vmatpush2.msra.mxu0 0.0
  %3080 = vmatprep.subr.mxu0 0.0
  %3081 = vmatpush2.msra.mxu0 0.0
  %3082 = vmatprep.subr.mxu0 0.0
  %3083 = vmatpush2.msra.mxu0 0.0
  %3084 = vmatprep.subr.mxu0 0.0
  %3085 = vmatpush2.msra.mxu0 0.0
  %3086 = vmatprep.subr.mxu0 0.0
  %3087 = vmatpush2.msra.mxu0 0.0
  %3088 = vmatprep.subr.mxu0 0.0
  %3089 = vmatpush2.msra.mxu0 0.0
  %3090 = vmatprep.subr.mxu0 0.0
  %3091 = vmatpush2.msra.mxu0 0.0
  %3092 = vmatprep.subr.mxu0 0.0
  %3093 = vmatpush2.msra.mxu0 0.0
  %3094 = vmatprep.subr.mxu0 0.0
  %3095 = vmatpush2.msra.mxu0 0.0
  %3096 = vmatprep.subr.mxu0 0.0
  %3097 = vmatpush2.msra.mxu0 0.0
  %3098 = vmatprep.subr.mxu0 0.0
  %3099 = vmatpush2.msra.mxu0 0.0
  %3100 = vmatprep.subr.mxu0 0.0
  %3101 = vmatpush2.msra.mxu0 0.0
  %3102 = vmatprep.mubr.f32.mxu0 0.0
  %v3103 = vand.u32 %v2979, 4294901760
  %v3104 = vsub.f32 %v2979, %v3103
  %v3105 = vand.u32 %v3104, 4294901760
  %v3106 = vsub.f32 %v3104, %v3105
  %v3107 = vand.u32 %v3106, 4294901760
  %3108 = vmatmul.mubr.f32.gmra.mxu0 %v3107
  %v3109 = vpop.f32.mrf.mxu0
  %v3110 = vadd.f32 0.0, %v3109
  %v3111 = vpop.f32.mrf.mxu0
  %v3112 = vadd.f32 0.0, %v3111
  %3113 = vmatprep.mubr.f32.mxu0 0.0
  %v3114 = vand.u32 %v2982, 4294901760
  %v3115 = vsub.f32 %v2982, %v3114
  %v3116 = vand.u32 %v3115, 4294901760
  %v3117 = vsub.f32 %v3115, %v3116
  %v3118 = vand.u32 %v3117, 4294901760
  %3119 = vmatmul.mubr.f32.gmra.mxu0 %v3118
  %v3120 = vpop.f32.mrf.mxu0
  %v3121 = vadd.f32 0.0, %v3120
  %v3122 = vpop.f32.mrf.mxu0
  %v3123 = vadd.f32 0.0, %v3122
  %3124 = vmatprep.mubr.f32.mxu0 0.0
  %v3125 = vand.u32 %v2985, 4294901760
  %v3126 = vsub.f32 %v2985, %v3125
  %v3127 = vand.u32 %v3126, 4294901760
  %v3128 = vsub.f32 %v3126, %v3127
  %v3129 = vand.u32 %v3128, 4294901760
  %3130 = vmatmul.mubr.f32.gmra.mxu0 %v3129
  %v3131 = vpop.f32.mrf.mxu0
  %v3132 = vadd.f32 0.0, %v3131
  %v3133 = vpop.f32.mrf.mxu0
  %v3134 = vadd.f32 0.0, %v3133
  %3135 = vmatprep.mubr.f32.mxu0 0.0
  %v3136 = vand.u32 %v2988, 4294901760
  %v3137 = vsub.f32 %v2988, %v3136
  %v3138 = vand.u32 %v3137, 4294901760
  %v3139 = vsub.f32 %v3137, %v3138
  %v3140 = vand.u32 %v3139, 4294901760
  %3141 = vmatmul.mubr.f32.gmra.mxu0 %v3140
  %v3142 = vpop.f32.mrf.mxu0
  %v3143 = vadd.f32 0.0, %v3142
  %v3144 = vpop.f32.mrf.mxu0
  %v3145 = vadd.f32 0.0, %v3144
  %3146 = vmatprep.mubr.f32.mxu0 0.0
  %v3147 = vand.u32 %v2991, 4294901760
  %v3148 = vsub.f32 %v2991, %v3147
  %v3149 = vand.u32 %v3148, 4294901760
  %v3150 = vsub.f32 %v3148, %v3149
  %v3151 = vand.u32 %v3150, 4294901760
  %3152 = vmatmul.mubr.f32.gmra.mxu0 %v3151
  %v3153 = vpop.f32.mrf.mxu0
  %v3154 = vadd.f32 0.0, %v3153
  %v3155 = vpop.f32.mrf.mxu0
  %v3156 = vadd.f32 0.0, %v3155
  %3157 = vmatprep.mubr.f32.mxu0 0.0
  %v3158 = vand.u32 %v2994, 4294901760
  %v3159 = vsub.f32 %v2994, %v3158
  %v3160 = vand.u32 %v3159, 4294901760
  %v3161 = vsub.f32 %v3159, %v3160
  %v3162 = vand.u32 %v3161, 4294901760
  %3163 = vmatmul.mubr.f32.gmra.mxu0 %v3162
  %v3164 = vpop.f32.mrf.mxu0
  %v3165 = vadd.f32 0.0, %v3164
  %v3166 = vpop.f32.mrf.mxu0
  %v3167 = vadd.f32 0.0, %v3166
  %3168 = vmatprep.mubr.f32.mxu0 0.0
  %v3169 = vand.u32 %v2997, 4294901760
  %v3170 = vsub.f32 %v2997, %v3169
  %v3171 = vand.u32 %v3170, 4294901760
  %v3172 = vsub.f32 %v3170, %v3171
  %v3173 = vand.u32 %v3172, 4294901760
  %3174 = vmatmul.mubr.f32.gmra.mxu0 %v3173
  %v3175 = vpop.f32.mrf.mxu0
  %v3176 = vadd.f32 0.0, %v3175
  %v3177 = vpop.f32.mrf.mxu0
  %v3178 = vadd.f32 0.0, %v3177
  %3179 = vmatprep.mubr.f32.mxu0 0.0
  %v3180 = vand.u32 %v3000, 4294901760
  %v3181 = vsub.f32 %v3000, %v3180
  %v3182 = vand.u32 %v3181, 4294901760
  %v3183 = vsub.f32 %v3181, %v3182
  %v3184 = vand.u32 %v3183, 4294901760
  %3185 = vmatmul.mubr.f32.gmra.mxu0 %v3184
  %v3186 = vpop.f32.mrf.mxu0
  %v3187 = vadd.f32 0.0, %v3186
  %v3188 = vpop.f32.mrf.mxu0
  %v3189 = vadd.f32 0.0, %v3188
  %3190 = vmatprep.mubr.f32.mxu0 0.0
  %v3191 = vand.u32 %v3003, 4294901760
  %v3192 = vsub.f32 %v3003, %v3191
  %v3193 = vand.u32 %v3192, 4294901760
  %v3194 = vsub.f32 %v3192, %v3193
  %v3195 = vand.u32 %v3194, 4294901760
  %3196 = vmatmul.mubr.f32.gmra.mxu0 %v3195
  %v3197 = vpop.f32.mrf.mxu0
  %v3198 = vadd.f32 0.0, %v3197
  %v3199 = vpop.f32.mrf.mxu0
  %v3200 = vadd.f32 0.0, %v3199
  %3201 = vmatprep.mubr.f32.mxu0 0.0
  %v3202 = vand.u32 %v3006, 4294901760
  %v3203 = vsub.f32 %v3006, %v3202
  %v3204 = vand.u32 %v3203, 4294901760
  %v3205 = vsub.f32 %v3203, %v3204
  %v3206 = vand.u32 %v3205, 4294901760
  %3207 = vmatmul.mubr.f32.gmra.mxu0 %v3206
  %v3208 = vpop.f32.mrf.mxu0
  %v3209 = vadd.f32 0.0, %v3208
  %v3210 = vpop.f32.mrf.mxu0
  %v3211 = vadd.f32 0.0, %v3210
  %3212 = vmatprep.mubr.f32.mxu0 0.0
  %v3213 = vand.u32 %v3009, 4294901760
  %v3214 = vsub.f32 %v3009, %v3213
  %v3215 = vand.u32 %v3214, 4294901760
  %v3216 = vsub.f32 %v3214, %v3215
  %v3217 = vand.u32 %v3216, 4294901760
  %3218 = vmatmul.mubr.f32.gmra.mxu0 %v3217
  %v3219 = vpop.f32.mrf.mxu0
  %v3220 = vadd.f32 0.0, %v3219
  %v3221 = vpop.f32.mrf.mxu0
  %v3222 = vadd.f32 0.0, %v3221
  %3223 = vmatprep.mubr.f32.mxu0 0.0
  %v3224 = vand.u32 %v3012, 4294901760
  %v3225 = vsub.f32 %v3012, %v3224
  %v3226 = vand.u32 %v3225, 4294901760
  %v3227 = vsub.f32 %v3225, %v3226
  %v3228 = vand.u32 %v3227, 4294901760
  %3229 = vmatmul.mubr.f32.gmra.mxu0 %v3228
  %v3230 = vpop.f32.mrf.mxu0
  %v3231 = vadd.f32 0.0, %v3230
  %v3232 = vpop.f32.mrf.mxu0
  %v3233 = vadd.f32 0.0, %v3232
  %3234 = vmatprep.mubr.f32.mxu0 0.0
  %v3235 = vand.u32 %v3015, 4294901760
  %v3236 = vsub.f32 %v3015, %v3235
  %v3237 = vand.u32 %v3236, 4294901760
  %v3238 = vsub.f32 %v3236, %v3237
  %v3239 = vand.u32 %v3238, 4294901760
  %3240 = vmatmul.mubr.f32.gmra.mxu0 %v3239
  %v3241 = vpop.f32.mrf.mxu0
  %v3242 = vadd.f32 0.0, %v3241
  %v3243 = vpop.f32.mrf.mxu0
  %v3244 = vadd.f32 0.0, %v3243
  %3245 = vmatprep.mubr.f32.mxu0 0.0
  %v3246 = vand.u32 %v3018, 4294901760
  %v3247 = vsub.f32 %v3018, %v3246
  %v3248 = vand.u32 %v3247, 4294901760
  %v3249 = vsub.f32 %v3247, %v3248
  %v3250 = vand.u32 %v3249, 4294901760
  %3251 = vmatmul.mubr.f32.gmra.mxu0 %v3250
  %v3252 = vpop.f32.mrf.mxu0
  %v3253 = vadd.f32 0.0, %v3252
  %v3254 = vpop.f32.mrf.mxu0
  %v3255 = vadd.f32 0.0, %v3254
  %3256 = vmatprep.mubr.f32.mxu0 0.0
  %v3257 = vand.u32 %v3021, 4294901760
  %v3258 = vsub.f32 %v3021, %v3257
  %v3259 = vand.u32 %v3258, 4294901760
  %v3260 = vsub.f32 %v3258, %v3259
  %v3261 = vand.u32 %v3260, 4294901760
  %3262 = vmatmul.mubr.f32.gmra.mxu0 %v3261
  %v3263 = vpop.f32.mrf.mxu0
  %v3264 = vadd.f32 0.0, %v3263
  %v3265 = vpop.f32.mrf.mxu0
  %v3266 = vadd.f32 0.0, %v3265
  %3267 = vmatprep.mubr.f32.mxu0 0.0
  %v3268 = vand.u32 %v3024, 4294901760
  %v3269 = vsub.f32 %v3024, %v3268
  %v3270 = vand.u32 %v3269, 4294901760
  %v3271 = vsub.f32 %v3269, %v3270
  %v3272 = vand.u32 %v3271, 4294901760
  %3273 = vmatmul.mubr.f32.gmra.mxu0 %v3272
  %v3274 = vpop.f32.mrf.mxu0
  %v3275 = vadd.f32 0.0, %v3274
  %v3276 = vpop.f32.mrf.mxu0
  %v3277 = vadd.f32 0.0, %v3276
  %3278 = vdwg.mxu0
  %3279 = vmatprep.subr.mxu0 0.0
  %3280 = vmatpush1.msra.mxu0 0.0
  %3281 = vmatprep.subr.mxu0 0.0
  %3282 = vmatpush1.msra.mxu0 0.0
  %3283 = vmatprep.subr.mxu0 0.0
  %3284 = vmatpush1.msra.mxu0 0.0
  %3285 = vmatprep.subr.mxu0 0.0
  %3286 = vmatpush1.msra.mxu0 0.0
  %3287 = vmatprep.subr.mxu0 0.0
  %3288 = vmatpush1.msra.mxu0 0.0
  %3289 = vmatprep.subr.mxu0 0.0
  %3290 = vmatpush1.msra.mxu0 0.0
  %3291 = vmatprep.subr.mxu0 0.0
  %3292 = vmatpush1.msra.mxu0 0.0
  %3293 = vmatprep.subr.mxu0 0.0
  %3294 = vmatpush1.msra.mxu0 0.0
  %3295 = vmatprep.subr.mxu0 0.0
  %3296 = vmatpush1.msra.mxu0 0.0
  %3297 = vmatprep.subr.mxu0 0.0
  %3298 = vmatpush1.msra.mxu0 0.0
  %v3299 = vand.u32 %v2976, 4294901760
  %v3300 = vsub.f32 %v2976, %v3299
  %v3301 = vand.u32 %v3300, 4294901760
  %v3302 = vsub.f32 %v3300, %v3301
  %v3303 = vand.u32 %v3302, 4294901760
  %3304 = vmatprep.subr.mxu0 %v3303
  %v3305 = vand.u32 %v2975, 4294901760
  %v3306 = vsub.f32 %v2975, %v3305
  %v3307 = vand.u32 %v3306, 4294901760
  %v3308 = vsub.f32 %v3306, %v3307
  %v3309 = vand.u32 %v3308, 4294901760
  %3310 = vmatpush1.msra.mxu0 %v3309
  %v3311 = vand.u32 %v2974, 4294901760
  %v3312 = vsub.f32 %v2974, %v3311
  %v3313 = vand.u32 %v3312, 4294901760
  %v3314 = vsub.f32 %v3312, %v3313
  %v3315 = vand.u32 %v3314, 4294901760
  %3316 = vmatprep.subr.mxu0 %v3315
  %v3317 = vand.u32 %v2973, 4294901760
  %v3318 = vsub.f32 %v2973, %v3317
  %v3319 = vand.u32 %v3318, 4294901760
  %v3320 = vsub.f32 %v3318, %v3319
  %v3321 = vand.u32 %v3320, 4294901760
  %3322 = vmatpush1.msra.mxu0 %v3321
  %v3323 = vand.u32 %v2972, 4294901760
  %v3324 = vsub.f32 %v2972, %v3323
  %v3325 = vand.u32 %v3324, 4294901760
  %v3326 = vsub.f32 %v3324, %v3325
  %v3327 = vand.u32 %v3326, 4294901760
  %3328 = vmatprep.subr.mxu0 %v3327
  %v3329 = vand.u32 %v2971, 4294901760
  %v3330 = vsub.f32 %v2971, %v3329
  %v3331 = vand.u32 %v3330, 4294901760
  %v3332 = vsub.f32 %v3330, %v3331
  %v3333 = vand.u32 %v3332, 4294901760
  %3334 = vmatpush1.msra.mxu0 %v3333
  %v3335 = vand.u32 %v2970, 4294901760
  %v3336 = vsub.f32 %v2970, %v3335
  %v3337 = vand.u32 %v3336, 4294901760
  %v3338 = vsub.f32 %v3336, %v3337
  %v3339 = vand.u32 %v3338, 4294901760
  %3340 = vmatprep.subr.mxu0 %v3339
  %v3341 = vand.u32 %v2969, 4294901760
  %v3342 = vsub.f32 %v2969, %v3341
  %v3343 = vand.u32 %v3342, 4294901760
  %v3344 = vsub.f32 %v3342, %v3343
  %v3345 = vand.u32 %v3344, 4294901760
  %3346 = vmatpush1.msra.mxu0 %v3345
  %v3347 = vand.u32 %v2968, 4294901760
  %v3348 = vsub.f32 %v2968, %v3347
  %v3349 = vand.u32 %v3348, 4294901760
  %v3350 = vsub.f32 %v3348, %v3349
  %v3351 = vand.u32 %v3350, 4294901760
  %3352 = vmatprep.subr.mxu0 %v3351
  %v3353 = vand.u32 %v2967, 4294901760
  %v3354 = vsub.f32 %v2967, %v3353
  %v3355 = vand.u32 %v3354, 4294901760
  %v3356 = vsub.f32 %v3354, %v3355
  %v3357 = vand.u32 %v3356, 4294901760
  %3358 = vmatpush1.msra.mxu0 %v3357
  %v3359 = vand.u32 %v2966, 4294901760
  %v3360 = vsub.f32 %v2966, %v3359
  %v3361 = vand.u32 %v3360, 4294901760
  %v3362 = vsub.f32 %v3360, %v3361
  %v3363 = vand.u32 %v3362, 4294901760
  %3364 = vmatprep.subr.mxu0 %v3363
  %v3365 = vand.u32 %v2965, 4294901760
  %v3366 = vsub.f32 %v2965, %v3365
  %v3367 = vand.u32 %v3366, 4294901760
  %v3368 = vsub.f32 %v3366, %v3367
  %v3369 = vand.u32 %v3368, 4294901760
  %3370 = vmatpush1.msra.mxu0 %v3369
  %3371 = vmatprep.subr.mxu0 0.0
  %3372 = vmatpush2.msra.mxu0 0.0
  %3373 = vmatprep.subr.mxu0 0.0
  %3374 = vmatpush2.msra.mxu0 0.0
  %3375 = vmatprep.subr.mxu0 0.0
  %3376 = vmatpush2.msra.mxu0 0.0
  %3377 = vmatprep.subr.mxu0 0.0
  %3378 = vmatpush2.msra.mxu0 0.0
  %3379 = vmatprep.subr.mxu0 0.0
  %3380 = vmatpush2.msra.mxu0 0.0
  %3381 = vmatprep.subr.mxu0 0.0
  %3382 = vmatpush2.msra.mxu0 0.0
  %3383 = vmatprep.subr.mxu0 0.0
  %3384 = vmatpush2.msra.mxu0 0.0
  %3385 = vmatprep.subr.mxu0 0.0
  %3386 = vmatpush2.msra.mxu0 0.0
  %3387 = vmatprep.subr.mxu0 0.0
  %3388 = vmatpush2.msra.mxu0 0.0
  %3389 = vmatprep.subr.mxu0 0.0
  %3390 = vmatpush2.msra.mxu0 0.0
  %3391 = vmatprep.subr.mxu0 0.0
  %3392 = vmatpush2.msra.mxu0 0.0
  %3393 = vmatprep.subr.mxu0 0.0
  %3394 = vmatpush2.msra.mxu0 0.0
  %3395 = vmatprep.subr.mxu0 0.0
  %3396 = vmatpush2.msra.mxu0 0.0
  %3397 = vmatprep.subr.mxu0 0.0
  %3398 = vmatpush2.msra.mxu0 0.0
  %3399 = vmatprep.subr.mxu0 0.0
  %3400 = vmatpush2.msra.mxu0 0.0
  %3401 = vmatprep.subr.mxu0 0.0
  %3402 = vmatpush2.msra.mxu0 0.0
  %3403 = vmatprep.mubr.f32.mxu0 0.0
  %v3404 = vand.u32 %v2979, 4294901760
  %3405 = vmatmul.mubr.f32.gmra.mxu0 %v3404
  %v3406 = vpop.f32.mrf.mxu0
  %v3407 = vadd.f32 %v3110, %v3406
  %v3408 = vpop.f32.mrf.mxu0
  %v3409 = vadd.f32 %v3112, %v3408
  %3410 = vmatprep.mubr.f32.mxu0 0.0
  %v3411 = vand.u32 %v2982, 4294901760
  %3412 = vmatmul.mubr.f32.gmra.mxu0 %v3411
  %v3413 = vpop.f32.mrf.mxu0
  %v3414 = vadd.f32 %v3121, %v3413
  %v3415 = vpop.f32.mrf.mxu0
  %v3416 = vadd.f32 %v3123, %v3415
  %3417 = vmatprep.mubr.f32.mxu0 0.0
  %v3418 = vand.u32 %v2985, 4294901760
  %3419 = vmatmul.mubr.f32.gmra.mxu0 %v3418
  %v3420 = vpop.f32.mrf.mxu0
  %v3421 = vadd.f32 %v3132, %v3420
  %v3422 = vpop.f32.mrf.mxu0
  %v3423 = vadd.f32 %v3134, %v3422
  %3424 = vmatprep.mubr.f32.mxu0 0.0
  %v3425 = vand.u32 %v2988, 4294901760
  %3426 = vmatmul.mubr.f32.gmra.mxu0 %v3425
  %v3427 = vpop.f32.mrf.mxu0
  %v3428 = vadd.f32 %v3143, %v3427
  %v3429 = vpop.f32.mrf.mxu0
  %v3430 = vadd.f32 %v3145, %v3429
  %3431 = vmatprep.mubr.f32.mxu0 0.0
  %v3432 = vand.u32 %v2991, 4294901760
  %3433 = vmatmul.mubr.f32.gmra.mxu0 %v3432
  %v3434 = vpop.f32.mrf.mxu0
  %v3435 = vadd.f32 %v3154, %v3434
  %v3436 = vpop.f32.mrf.mxu0
  %v3437 = vadd.f32 %v3156, %v3436
  %3438 = vmatprep.mubr.f32.mxu0 0.0
  %v3439 = vand.u32 %v2994, 4294901760
  %3440 = vmatmul.mubr.f32.gmra.mxu0 %v3439
  %v3441 = vpop.f32.mrf.mxu0
  %v3442 = vadd.f32 %v3165, %v3441
  %v3443 = vpop.f32.mrf.mxu0
  %v3444 = vadd.f32 %v3167, %v3443
  %3445 = vmatprep.mubr.f32.mxu0 0.0
  %v3446 = vand.u32 %v2997, 4294901760
  %3447 = vmatmul.mubr.f32.gmra.mxu0 %v3446
  %v3448 = vpop.f32.mrf.mxu0
  %v3449 = vadd.f32 %v3176, %v3448
  %v3450 = vpop.f32.mrf.mxu0
  %v3451 = vadd.f32 %v3178, %v3450
  %3452 = vmatprep.mubr.f32.mxu0 0.0
  %v3453 = vand.u32 %v3000, 4294901760
  %3454 = vmatmul.mubr.f32.gmra.mxu0 %v3453
  %v3455 = vpop.f32.mrf.mxu0
  %v3456 = vadd.f32 %v3187, %v3455
  %v3457 = vpop.f32.mrf.mxu0
  %v3458 = vadd.f32 %v3189, %v3457
  %3459 = vmatprep.mubr.f32.mxu0 0.0
  %v3460 = vand.u32 %v3003, 4294901760
  %3461 = vmatmul.mubr.f32.gmra.mxu0 %v3460
  %v3462 = vpop.f32.mrf.mxu0
  %v3463 = vadd.f32 %v3198, %v3462
  %v3464 = vpop.f32.mrf.mxu0
  %v3465 = vadd.f32 %v3200, %v3464
  %3466 = vmatprep.mubr.f32.mxu0 0.0
  %v3467 = vand.u32 %v3006, 4294901760
  %3468 = vmatmul.mubr.f32.gmra.mxu0 %v3467
  %v3469 = vpop.f32.mrf.mxu0
  %v3470 = vadd.f32 %v3209, %v3469
  %v3471 = vpop.f32.mrf.mxu0
  %v3472 = vadd.f32 %v3211, %v3471
  %3473 = vmatprep.mubr.f32.mxu0 0.0
  %v3474 = vand.u32 %v3009, 4294901760
  %3475 = vmatmul.mubr.f32.gmra.mxu0 %v3474
  %v3476 = vpop.f32.mrf.mxu0
  %v3477 = vadd.f32 %v3220, %v3476
  %v3478 = vpop.f32.mrf.mxu0
  %v3479 = vadd.f32 %v3222, %v3478
  %3480 = vmatprep.mubr.f32.mxu0 0.0
  %v3481 = vand.u32 %v3012, 4294901760
  %3482 = vmatmul.mubr.f32.gmra.mxu0 %v3481
  %v3483 = vpop.f32.mrf.mxu0
  %v3484 = vadd.f32 %v3231, %v3483
  %v3485 = vpop.f32.mrf.mxu0
  %v3486 = vadd.f32 %v3233, %v3485
  %3487 = vmatprep.mubr.f32.mxu0 0.0
  %v3488 = vand.u32 %v3015, 4294901760
  %3489 = vmatmul.mubr.f32.gmra.mxu0 %v3488
  %v3490 = vpop.f32.mrf.mxu0
  %v3491 = vadd.f32 %v3242, %v3490
  %v3492 = vpop.f32.mrf.mxu0
  %v3493 = vadd.f32 %v3244, %v3492
  %3494 = vmatprep.mubr.f32.mxu0 0.0
  %v3495 = vand.u32 %v3018, 4294901760
  %3496 = vmatmul.mubr.f32.gmra.mxu0 %v3495
  %v3497 = vpop.f32.mrf.mxu0
  %v3498 = vadd.f32 %v3253, %v3497
  %v3499 = vpop.f32.mrf.mxu0
  %v3500 = vadd.f32 %v3255, %v3499
  %3501 = vmatprep.mubr.f32.mxu0 0.0
  %v3502 = vand.u32 %v3021, 4294901760
  %3503 = vmatmul.mubr.f32.gmra.mxu0 %v3502
  %v3504 = vpop.f32.mrf.mxu0
  %v3505 = vadd.f32 %v3264, %v3504
  %v3506 = vpop.f32.mrf.mxu0
  %v3507 = vadd.f32 %v3266, %v3506
  %3508 = vmatprep.mubr.f32.mxu0 0.0
  %v3509 = vand.u32 %v3024, 4294901760
  %3510 = vmatmul.mubr.f32.gmra.mxu0 %v3509
  %v3511 = vpop.f32.mrf.mxu0
  %v3512 = vadd.f32 %v3275, %v3511
  %v3513 = vpop.f32.mrf.mxu0
  %v3514 = vadd.f32 %v3277, %v3513
  %3515 = vdwg.mxu0
  %3516 = vmatprep.subr.mxu0 0.0
  %3517 = vmatpush1.msra.mxu0 0.0
  %3518 = vmatprep.subr.mxu0 0.0
  %3519 = vmatpush1.msra.mxu0 0.0
  %3520 = vmatprep.subr.mxu0 0.0
  %3521 = vmatpush1.msra.mxu0 0.0
  %3522 = vmatprep.subr.mxu0 0.0
  %3523 = vmatpush1.msra.mxu0 0.0
  %3524 = vmatprep.subr.mxu0 0.0
  %3525 = vmatpush1.msra.mxu0 0.0
  %3526 = vmatprep.subr.mxu0 0.0
  %3527 = vmatpush1.msra.mxu0 0.0
  %3528 = vmatprep.subr.mxu0 0.0
  %3529 = vmatpush1.msra.mxu0 0.0
  %3530 = vmatprep.subr.mxu0 0.0
  %3531 = vmatpush1.msra.mxu0 0.0
  %3532 = vmatprep.subr.mxu0 0.0
  %3533 = vmatpush1.msra.mxu0 0.0
  %3534 = vmatprep.subr.mxu0 0.0
  %3535 = vmatpush1.msra.mxu0 0.0
  %v3536 = vand.u32 %v2976, 4294901760
  %v3537 = vsub.f32 %v2976, %v3536
  %3538 = vmatprep.subr.mxu0 %v3537
  %v3539 = vand.u32 %v2975, 4294901760
  %v3540 = vsub.f32 %v2975, %v3539
  %3541 = vmatpush1.msra.mxu0 %v3540
  %v3542 = vand.u32 %v2974, 4294901760
  %v3543 = vsub.f32 %v2974, %v3542
  %3544 = vmatprep.subr.mxu0 %v3543
  %v3545 = vand.u32 %v2973, 4294901760
  %v3546 = vsub.f32 %v2973, %v3545
  %3547 = vmatpush1.msra.mxu0 %v3546
  %v3548 = vand.u32 %v2972, 4294901760
  %v3549 = vsub.f32 %v2972, %v3548
  %3550 = vmatprep.subr.mxu0 %v3549
  %v3551 = vand.u32 %v2971, 4294901760
  %v3552 = vsub.f32 %v2971, %v3551
  %3553 = vmatpush1.msra.mxu0 %v3552
  %v3554 = vand.u32 %v2970, 4294901760
  %v3555 = vsub.f32 %v2970, %v3554
  %3556 = vmatprep.subr.mxu0 %v3555
  %v3557 = vand.u32 %v2969, 4294901760
  %v3558 = vsub.f32 %v2969, %v3557
  %3559 = vmatpush1.msra.mxu0 %v3558
  %v3560 = vand.u32 %v2968, 4294901760
  %v3561 = vsub.f32 %v2968, %v3560
  %3562 = vmatprep.subr.mxu0 %v3561
  %v3563 = vand.u32 %v2967, 4294901760
  %v3564 = vsub.f32 %v2967, %v3563
  %3565 = vmatpush1.msra.mxu0 %v3564
  %v3566 = vand.u32 %v2966, 4294901760
  %v3567 = vsub.f32 %v2966, %v3566
  %3568 = vmatprep.subr.mxu0 %v3567
  %v3569 = vand.u32 %v2965, 4294901760
  %v3570 = vsub.f32 %v2965, %v3569
  %3571 = vmatpush1.msra.mxu0 %v3570
  %3572 = vmatprep.subr.mxu0 0.0
  %3573 = vmatpush2.msra.mxu0 0.0
  %3574 = vmatprep.subr.mxu0 0.0
  %3575 = vmatpush2.msra.mxu0 0.0
  %3576 = vmatprep.subr.mxu0 0.0
  %3577 = vmatpush2.msra.mxu0 0.0
  %3578 = vmatprep.subr.mxu0 0.0
  %3579 = vmatpush2.msra.mxu0 0.0
  %3580 = vmatprep.subr.mxu0 0.0
  %3581 = vmatpush2.msra.mxu0 0.0
  %3582 = vmatprep.subr.mxu0 0.0
  %3583 = vmatpush2.msra.mxu0 0.0
  %3584 = vmatprep.subr.mxu0 0.0
  %3585 = vmatpush2.msra.mxu0 0.0
  %3586 = vmatprep.subr.mxu0 0.0
  %3587 = vmatpush2.msra.mxu0 0.0
  %3588 = vmatprep.subr.mxu0 0.0
  %3589 = vmatpush2.msra.mxu0 0.0
  %3590 = vmatprep.subr.mxu0 0.0
  %3591 = vmatpush2.msra.mxu0 0.0
  %3592 = vmatprep.subr.mxu0 0.0
  %3593 = vmatpush2.msra.mxu0 0.0
  %3594 = vmatprep.subr.mxu0 0.0
  %3595 = vmatpush2.msra.mxu0 0.0
  %3596 = vmatprep.subr.mxu0 0.0
  %3597 = vmatpush2.msra.mxu0 0.0
  %3598 = vmatprep.subr.mxu0 0.0
  %3599 = vmatpush2.msra.mxu0 0.0
  %3600 = vmatprep.subr.mxu0 0.0
  %3601 = vmatpush2.msra.mxu0 0.0
  %3602 = vmatprep.subr.mxu0 0.0
  %3603 = vmatpush2.msra.mxu0 0.0
  %3604 = vmatprep.mubr.f32.mxu0 0.0
  %v3605 = vand.u32 %v2979, 4294901760
  %v3606 = vsub.f32 %v2979, %v3605
  %3607 = vmatmul.mubr.f32.gmra.mxu0 %v3606
  %v3608 = vpop.f32.mrf.mxu0
  %v3609 = vadd.f32 %v3407, %v3608
  %v3610 = vpop.f32.mrf.mxu0
  %v3611 = vadd.f32 %v3409, %v3610
  %3612 = vmatprep.mubr.f32.mxu0 0.0
  %v3613 = vand.u32 %v2982, 4294901760
  %v3614 = vsub.f32 %v2982, %v3613
  %3615 = vmatmul.mubr.f32.gmra.mxu0 %v3614
  %v3616 = vpop.f32.mrf.mxu0
  %v3617 = vadd.f32 %v3414, %v3616
  %v3618 = vpop.f32.mrf.mxu0
  %v3619 = vadd.f32 %v3416, %v3618
  %3620 = vmatprep.mubr.f32.mxu0 0.0
  %v3621 = vand.u32 %v2985, 4294901760
  %v3622 = vsub.f32 %v2985, %v3621
  %3623 = vmatmul.mubr.f32.gmra.mxu0 %v3622
  %v3624 = vpop.f32.mrf.mxu0
  %v3625 = vadd.f32 %v3421, %v3624
  %v3626 = vpop.f32.mrf.mxu0
  %v3627 = vadd.f32 %v3423, %v3626
  %3628 = vmatprep.mubr.f32.mxu0 0.0
  %v3629 = vand.u32 %v2988, 4294901760
  %v3630 = vsub.f32 %v2988, %v3629
  %3631 = vmatmul.mubr.f32.gmra.mxu0 %v3630
  %v3632 = vpop.f32.mrf.mxu0
  %v3633 = vadd.f32 %v3428, %v3632
  %v3634 = vpop.f32.mrf.mxu0
  %v3635 = vadd.f32 %v3430, %v3634
  %3636 = vmatprep.mubr.f32.mxu0 0.0
  %v3637 = vand.u32 %v2991, 4294901760
  %v3638 = vsub.f32 %v2991, %v3637
  %3639 = vmatmul.mubr.f32.gmra.mxu0 %v3638
  %v3640 = vpop.f32.mrf.mxu0
  %v3641 = vadd.f32 %v3435, %v3640
  %v3642 = vpop.f32.mrf.mxu0
  %v3643 = vadd.f32 %v3437, %v3642
  %3644 = vmatprep.mubr.f32.mxu0 0.0
  %v3645 = vand.u32 %v2994, 4294901760
  %v3646 = vsub.f32 %v2994, %v3645
  %3647 = vmatmul.mubr.f32.gmra.mxu0 %v3646
  %v3648 = vpop.f32.mrf.mxu0
  %v3649 = vadd.f32 %v3442, %v3648
  %v3650 = vpop.f32.mrf.mxu0
  %v3651 = vadd.f32 %v3444, %v3650
  %3652 = vmatprep.mubr.f32.mxu0 0.0
  %v3653 = vand.u32 %v2997, 4294901760
  %v3654 = vsub.f32 %v2997, %v3653
  %3655 = vmatmul.mubr.f32.gmra.mxu0 %v3654
  %v3656 = vpop.f32.mrf.mxu0
  %v3657 = vadd.f32 %v3449, %v3656
  %v3658 = vpop.f32.mrf.mxu0
  %v3659 = vadd.f32 %v3451, %v3658
  %3660 = vmatprep.mubr.f32.mxu0 0.0
  %v3661 = vand.u32 %v3000, 4294901760
  %v3662 = vsub.f32 %v3000, %v3661
  %3663 = vmatmul.mubr.f32.gmra.mxu0 %v3662
  %v3664 = vpop.f32.mrf.mxu0
  %v3665 = vadd.f32 %v3456, %v3664
  %v3666 = vpop.f32.mrf.mxu0
  %v3667 = vadd.f32 %v3458, %v3666
  %3668 = vmatprep.mubr.f32.mxu0 0.0
  %v3669 = vand.u32 %v3003, 4294901760
  %v3670 = vsub.f32 %v3003, %v3669
  %3671 = vmatmul.mubr.f32.gmra.mxu0 %v3670
  %v3672 = vpop.f32.mrf.mxu0
  %v3673 = vadd.f32 %v3463, %v3672
  %v3674 = vpop.f32.mrf.mxu0
  %v3675 = vadd.f32 %v3465, %v3674
  %3676 = vmatprep.mubr.f32.mxu0 0.0
  %v3677 = vand.u32 %v3006, 4294901760
  %v3678 = vsub.f32 %v3006, %v3677
  %3679 = vmatmul.mubr.f32.gmra.mxu0 %v3678
  %v3680 = vpop.f32.mrf.mxu0
  %v3681 = vadd.f32 %v3470, %v3680
  %v3682 = vpop.f32.mrf.mxu0
  %v3683 = vadd.f32 %v3472, %v3682
  %3684 = vmatprep.mubr.f32.mxu0 0.0
  %v3685 = vand.u32 %v3009, 4294901760
  %v3686 = vsub.f32 %v3009, %v3685
  %3687 = vmatmul.mubr.f32.gmra.mxu0 %v3686
  %v3688 = vpop.f32.mrf.mxu0
  %v3689 = vadd.f32 %v3477, %v3688
  %v3690 = vpop.f32.mrf.mxu0
  %v3691 = vadd.f32 %v3479, %v3690
  %3692 = vmatprep.mubr.f32.mxu0 0.0
  %v3693 = vand.u32 %v3012, 4294901760
  %v3694 = vsub.f32 %v3012, %v3693
  %3695 = vmatmul.mubr.f32.gmra.mxu0 %v3694
  %v3696 = vpop.f32.mrf.mxu0
  %v3697 = vadd.f32 %v3484, %v3696
  %v3698 = vpop.f32.mrf.mxu0
  %v3699 = vadd.f32 %v3486, %v3698
  %3700 = vmatprep.mubr.f32.mxu0 0.0
  %v3701 = vand.u32 %v3015, 4294901760
  %v3702 = vsub.f32 %v3015, %v3701
  %3703 = vmatmul.mubr.f32.gmra.mxu0 %v3702
  %v3704 = vpop.f32.mrf.mxu0
  %v3705 = vadd.f32 %v3491, %v3704
  %v3706 = vpop.f32.mrf.mxu0
  %v3707 = vadd.f32 %v3493, %v3706
  %3708 = vmatprep.mubr.f32.mxu0 0.0
  %v3709 = vand.u32 %v3018, 4294901760
  %v3710 = vsub.f32 %v3018, %v3709
  %3711 = vmatmul.mubr.f32.gmra.mxu0 %v3710
  %v3712 = vpop.f32.mrf.mxu0
  %v3713 = vadd.f32 %v3498, %v3712
  %v3714 = vpop.f32.mrf.mxu0
  %v3715 = vadd.f32 %v3500, %v3714
  %3716 = vmatprep.mubr.f32.mxu0 0.0
  %v3717 = vand.u32 %v3021, 4294901760
  %v3718 = vsub.f32 %v3021, %v3717
  %3719 = vmatmul.mubr.f32.gmra.mxu0 %v3718
  %v3720 = vpop.f32.mrf.mxu0
  %v3721 = vadd.f32 %v3505, %v3720
  %v3722 = vpop.f32.mrf.mxu0
  %v3723 = vadd.f32 %v3507, %v3722
  %3724 = vmatprep.mubr.f32.mxu0 0.0
  %v3725 = vand.u32 %v3024, 4294901760
  %v3726 = vsub.f32 %v3024, %v3725
  %3727 = vmatmul.mubr.f32.gmra.mxu0 %v3726
  %v3728 = vpop.f32.mrf.mxu0
  %v3729 = vadd.f32 %v3512, %v3728
  %v3730 = vpop.f32.mrf.mxu0
  %v3731 = vadd.f32 %v3514, %v3730
  %3732 = vdwg.mxu0
  %3733 = vmatprep.subr.mxu0 0.0
  %3734 = vmatpush1.msra.mxu0 0.0
  %3735 = vmatprep.subr.mxu0 0.0
  %3736 = vmatpush1.msra.mxu0 0.0
  %3737 = vmatprep.subr.mxu0 0.0
  %3738 = vmatpush1.msra.mxu0 0.0
  %3739 = vmatprep.subr.mxu0 0.0
  %3740 = vmatpush1.msra.mxu0 0.0
  %3741 = vmatprep.subr.mxu0 0.0
  %3742 = vmatpush1.msra.mxu0 0.0
  %3743 = vmatprep.subr.mxu0 0.0
  %3744 = vmatpush1.msra.mxu0 0.0
  %3745 = vmatprep.subr.mxu0 0.0
  %3746 = vmatpush1.msra.mxu0 0.0
  %3747 = vmatprep.subr.mxu0 0.0
  %3748 = vmatpush1.msra.mxu0 0.0
  %3749 = vmatprep.subr.mxu0 0.0
  %3750 = vmatpush1.msra.mxu0 0.0
  %3751 = vmatprep.subr.mxu0 0.0
  %3752 = vmatpush1.msra.mxu0 0.0
  %v3753 = vand.u32 %v2976, 4294901760
  %3754 = vmatprep.subr.mxu0 %v3753
  %v3755 = vand.u32 %v2975, 4294901760
  %3756 = vmatpush1.msra.mxu0 %v3755
  %v3757 = vand.u32 %v2974, 4294901760
  %3758 = vmatprep.subr.mxu0 %v3757
  %v3759 = vand.u32 %v2973, 4294901760
  %3760 = vmatpush1.msra.mxu0 %v3759
  %v3761 = vand.u32 %v2972, 4294901760
  %3762 = vmatprep.subr.mxu0 %v3761
  %v3763 = vand.u32 %v2971, 4294901760
  %3764 = vmatpush1.msra.mxu0 %v3763
  %v3765 = vand.u32 %v2970, 4294901760
  %3766 = vmatprep.subr.mxu0 %v3765
  %v3767 = vand.u32 %v2969, 4294901760
  %3768 = vmatpush1.msra.mxu0 %v3767
  %v3769 = vand.u32 %v2968, 4294901760
  %3770 = vmatprep.subr.mxu0 %v3769
  %v3771 = vand.u32 %v2967, 4294901760
  %3772 = vmatpush1.msra.mxu0 %v3771
  %v3773 = vand.u32 %v2966, 4294901760
  %3774 = vmatprep.subr.mxu0 %v3773
  %v3775 = vand.u32 %v2965, 4294901760
  %3776 = vmatpush1.msra.mxu0 %v3775
  %3777 = vmatprep.subr.mxu0 0.0
  %3778 = vmatpush2.msra.mxu0 0.0
  %3779 = vmatprep.subr.mxu0 0.0
  %3780 = vmatpush2.msra.mxu0 0.0
  %3781 = vmatprep.subr.mxu0 0.0
  %3782 = vmatpush2.msra.mxu0 0.0
  %3783 = vmatprep.subr.mxu0 0.0
  %3784 = vmatpush2.msra.mxu0 0.0
  %3785 = vmatprep.subr.mxu0 0.0
  %3786 = vmatpush2.msra.mxu0 0.0
  %3787 = vmatprep.subr.mxu0 0.0
  %3788 = vmatpush2.msra.mxu0 0.0
  %3789 = vmatprep.subr.mxu0 0.0
  %3790 = vmatpush2.msra.mxu0 0.0
  %3791 = vmatprep.subr.mxu0 0.0
  %3792 = vmatpush2.msra.mxu0 0.0
  %3793 = vmatprep.subr.mxu0 0.0
  %3794 = vmatpush2.msra.mxu0 0.0
  %3795 = vmatprep.subr.mxu0 0.0
  %3796 = vmatpush2.msra.mxu0 0.0
  %3797 = vmatprep.subr.mxu0 0.0
  %3798 = vmatpush2.msra.mxu0 0.0
  %3799 = vmatprep.subr.mxu0 0.0
  %3800 = vmatpush2.msra.mxu0 0.0
  %3801 = vmatprep.subr.mxu0 0.0
  %3802 = vmatpush2.msra.mxu0 0.0
  %3803 = vmatprep.subr.mxu0 0.0
  %3804 = vmatpush2.msra.mxu0 0.0
  %3805 = vmatprep.subr.mxu0 0.0
  %3806 = vmatpush2.msra.mxu0 0.0
  %3807 = vmatprep.subr.mxu0 0.0
  %3808 = vmatpush2.msra.mxu0 0.0
  %3809 = vmatprep.mubr.f32.mxu0 0.0
  %v3810 = vand.u32 %v2979, 4294901760
  %v3811 = vsub.f32 %v2979, %v3810
  %v3812 = vand.u32 %v3811, 4294901760
  %3813 = vmatmul.mubr.f32.gmra.mxu0 %v3812
  %v3814 = vpop.f32.mrf.mxu0
  %v3815 = vadd.f32 %v3609, %v3814
  %v3816 = vpop.f32.mrf.mxu0
  %v3817 = vadd.f32 %v3611, %v3816
  %3818 = vmatprep.mubr.f32.mxu0 0.0
  %v3819 = vand.u32 %v2982, 4294901760
  %v3820 = vsub.f32 %v2982, %v3819
  %v3821 = vand.u32 %v3820, 4294901760
  %3822 = vmatmul.mubr.f32.gmra.mxu0 %v3821
  %v3823 = vpop.f32.mrf.mxu0
  %v3824 = vadd.f32 %v3617, %v3823
  %v3825 = vpop.f32.mrf.mxu0
  %v3826 = vadd.f32 %v3619, %v3825
  %3827 = vmatprep.mubr.f32.mxu0 0.0
  %v3828 = vand.u32 %v2985, 4294901760
  %v3829 = vsub.f32 %v2985, %v3828
  %v3830 = vand.u32 %v3829, 4294901760
  %3831 = vmatmul.mubr.f32.gmra.mxu0 %v3830
  %v3832 = vpop.f32.mrf.mxu0
  %v3833 = vadd.f32 %v3625, %v3832
  %v3834 = vpop.f32.mrf.mxu0
  %v3835 = vadd.f32 %v3627, %v3834
  %3836 = vmatprep.mubr.f32.mxu0 0.0
  %v3837 = vand.u32 %v2988, 4294901760
  %v3838 = vsub.f32 %v2988, %v3837
  %v3839 = vand.u32 %v3838, 4294901760
  %3840 = vmatmul.mubr.f32.gmra.mxu0 %v3839
  %v3841 = vpop.f32.mrf.mxu0
  %v3842 = vadd.f32 %v3633, %v3841
  %v3843 = vpop.f32.mrf.mxu0
  %v3844 = vadd.f32 %v3635, %v3843
  %3845 = vmatprep.mubr.f32.mxu0 0.0
  %v3846 = vand.u32 %v2991, 4294901760
  %v3847 = vsub.f32 %v2991, %v3846
  %v3848 = vand.u32 %v3847, 4294901760
  %3849 = vmatmul.mubr.f32.gmra.mxu0 %v3848
  %v3850 = vpop.f32.mrf.mxu0
  %v3851 = vadd.f32 %v3641, %v3850
  %v3852 = vpop.f32.mrf.mxu0
  %v3853 = vadd.f32 %v3643, %v3852
  %3854 = vmatprep.mubr.f32.mxu0 0.0
  %v3855 = vand.u32 %v2994, 4294901760
  %v3856 = vsub.f32 %v2994, %v3855
  %v3857 = vand.u32 %v3856, 4294901760
  %3858 = vmatmul.mubr.f32.gmra.mxu0 %v3857
  %v3859 = vpop.f32.mrf.mxu0
  %v3860 = vadd.f32 %v3649, %v3859
  %v3861 = vpop.f32.mrf.mxu0
  %v3862 = vadd.f32 %v3651, %v3861
  %3863 = vmatprep.mubr.f32.mxu0 0.0
  %v3864 = vand.u32 %v2997, 4294901760
  %v3865 = vsub.f32 %v2997, %v3864
  %v3866 = vand.u32 %v3865, 4294901760
  %3867 = vmatmul.mubr.f32.gmra.mxu0 %v3866
  %v3868 = vpop.f32.mrf.mxu0
  %v3869 = vadd.f32 %v3657, %v3868
  %v3870 = vpop.f32.mrf.mxu0
  %v3871 = vadd.f32 %v3659, %v3870
  %3872 = vmatprep.mubr.f32.mxu0 0.0
  %v3873 = vand.u32 %v3000, 4294901760
  %v3874 = vsub.f32 %v3000, %v3873
  %v3875 = vand.u32 %v3874, 4294901760
  %3876 = vmatmul.mubr.f32.gmra.mxu0 %v3875
  %v3877 = vpop.f32.mrf.mxu0
  %v3878 = vadd.f32 %v3665, %v3877
  %v3879 = vpop.f32.mrf.mxu0
  %v3880 = vadd.f32 %v3667, %v3879
  %3881 = vmatprep.mubr.f32.mxu0 0.0
  %v3882 = vand.u32 %v3003, 4294901760
  %v3883 = vsub.f32 %v3003, %v3882
  %v3884 = vand.u32 %v3883, 4294901760
  %3885 = vmatmul.mubr.f32.gmra.mxu0 %v3884
  %v3886 = vpop.f32.mrf.mxu0
  %v3887 = vadd.f32 %v3673, %v3886
  %v3888 = vpop.f32.mrf.mxu0
  %v3889 = vadd.f32 %v3675, %v3888
  %3890 = vmatprep.mubr.f32.mxu0 0.0
  %v3891 = vand.u32 %v3006, 4294901760
  %v3892 = vsub.f32 %v3006, %v3891
  %v3893 = vand.u32 %v3892, 4294901760
  %3894 = vmatmul.mubr.f32.gmra.mxu0 %v3893
  %v3895 = vpop.f32.mrf.mxu0
  %v3896 = vadd.f32 %v3681, %v3895
  %v3897 = vpop.f32.mrf.mxu0
  %v3898 = vadd.f32 %v3683, %v3897
  %3899 = vmatprep.mubr.f32.mxu0 0.0
  %v3900 = vand.u32 %v3009, 4294901760
  %v3901 = vsub.f32 %v3009, %v3900
  %v3902 = vand.u32 %v3901, 4294901760
  %3903 = vmatmul.mubr.f32.gmra.mxu0 %v3902
  %v3904 = vpop.f32.mrf.mxu0
  %v3905 = vadd.f32 %v3689, %v3904
  %v3906 = vpop.f32.mrf.mxu0
  %v3907 = vadd.f32 %v3691, %v3906
  %3908 = vmatprep.mubr.f32.mxu0 0.0
  %v3909 = vand.u32 %v3012, 4294901760
  %v3910 = vsub.f32 %v3012, %v3909
  %v3911 = vand.u32 %v3910, 4294901760
  %3912 = vmatmul.mubr.f32.gmra.mxu0 %v3911
  %v3913 = vpop.f32.mrf.mxu0
  %v3914 = vadd.f32 %v3697, %v3913
  %v3915 = vpop.f32.mrf.mxu0
  %v3916 = vadd.f32 %v3699, %v3915
  %3917 = vmatprep.mubr.f32.mxu0 0.0
  %v3918 = vand.u32 %v3015, 4294901760
  %v3919 = vsub.f32 %v3015, %v3918
  %v3920 = vand.u32 %v3919, 4294901760
  %3921 = vmatmul.mubr.f32.gmra.mxu0 %v3920
  %v3922 = vpop.f32.mrf.mxu0
  %v3923 = vadd.f32 %v3705, %v3922
  %v3924 = vpop.f32.mrf.mxu0
  %v3925 = vadd.f32 %v3707, %v3924
  %3926 = vmatprep.mubr.f32.mxu0 0.0
  %v3927 = vand.u32 %v3018, 4294901760
  %v3928 = vsub.f32 %v3018, %v3927
  %v3929 = vand.u32 %v3928, 4294901760
  %3930 = vmatmul.mubr.f32.gmra.mxu0 %v3929
  %v3931 = vpop.f32.mrf.mxu0
  %v3932 = vadd.f32 %v3713, %v3931
  %v3933 = vpop.f32.mrf.mxu0
  %v3934 = vadd.f32 %v3715, %v3933
  %3935 = vmatprep.mubr.f32.mxu0 0.0
  %v3936 = vand.u32 %v3021, 4294901760
  %v3937 = vsub.f32 %v3021, %v3936
  %v3938 = vand.u32 %v3937, 4294901760
  %3939 = vmatmul.mubr.f32.gmra.mxu0 %v3938
  %v3940 = vpop.f32.mrf.mxu0
  %v3941 = vadd.f32 %v3721, %v3940
  %v3942 = vpop.f32.mrf.mxu0
  %v3943 = vadd.f32 %v3723, %v3942
  %3944 = vmatprep.mubr.f32.mxu0 0.0
  %v3945 = vand.u32 %v3024, 4294901760
  %v3946 = vsub.f32 %v3024, %v3945
  %v3947 = vand.u32 %v3946, 4294901760
  %3948 = vmatmul.mubr.f32.gmra.mxu0 %v3947
  %v3949 = vpop.f32.mrf.mxu0
  %v3950 = vadd.f32 %v3729, %v3949
  %v3951 = vpop.f32.mrf.mxu0
  %v3952 = vadd.f32 %v3731, %v3951
  %3953 = vdwg.mxu0
  %3954 = vmatprep.subr.mxu0 0.0
  %3955 = vmatpush1.msra.mxu0 0.0
  %3956 = vmatprep.subr.mxu0 0.0
  %3957 = vmatpush1.msra.mxu0 0.0
  %3958 = vmatprep.subr.mxu0 0.0
  %3959 = vmatpush1.msra.mxu0 0.0
  %3960 = vmatprep.subr.mxu0 0.0
  %3961 = vmatpush1.msra.mxu0 0.0
  %3962 = vmatprep.subr.mxu0 0.0
  %3963 = vmatpush1.msra.mxu0 0.0
  %3964 = vmatprep.subr.mxu0 0.0
  %3965 = vmatpush1.msra.mxu0 0.0
  %3966 = vmatprep.subr.mxu0 0.0
  %3967 = vmatpush1.msra.mxu0 0.0
  %3968 = vmatprep.subr.mxu0 0.0
  %3969 = vmatpush1.msra.mxu0 0.0
  %3970 = vmatprep.subr.mxu0 0.0
  %3971 = vmatpush1.msra.mxu0 0.0
  %3972 = vmatprep.subr.mxu0 0.0
  %3973 = vmatpush1.msra.mxu0 0.0
  %v3974 = vand.u32 %v2976, 4294901760
  %v3975 = vsub.f32 %v2976, %v3974
  %v3976 = vand.u32 %v3975, 4294901760
  %3977 = vmatprep.subr.mxu0 %v3976
  %v3978 = vand.u32 %v2975, 4294901760
  %v3979 = vsub.f32 %v2975, %v3978
  %v3980 = vand.u32 %v3979, 4294901760
  %3981 = vmatpush1.msra.mxu0 %v3980
  %v3982 = vand.u32 %v2974, 4294901760
  %v3983 = vsub.f32 %v2974, %v3982
  %v3984 = vand.u32 %v3983, 4294901760
  %3985 = vmatprep.subr.mxu0 %v3984
  %v3986 = vand.u32 %v2973, 4294901760
  %v3987 = vsub.f32 %v2973, %v3986
  %v3988 = vand.u32 %v3987, 4294901760
  %3989 = vmatpush1.msra.mxu0 %v3988
  %v3990 = vand.u32 %v2972, 4294901760
  %v3991 = vsub.f32 %v2972, %v3990
  %v3992 = vand.u32 %v3991, 4294901760
  %3993 = vmatprep.subr.mxu0 %v3992
  %v3994 = vand.u32 %v2971, 4294901760
  %v3995 = vsub.f32 %v2971, %v3994
  %v3996 = vand.u32 %v3995, 4294901760
  %3997 = vmatpush1.msra.mxu0 %v3996
  %v3998 = vand.u32 %v2970, 4294901760
  %v3999 = vsub.f32 %v2970, %v3998
  %v4000 = vand.u32 %v3999, 4294901760
  %4001 = vmatprep.subr.mxu0 %v4000
  %v4002 = vand.u32 %v2969, 4294901760
  %v4003 = vsub.f32 %v2969, %v4002
  %v4004 = vand.u32 %v4003, 4294901760
  %4005 = vmatpush1.msra.mxu0 %v4004
  %v4006 = vand.u32 %v2968, 4294901760
  %v4007 = vsub.f32 %v2968, %v4006
  %v4008 = vand.u32 %v4007, 4294901760
  %4009 = vmatprep.subr.mxu0 %v4008
  %v4010 = vand.u32 %v2967, 4294901760
  %v4011 = vsub.f32 %v2967, %v4010
  %v4012 = vand.u32 %v4011, 4294901760
  %4013 = vmatpush1.msra.mxu0 %v4012
  %v4014 = vand.u32 %v2966, 4294901760
  %v4015 = vsub.f32 %v2966, %v4014
  %v4016 = vand.u32 %v4015, 4294901760
  %4017 = vmatprep.subr.mxu0 %v4016
  %v4018 = vand.u32 %v2965, 4294901760
  %v4019 = vsub.f32 %v2965, %v4018
  %v4020 = vand.u32 %v4019, 4294901760
  %4021 = vmatpush1.msra.mxu0 %v4020
  %4022 = vmatprep.subr.mxu0 0.0
  %4023 = vmatpush2.msra.mxu0 0.0
  %4024 = vmatprep.subr.mxu0 0.0
  %4025 = vmatpush2.msra.mxu0 0.0
  %4026 = vmatprep.subr.mxu0 0.0
  %4027 = vmatpush2.msra.mxu0 0.0
  %4028 = vmatprep.subr.mxu0 0.0
  %4029 = vmatpush2.msra.mxu0 0.0
  %4030 = vmatprep.subr.mxu0 0.0
  %4031 = vmatpush2.msra.mxu0 0.0
  %4032 = vmatprep.subr.mxu0 0.0
  %4033 = vmatpush2.msra.mxu0 0.0
  %4034 = vmatprep.subr.mxu0 0.0
  %4035 = vmatpush2.msra.mxu0 0.0
  %4036 = vmatprep.subr.mxu0 0.0
  %4037 = vmatpush2.msra.mxu0 0.0
  %4038 = vmatprep.subr.mxu0 0.0
  %4039 = vmatpush2.msra.mxu0 0.0
  %4040 = vmatprep.subr.mxu0 0.0
  %4041 = vmatpush2.msra.mxu0 0.0
  %4042 = vmatprep.subr.mxu0 0.0
  %4043 = vmatpush2.msra.mxu0 0.0
  %4044 = vmatprep.subr.mxu0 0.0
  %4045 = vmatpush2.msra.mxu0 0.0
  %4046 = vmatprep.subr.mxu0 0.0
  %4047 = vmatpush2.msra.mxu0 0.0
  %4048 = vmatprep.subr.mxu0 0.0
  %4049 = vmatpush2.msra.mxu0 0.0
  %4050 = vmatprep.subr.mxu0 0.0
  %4051 = vmatpush2.msra.mxu0 0.0
  %4052 = vmatprep.subr.mxu0 0.0
  %4053 = vmatpush2.msra.mxu0 0.0
  %4054 = vmatprep.mubr.f32.mxu0 0.0
  %v4055 = vand.u32 %v2979, 4294901760
  %4056 = vmatmul.mubr.f32.gmra.mxu0 %v4055
  %v4057 = vpop.f32.mrf.mxu0
  %v4058 = vadd.f32 %v3815, %v4057
  %v4059 = vpop.f32.mrf.mxu0
  %v4060 = vadd.f32 %v3817, %v4059
  %4061 = vmatprep.mubr.f32.mxu0 0.0
  %v4062 = vand.u32 %v2982, 4294901760
  %4063 = vmatmul.mubr.f32.gmra.mxu0 %v4062
  %v4064 = vpop.f32.mrf.mxu0
  %v4065 = vadd.f32 %v3824, %v4064
  %v4066 = vpop.f32.mrf.mxu0
  %v4067 = vadd.f32 %v3826, %v4066
  %4068 = vmatprep.mubr.f32.mxu0 0.0
  %v4069 = vand.u32 %v2985, 4294901760
  %4070 = vmatmul.mubr.f32.gmra.mxu0 %v4069
  %v4071 = vpop.f32.mrf.mxu0
  %v4072 = vadd.f32 %v3833, %v4071
  %v4073 = vpop.f32.mrf.mxu0
  %v4074 = vadd.f32 %v3835, %v4073
  %4075 = vmatprep.mubr.f32.mxu0 0.0
  %v4076 = vand.u32 %v2988, 4294901760
  %4077 = vmatmul.mubr.f32.gmra.mxu0 %v4076
  %v4078 = vpop.f32.mrf.mxu0
  %v4079 = vadd.f32 %v3842, %v4078
  %v4080 = vpop.f32.mrf.mxu0
  %v4081 = vadd.f32 %v3844, %v4080
  %4082 = vmatprep.mubr.f32.mxu0 0.0
  %v4083 = vand.u32 %v2991, 4294901760
  %4084 = vmatmul.mubr.f32.gmra.mxu0 %v4083
  %v4085 = vpop.f32.mrf.mxu0
  %v4086 = vadd.f32 %v3851, %v4085
  %v4087 = vpop.f32.mrf.mxu0
  %v4088 = vadd.f32 %v3853, %v4087
  %4089 = vmatprep.mubr.f32.mxu0 0.0
  %v4090 = vand.u32 %v2994, 4294901760
  %4091 = vmatmul.mubr.f32.gmra.mxu0 %v4090
  %v4092 = vpop.f32.mrf.mxu0
  %v4093 = vadd.f32 %v3860, %v4092
  %v4094 = vpop.f32.mrf.mxu0
  %v4095 = vadd.f32 %v3862, %v4094
  %4096 = vmatprep.mubr.f32.mxu0 0.0
  %v4097 = vand.u32 %v2997, 4294901760
  %4098 = vmatmul.mubr.f32.gmra.mxu0 %v4097
  %v4099 = vpop.f32.mrf.mxu0
  %v4100 = vadd.f32 %v3869, %v4099
  %v4101 = vpop.f32.mrf.mxu0
  %v4102 = vadd.f32 %v3871, %v4101
  %4103 = vmatprep.mubr.f32.mxu0 0.0
  %v4104 = vand.u32 %v3000, 4294901760
  %4105 = vmatmul.mubr.f32.gmra.mxu0 %v4104
  %v4106 = vpop.f32.mrf.mxu0
  %v4107 = vadd.f32 %v3878, %v4106
  %v4108 = vpop.f32.mrf.mxu0
  %v4109 = vadd.f32 %v3880, %v4108
  %4110 = vmatprep.mubr.f32.mxu0 0.0
  %v4111 = vand.u32 %v3003, 4294901760
  %4112 = vmatmul.mubr.f32.gmra.mxu0 %v4111
  %v4113 = vpop.f32.mrf.mxu0
  %v4114 = vadd.f32 %v3887, %v4113
  %v4115 = vpop.f32.mrf.mxu0
  %v4116 = vadd.f32 %v3889, %v4115
  %4117 = vmatprep.mubr.f32.mxu0 0.0
  %v4118 = vand.u32 %v3006, 4294901760
  %4119 = vmatmul.mubr.f32.gmra.mxu0 %v4118
  %v4120 = vpop.f32.mrf.mxu0
  %v4121 = vadd.f32 %v3896, %v4120
  %v4122 = vpop.f32.mrf.mxu0
  %v4123 = vadd.f32 %v3898, %v4122
  %4124 = vmatprep.mubr.f32.mxu0 0.0
  %v4125 = vand.u32 %v3009, 4294901760
  %4126 = vmatmul.mubr.f32.gmra.mxu0 %v4125
  %v4127 = vpop.f32.mrf.mxu0
  %v4128 = vadd.f32 %v3905, %v4127
  %v4129 = vpop.f32.mrf.mxu0
  %v4130 = vadd.f32 %v3907, %v4129
  %4131 = vmatprep.mubr.f32.mxu0 0.0
  %v4132 = vand.u32 %v3012, 4294901760
  %4133 = vmatmul.mubr.f32.gmra.mxu0 %v4132
  %v4134 = vpop.f32.mrf.mxu0
  %v4135 = vadd.f32 %v3914, %v4134
  %v4136 = vpop.f32.mrf.mxu0
  %v4137 = vadd.f32 %v3916, %v4136
  %4138 = vmatprep.mubr.f32.mxu0 0.0
  %v4139 = vand.u32 %v3015, 4294901760
  %4140 = vmatmul.mubr.f32.gmra.mxu0 %v4139
  %v4141 = vpop.f32.mrf.mxu0
  %v4142 = vadd.f32 %v3923, %v4141
  %v4143 = vpop.f32.mrf.mxu0
  %v4144 = vadd.f32 %v3925, %v4143
  %4145 = vmatprep.mubr.f32.mxu0 0.0
  %v4146 = vand.u32 %v3018, 4294901760
  %4147 = vmatmul.mubr.f32.gmra.mxu0 %v4146
  %v4148 = vpop.f32.mrf.mxu0
  %v4149 = vadd.f32 %v3932, %v4148
  %v4150 = vpop.f32.mrf.mxu0
  %v4151 = vadd.f32 %v3934, %v4150
  %4152 = vmatprep.mubr.f32.mxu0 0.0
  %v4153 = vand.u32 %v3021, 4294901760
  %4154 = vmatmul.mubr.f32.gmra.mxu0 %v4153
  %v4155 = vpop.f32.mrf.mxu0
  %v4156 = vadd.f32 %v3941, %v4155
  %v4157 = vpop.f32.mrf.mxu0
  %v4158 = vadd.f32 %v3943, %v4157
  %4159 = vmatprep.mubr.f32.mxu0 0.0
  %v4160 = vand.u32 %v3024, 4294901760
  %4161 = vmatmul.mubr.f32.gmra.mxu0 %v4160
  %v4162 = vpop.f32.mrf.mxu0
  %v4163 = vadd.f32 %v3950, %v4162
  %v4164 = vpop.f32.mrf.mxu0
  %v4165 = vadd.f32 %v3952, %v4164
  %4166 = vdwg.mxu0
  %4167 = vmatprep.subr.mxu0 0.0
  %4168 = vmatpush1.msra.mxu0 0.0
  %4169 = vmatprep.subr.mxu0 0.0
  %4170 = vmatpush1.msra.mxu0 0.0
  %4171 = vmatprep.subr.mxu0 0.0
  %4172 = vmatpush1.msra.mxu0 0.0
  %4173 = vmatprep.subr.mxu0 0.0
  %4174 = vmatpush1.msra.mxu0 0.0
  %4175 = vmatprep.subr.mxu0 0.0
  %4176 = vmatpush1.msra.mxu0 0.0
  %4177 = vmatprep.subr.mxu0 0.0
  %4178 = vmatpush1.msra.mxu0 0.0
  %4179 = vmatprep.subr.mxu0 0.0
  %4180 = vmatpush1.msra.mxu0 0.0
  %4181 = vmatprep.subr.mxu0 0.0
  %4182 = vmatpush1.msra.mxu0 0.0
  %4183 = vmatprep.subr.mxu0 0.0
  %4184 = vmatpush1.msra.mxu0 0.0
  %4185 = vmatprep.subr.mxu0 0.0
  %4186 = vmatpush1.msra.mxu0 0.0
  %v4187 = vand.u32 %v2976, 4294901760
  %4188 = vmatprep.subr.mxu0 %v4187
  %v4189 = vand.u32 %v2975, 4294901760
  %4190 = vmatpush1.msra.mxu0 %v4189
  %v4191 = vand.u32 %v2974, 4294901760
  %4192 = vmatprep.subr.mxu0 %v4191
  %v4193 = vand.u32 %v2973, 4294901760
  %4194 = vmatpush1.msra.mxu0 %v4193
  %v4195 = vand.u32 %v2972, 4294901760
  %4196 = vmatprep.subr.mxu0 %v4195
  %v4197 = vand.u32 %v2971, 4294901760
  %4198 = vmatpush1.msra.mxu0 %v4197
  %v4199 = vand.u32 %v2970, 4294901760
  %4200 = vmatprep.subr.mxu0 %v4199
  %v4201 = vand.u32 %v2969, 4294901760
  %4202 = vmatpush1.msra.mxu0 %v4201
  %v4203 = vand.u32 %v2968, 4294901760
  %4204 = vmatprep.subr.mxu0 %v4203
  %v4205 = vand.u32 %v2967, 4294901760
  %4206 = vmatpush1.msra.mxu0 %v4205
  %v4207 = vand.u32 %v2966, 4294901760
  %4208 = vmatprep.subr.mxu0 %v4207
  %v4209 = vand.u32 %v2965, 4294901760
  %4210 = vmatpush1.msra.mxu0 %v4209
  %4211 = vmatprep.subr.mxu0 0.0
  %4212 = vmatpush2.msra.mxu0 0.0
  %4213 = vmatprep.subr.mxu0 0.0
  %4214 = vmatpush2.msra.mxu0 0.0
  %4215 = vmatprep.subr.mxu0 0.0
  %4216 = vmatpush2.msra.mxu0 0.0
  %4217 = vmatprep.subr.mxu0 0.0
  %4218 = vmatpush2.msra.mxu0 0.0
  %4219 = vmatprep.subr.mxu0 0.0
  %4220 = vmatpush2.msra.mxu0 0.0
  %4221 = vmatprep.subr.mxu0 0.0
  %4222 = vmatpush2.msra.mxu0 0.0
  %4223 = vmatprep.subr.mxu0 0.0
  %4224 = vmatpush2.msra.mxu0 0.0
  %4225 = vmatprep.subr.mxu0 0.0
  %4226 = vmatpush2.msra.mxu0 0.0
  %4227 = vmatprep.subr.mxu0 0.0
  %4228 = vmatpush2.msra.mxu0 0.0
  %4229 = vmatprep.subr.mxu0 0.0
  %4230 = vmatpush2.msra.mxu0 0.0
  %4231 = vmatprep.subr.mxu0 0.0
  %4232 = vmatpush2.msra.mxu0 0.0
  %4233 = vmatprep.subr.mxu0 0.0
  %4234 = vmatpush2.msra.mxu0 0.0
  %4235 = vmatprep.subr.mxu0 0.0
  %4236 = vmatpush2.msra.mxu0 0.0
  %4237 = vmatprep.subr.mxu0 0.0
  %4238 = vmatpush2.msra.mxu0 0.0
  %4239 = vmatprep.subr.mxu0 0.0
  %4240 = vmatpush2.msra.mxu0 0.0
  %4241 = vmatprep.subr.mxu0 0.0
  %4242 = vmatpush2.msra.mxu0 0.0
  %4243 = vmatprep.mubr.f32.mxu0 0.0
  %v4244 = vand.u32 %v2979, 4294901760
  %4245 = vmatmul.mubr.f32.gmra.mxu0 %v4244
  %v4246 = vpop.f32.mrf.mxu0
  %v4247 = vadd.f32 %v4058, %v4246
  %v4248 = vpop.f32.mrf.mxu0
  %v4249 = vadd.f32 %v4060, %v4248
  %4250 = vmatprep.mubr.f32.mxu0 0.0
  %v4251 = vand.u32 %v2982, 4294901760
  %4252 = vmatmul.mubr.f32.gmra.mxu0 %v4251
  %v4253 = vpop.f32.mrf.mxu0
  %v4254 = vadd.f32 %v4065, %v4253
  %v4255 = vpop.f32.mrf.mxu0
  %v4256 = vadd.f32 %v4067, %v4255
  %4257 = vmatprep.mubr.f32.mxu0 0.0
  %v4258 = vand.u32 %v2985, 4294901760
  %4259 = vmatmul.mubr.f32.gmra.mxu0 %v4258
  %v4260 = vpop.f32.mrf.mxu0
  %v4261 = vadd.f32 %v4072, %v4260
  %v4262 = vpop.f32.mrf.mxu0
  %v4263 = vadd.f32 %v4074, %v4262
  %4264 = vmatprep.mubr.f32.mxu0 0.0
  %v4265 = vand.u32 %v2988, 4294901760
  %4266 = vmatmul.mubr.f32.gmra.mxu0 %v4265
  %v4267 = vpop.f32.mrf.mxu0
  %v4268 = vadd.f32 %v4079, %v4267
  %v4269 = vpop.f32.mrf.mxu0
  %v4270 = vadd.f32 %v4081, %v4269
  %4271 = vmatprep.mubr.f32.mxu0 0.0
  %v4272 = vand.u32 %v2991, 4294901760
  %4273 = vmatmul.mubr.f32.gmra.mxu0 %v4272
  %v4274 = vpop.f32.mrf.mxu0
  %v4275 = vadd.f32 %v4086, %v4274
  %v4276 = vpop.f32.mrf.mxu0
  %v4277 = vadd.f32 %v4088, %v4276
  %4278 = vmatprep.mubr.f32.mxu0 0.0
  %v4279 = vand.u32 %v2994, 4294901760
  %4280 = vmatmul.mubr.f32.gmra.mxu0 %v4279
  %v4281 = vpop.f32.mrf.mxu0
  %v4282 = vadd.f32 %v4093, %v4281
  %v4283 = vpop.f32.mrf.mxu0
  %v4284 = vadd.f32 %v4095, %v4283
  %4285 = vmatprep.mubr.f32.mxu0 0.0
  %v4286 = vand.u32 %v2997, 4294901760
  %4287 = vmatmul.mubr.f32.gmra.mxu0 %v4286
  %v4288 = vpop.f32.mrf.mxu0
  %v4289 = vadd.f32 %v4100, %v4288
  %v4290 = vpop.f32.mrf.mxu0
  %v4291 = vadd.f32 %v4102, %v4290
  %4292 = vmatprep.mubr.f32.mxu0 0.0
  %v4293 = vand.u32 %v3000, 4294901760
  %4294 = vmatmul.mubr.f32.gmra.mxu0 %v4293
  %v4295 = vpop.f32.mrf.mxu0
  %v4296 = vadd.f32 %v4107, %v4295
  %v4297 = vpop.f32.mrf.mxu0
  %v4298 = vadd.f32 %v4109, %v4297
  %4299 = vmatprep.mubr.f32.mxu0 0.0
  %v4300 = vand.u32 %v3003, 4294901760
  %4301 = vmatmul.mubr.f32.gmra.mxu0 %v4300
  %v4302 = vpop.f32.mrf.mxu0
  %v4303 = vadd.f32 %v4114, %v4302
  %v4304 = vpop.f32.mrf.mxu0
  %v4305 = vadd.f32 %v4116, %v4304
  %4306 = vmatprep.mubr.f32.mxu0 0.0
  %v4307 = vand.u32 %v3006, 4294901760
  %4308 = vmatmul.mubr.f32.gmra.mxu0 %v4307
  %v4309 = vpop.f32.mrf.mxu0
  %v4310 = vadd.f32 %v4121, %v4309
  %v4311 = vpop.f32.mrf.mxu0
  %v4312 = vadd.f32 %v4123, %v4311
  %4313 = vmatprep.mubr.f32.mxu0 0.0
  %v4314 = vand.u32 %v3009, 4294901760
  %4315 = vmatmul.mubr.f32.gmra.mxu0 %v4314
  %v4316 = vpop.f32.mrf.mxu0
  %v4317 = vadd.f32 %v4128, %v4316
  %v4318 = vpop.f32.mrf.mxu0
  %v4319 = vadd.f32 %v4130, %v4318
  %4320 = vmatprep.mubr.f32.mxu0 0.0
  %v4321 = vand.u32 %v3012, 4294901760
  %4322 = vmatmul.mubr.f32.gmra.mxu0 %v4321
  %v4323 = vpop.f32.mrf.mxu0
  %v4324 = vadd.f32 %v4135, %v4323
  %v4325 = vpop.f32.mrf.mxu0
  %v4326 = vadd.f32 %v4137, %v4325
  %4327 = vmatprep.mubr.f32.mxu0 0.0
  %v4328 = vand.u32 %v3015, 4294901760
  %4329 = vmatmul.mubr.f32.gmra.mxu0 %v4328
  %v4330 = vpop.f32.mrf.mxu0
  %v4331 = vadd.f32 %v4142, %v4330
  %v4332 = vpop.f32.mrf.mxu0
  %v4333 = vadd.f32 %v4144, %v4332
  %4334 = vmatprep.mubr.f32.mxu0 0.0
  %v4335 = vand.u32 %v3018, 4294901760
  %4336 = vmatmul.mubr.f32.gmra.mxu0 %v4335
  %v4337 = vpop.f32.mrf.mxu0
  %v4338 = vadd.f32 %v4149, %v4337
  %v4339 = vpop.f32.mrf.mxu0
  %v4340 = vadd.f32 %v4151, %v4339
  %4341 = vmatprep.mubr.f32.mxu0 0.0
  %v4342 = vand.u32 %v3021, 4294901760
  %4343 = vmatmul.mubr.f32.gmra.mxu0 %v4342
  %v4344 = vpop.f32.mrf.mxu0
  %v4345 = vadd.f32 %v4156, %v4344
  %v4346 = vpop.f32.mrf.mxu0
  %v4347 = vadd.f32 %v4158, %v4346
  %4348 = vmatprep.mubr.f32.mxu0 0.0
  %v4349 = vand.u32 %v3024, 4294901760
  %4350 = vmatmul.mubr.f32.gmra.mxu0 %v4349
  %v4351 = vpop.f32.mrf.mxu0
  %v4352 = vadd.f32 %v4163, %v4351
  %v4353 = vpop.f32.mrf.mxu0
  %v4354 = vadd.f32 %v4165, %v4353
  %4355 = vdwg.mxu0
  %v4356 = vadd.s32 %v24, 128
  %vm4357 = vcmp.lt.s32.totalorder %v24, 48
  %vm4358 = vcmp.lt.s32.totalorder %v4356, 48
  %v4359 = vsel %vm4357, 1.0, 0.0
  %v4360 = vsel %vm4358, 1.0, 0.0
  %v4361 = vld [vmem:[%s1] sm:$0xff]
  %v4362 = vld [vmem:[%s1 + $0x8] sm:$0xff]
  %v4363 = vld [vmem:[%s1 + $0x10] sm:$0xff]
  %v4364 = vld [vmem:[%s1 + $0x18] sm:$0xff]
  %v4365 = vld [vmem:[%s1 + $0x20] sm:$0xff]
  %v4366 = vld [vmem:[%s1 + $0x28] sm:$0xff]
  %v4367 = vld [vmem:[%s1 + $0x30] sm:$0xff]
  %v4368 = vld [vmem:[%s1 + $0x38] sm:$0xff]
  %v4369 = vld [vmem:[%s1 + $0x40] sm:$0xff]
  %v4370 = vld [vmem:[%s1 + $0x48] sm:$0xff]
  %v4371 = vld [vmem:[%s1 + $0x50] sm:$0xff]
  %v4372 = vld [vmem:[%s1 + $0x58] sm:$0xff]
  %v4373 = vld [vmem:[%s1 + $0x60] sm:$0xff]
  %v4374 = vld [vmem:[%s1 + $0x68] sm:$0xff]
  %v4375 = vld [vmem:[%s1 + $0x70] sm:$0xff]
  %v4376 = vld [vmem:[%s1 + $0x78] sm:$0xff]
  %v4377 = vld [vmem:[%s4] sm:$0xff]
  %v4378 = vld [vmem:[%s4 + $0x8] sm:$0xff]
  %v4379 = vld [vmem:[%s4 + $0x10] sm:$0x1]
  %v4380 = vld [vmem:[%s4 + $0x18] sm:$0x1]
  %vm4381 = vcmask 72704
  %v4383 = vsel %vm4381, %v4361, 0
  %v4386 = vsel %vm4381, %v4362, 0
  %v4389 = vsel %vm4381, %v4363, 0
  %v4392 = vsel %vm4381, %v4364, 0
  %v4395 = vsel %vm4381, %v4365, 0
  %v4398 = vsel %vm4381, %v4366, 0
  %v4401 = vsel %vm4381, %v4367, 0
  %v4404 = vsel %vm4381, %v4368, 0
  %v4407 = vsel %vm4381, %v4369, 0
  %v4410 = vsel %vm4381, %v4370, 0
  %v4413 = vsel %vm4381, %v4371, 0
  %v4416 = vsel %vm4381, %v4372, 0
  %v4419 = vsel %vm4381, %v4373, 0
  %v4422 = vsel %vm4381, %v4374, 0
  %v4425 = vsel %vm4381, %v4375, 0
  %v4428 = vsel %vm4381, %v4376, 0
  %vm4430 = vcmask 1040384
  %v4432 = vsel %vm4430, %v4379, 0
  %v4435 = vsel %vm4430, %v4380, 0
  %4437 = vmatprep.subr.mxu0 0.0
  %4438 = vmatpush1.msra.mxu0 0.0
  %4439 = vmatprep.subr.mxu0 0.0
  %4440 = vmatpush1.msra.mxu0 0.0
  %4441 = vmatprep.subr.mxu0 0.0
  %4442 = vmatpush1.msra.mxu0 0.0
  %4443 = vmatprep.subr.mxu0 0.0
  %4444 = vmatpush1.msra.mxu0 0.0
  %4445 = vmatprep.subr.mxu0 0.0
  %4446 = vmatpush1.msra.mxu0 0.0
  %4447 = vmatprep.subr.mxu0 0.0
  %4448 = vmatpush1.msra.mxu0 0.0
  %4449 = vmatprep.subr.mxu0 0.0
  %4450 = vmatpush1.msra.mxu0 0.0
  %4451 = vmatprep.subr.mxu0 0.0
  %4452 = vmatpush1.msra.mxu0 0.0
  %4453 = vmatprep.subr.mxu0 0.0
  %4454 = vmatpush1.msra.mxu0 0.0
  %4455 = vmatprep.subr.mxu0 0.0
  %4456 = vmatpush1.msra.mxu0 0.0
  %4457 = vmatprep.subr.mxu0 0.0
  %4458 = vmatpush1.msra.mxu0 0.0
  %4459 = vmatprep.subr.mxu0 0.0
  %4460 = vmatpush1.msra.mxu0 0.0
  %4461 = vmatprep.subr.mxu0 0.0
  %4462 = vmatpush1.msra.mxu0 0.0
  %4463 = vmatprep.subr.mxu0 0.0
  %4464 = vmatpush1.msra.mxu0 0.0
  %v4465 = vand.u32 %v4435, 4294901760
  %4466 = vmatprep.subr.mxu0 %v4465
  %v4467 = vand.u32 %v4432, 4294901760
  %4468 = vmatpush1.msra.mxu0 %v4467
  %v4469 = vand.u32 %v4378, 4294901760
  %4470 = vmatprep.subr.mxu0 %v4469
  %v4471 = vand.u32 %v4377, 4294901760
  %4472 = vmatpush1.msra.mxu0 %v4471
  %4473 = vmatprep.subr.mxu0 0.0
  %4474 = vmatpush2.msra.mxu0 0.0
  %4475 = vmatprep.subr.mxu0 0.0
  %4476 = vmatpush2.msra.mxu0 0.0
  %4477 = vmatprep.subr.mxu0 0.0
  %4478 = vmatpush2.msra.mxu0 0.0
  %4479 = vmatprep.subr.mxu0 0.0
  %4480 = vmatpush2.msra.mxu0 0.0
  %4481 = vmatprep.subr.mxu0 0.0
  %4482 = vmatpush2.msra.mxu0 0.0
  %4483 = vmatprep.subr.mxu0 0.0
  %4484 = vmatpush2.msra.mxu0 0.0
  %4485 = vmatprep.subr.mxu0 0.0
  %4486 = vmatpush2.msra.mxu0 0.0
  %4487 = vmatprep.subr.mxu0 0.0
  %4488 = vmatpush2.msra.mxu0 0.0
  %4489 = vmatprep.subr.mxu0 0.0
  %4490 = vmatpush2.msra.mxu0 0.0
  %4491 = vmatprep.subr.mxu0 0.0
  %4492 = vmatpush2.msra.mxu0 0.0
  %4493 = vmatprep.subr.mxu0 0.0
  %4494 = vmatpush2.msra.mxu0 0.0
  %4495 = vmatprep.subr.mxu0 0.0
  %4496 = vmatpush2.msra.mxu0 0.0
  %4497 = vmatprep.subr.mxu0 0.0
  %4498 = vmatpush2.msra.mxu0 0.0
  %4499 = vmatprep.subr.mxu0 0.0
  %4500 = vmatpush2.msra.mxu0 0.0
  %4501 = vmatprep.subr.mxu0 0.0
  %4502 = vmatpush2.msra.mxu0 0.0
  %4503 = vmatprep.subr.mxu0 0.0
  %4504 = vmatpush2.msra.mxu0 0.0
  %4505 = vmatprep.mubr.f32.mxu0 0.0
  %v4506 = vand.u32 %v4383, 4294901760
  %v4507 = vsub.f32 %v4383, %v4506
  %v4508 = vand.u32 %v4507, 4294901760
  %v4509 = vsub.f32 %v4507, %v4508
  %v4510 = vand.u32 %v4509, 4294901760
  %4511 = vmatmul.mubr.f32.gmra.mxu0 %v4510
  %v4512 = vpop.f32.mrf.mxu0
  %v4513 = vadd.f32 %v4359, %v4512
  %v4514 = vpop.f32.mrf.mxu0
  %v4515 = vadd.f32 %v4360, %v4514
  %4516 = vmatprep.mubr.f32.mxu0 0.0
  %v4517 = vand.u32 %v4386, 4294901760
  %v4518 = vsub.f32 %v4386, %v4517
  %v4519 = vand.u32 %v4518, 4294901760
  %v4520 = vsub.f32 %v4518, %v4519
  %v4521 = vand.u32 %v4520, 4294901760
  %4522 = vmatmul.mubr.f32.gmra.mxu0 %v4521
  %v4523 = vpop.f32.mrf.mxu0
  %v4524 = vadd.f32 %v4359, %v4523
  %v4525 = vpop.f32.mrf.mxu0
  %v4526 = vadd.f32 %v4360, %v4525
  %4527 = vmatprep.mubr.f32.mxu0 0.0
  %v4528 = vand.u32 %v4389, 4294901760
  %v4529 = vsub.f32 %v4389, %v4528
  %v4530 = vand.u32 %v4529, 4294901760
  %v4531 = vsub.f32 %v4529, %v4530
  %v4532 = vand.u32 %v4531, 4294901760
  %4533 = vmatmul.mubr.f32.gmra.mxu0 %v4532
  %v4534 = vpop.f32.mrf.mxu0
  %v4535 = vadd.f32 %v4359, %v4534
  %v4536 = vpop.f32.mrf.mxu0
  %v4537 = vadd.f32 %v4360, %v4536
  %4538 = vmatprep.mubr.f32.mxu0 0.0
  %v4539 = vand.u32 %v4392, 4294901760
  %v4540 = vsub.f32 %v4392, %v4539
  %v4541 = vand.u32 %v4540, 4294901760
  %v4542 = vsub.f32 %v4540, %v4541
  %v4543 = vand.u32 %v4542, 4294901760
  %4544 = vmatmul.mubr.f32.gmra.mxu0 %v4543
  %v4545 = vpop.f32.mrf.mxu0
  %v4546 = vadd.f32 %v4359, %v4545
  %v4547 = vpop.f32.mrf.mxu0
  %v4548 = vadd.f32 %v4360, %v4547
  %4549 = vmatprep.mubr.f32.mxu0 0.0
  %v4550 = vand.u32 %v4395, 4294901760
  %v4551 = vsub.f32 %v4395, %v4550
  %v4552 = vand.u32 %v4551, 4294901760
  %v4553 = vsub.f32 %v4551, %v4552
  %v4554 = vand.u32 %v4553, 4294901760
  %4555 = vmatmul.mubr.f32.gmra.mxu0 %v4554
  %v4556 = vpop.f32.mrf.mxu0
  %v4557 = vadd.f32 %v4359, %v4556
  %v4558 = vpop.f32.mrf.mxu0
  %v4559 = vadd.f32 %v4360, %v4558
  %4560 = vmatprep.mubr.f32.mxu0 0.0
  %v4561 = vand.u32 %v4398, 4294901760
  %v4562 = vsub.f32 %v4398, %v4561
  %v4563 = vand.u32 %v4562, 4294901760
  %v4564 = vsub.f32 %v4562, %v4563
  %v4565 = vand.u32 %v4564, 4294901760
  %4566 = vmatmul.mubr.f32.gmra.mxu0 %v4565
  %v4567 = vpop.f32.mrf.mxu0
  %v4568 = vadd.f32 %v4359, %v4567
  %v4569 = vpop.f32.mrf.mxu0
  %v4570 = vadd.f32 %v4360, %v4569
  %4571 = vmatprep.mubr.f32.mxu0 0.0
  %v4572 = vand.u32 %v4401, 4294901760
  %v4573 = vsub.f32 %v4401, %v4572
  %v4574 = vand.u32 %v4573, 4294901760
  %v4575 = vsub.f32 %v4573, %v4574
  %v4576 = vand.u32 %v4575, 4294901760
  %4577 = vmatmul.mubr.f32.gmra.mxu0 %v4576
  %v4578 = vpop.f32.mrf.mxu0
  %v4579 = vadd.f32 %v4359, %v4578
  %v4580 = vpop.f32.mrf.mxu0
  %v4581 = vadd.f32 %v4360, %v4580
  %4582 = vmatprep.mubr.f32.mxu0 0.0
  %v4583 = vand.u32 %v4404, 4294901760
  %v4584 = vsub.f32 %v4404, %v4583
  %v4585 = vand.u32 %v4584, 4294901760
  %v4586 = vsub.f32 %v4584, %v4585
  %v4587 = vand.u32 %v4586, 4294901760
  %4588 = vmatmul.mubr.f32.gmra.mxu0 %v4587
  %v4589 = vpop.f32.mrf.mxu0
  %v4590 = vadd.f32 %v4359, %v4589
  %v4591 = vpop.f32.mrf.mxu0
  %v4592 = vadd.f32 %v4360, %v4591
  %4593 = vmatprep.mubr.f32.mxu0 0.0
  %v4594 = vand.u32 %v4407, 4294901760
  %v4595 = vsub.f32 %v4407, %v4594
  %v4596 = vand.u32 %v4595, 4294901760
  %v4597 = vsub.f32 %v4595, %v4596
  %v4598 = vand.u32 %v4597, 4294901760
  %4599 = vmatmul.mubr.f32.gmra.mxu0 %v4598
  %v4600 = vpop.f32.mrf.mxu0
  %v4601 = vadd.f32 %v4359, %v4600
  %v4602 = vpop.f32.mrf.mxu0
  %v4603 = vadd.f32 %v4360, %v4602
  %4604 = vmatprep.mubr.f32.mxu0 0.0
  %v4605 = vand.u32 %v4410, 4294901760
  %v4606 = vsub.f32 %v4410, %v4605
  %v4607 = vand.u32 %v4606, 4294901760
  %v4608 = vsub.f32 %v4606, %v4607
  %v4609 = vand.u32 %v4608, 4294901760
  %4610 = vmatmul.mubr.f32.gmra.mxu0 %v4609
  %v4611 = vpop.f32.mrf.mxu0
  %v4612 = vadd.f32 %v4359, %v4611
  %v4613 = vpop.f32.mrf.mxu0
  %v4614 = vadd.f32 %v4360, %v4613
  %4615 = vmatprep.mubr.f32.mxu0 0.0
  %v4616 = vand.u32 %v4413, 4294901760
  %v4617 = vsub.f32 %v4413, %v4616
  %v4618 = vand.u32 %v4617, 4294901760
  %v4619 = vsub.f32 %v4617, %v4618
  %v4620 = vand.u32 %v4619, 4294901760
  %4621 = vmatmul.mubr.f32.gmra.mxu0 %v4620
  %v4622 = vpop.f32.mrf.mxu0
  %v4623 = vadd.f32 %v4359, %v4622
  %v4624 = vpop.f32.mrf.mxu0
  %v4625 = vadd.f32 %v4360, %v4624
  %4626 = vmatprep.mubr.f32.mxu0 0.0
  %v4627 = vand.u32 %v4416, 4294901760
  %v4628 = vsub.f32 %v4416, %v4627
  %v4629 = vand.u32 %v4628, 4294901760
  %v4630 = vsub.f32 %v4628, %v4629
  %v4631 = vand.u32 %v4630, 4294901760
  %4632 = vmatmul.mubr.f32.gmra.mxu0 %v4631
  %v4633 = vpop.f32.mrf.mxu0
  %v4634 = vadd.f32 %v4359, %v4633
  %v4635 = vpop.f32.mrf.mxu0
  %v4636 = vadd.f32 %v4360, %v4635
  %4637 = vmatprep.mubr.f32.mxu0 0.0
  %v4638 = vand.u32 %v4419, 4294901760
  %v4639 = vsub.f32 %v4419, %v4638
  %v4640 = vand.u32 %v4639, 4294901760
  %v4641 = vsub.f32 %v4639, %v4640
  %v4642 = vand.u32 %v4641, 4294901760
  %4643 = vmatmul.mubr.f32.gmra.mxu0 %v4642
  %v4644 = vpop.f32.mrf.mxu0
  %v4645 = vadd.f32 %v4359, %v4644
  %v4646 = vpop.f32.mrf.mxu0
  %v4647 = vadd.f32 %v4360, %v4646
  %4648 = vmatprep.mubr.f32.mxu0 0.0
  %v4649 = vand.u32 %v4422, 4294901760
  %v4650 = vsub.f32 %v4422, %v4649
  %v4651 = vand.u32 %v4650, 4294901760
  %v4652 = vsub.f32 %v4650, %v4651
  %v4653 = vand.u32 %v4652, 4294901760
  %4654 = vmatmul.mubr.f32.gmra.mxu0 %v4653
  %v4655 = vpop.f32.mrf.mxu0
  %v4656 = vadd.f32 %v4359, %v4655
  %v4657 = vpop.f32.mrf.mxu0
  %v4658 = vadd.f32 %v4360, %v4657
  %4659 = vmatprep.mubr.f32.mxu0 0.0
  %v4660 = vand.u32 %v4425, 4294901760
  %v4661 = vsub.f32 %v4425, %v4660
  %v4662 = vand.u32 %v4661, 4294901760
  %v4663 = vsub.f32 %v4661, %v4662
  %v4664 = vand.u32 %v4663, 4294901760
  %4665 = vmatmul.mubr.f32.gmra.mxu0 %v4664
  %v4666 = vpop.f32.mrf.mxu0
  %v4667 = vadd.f32 %v4359, %v4666
  %v4668 = vpop.f32.mrf.mxu0
  %v4669 = vadd.f32 %v4360, %v4668
  %4670 = vmatprep.mubr.f32.mxu0 0.0
  %v4671 = vand.u32 %v4428, 4294901760
  %v4672 = vsub.f32 %v4428, %v4671
  %v4673 = vand.u32 %v4672, 4294901760
  %v4674 = vsub.f32 %v4672, %v4673
  %v4675 = vand.u32 %v4674, 4294901760
  %4676 = vmatmul.mubr.f32.gmra.mxu0 %v4675
  %v4677 = vpop.f32.mrf.mxu0
  %v4678 = vadd.f32 %v4359, %v4677
  %v4679 = vpop.f32.mrf.mxu0
  %v4680 = vadd.f32 %v4360, %v4679
  %4681 = vdwg.mxu0
  %4682 = vmatprep.subr.mxu0 0.0
  %4683 = vmatpush1.msra.mxu0 0.0
  %4684 = vmatprep.subr.mxu0 0.0
  %4685 = vmatpush1.msra.mxu0 0.0
  %4686 = vmatprep.subr.mxu0 0.0
  %4687 = vmatpush1.msra.mxu0 0.0
  %4688 = vmatprep.subr.mxu0 0.0
  %4689 = vmatpush1.msra.mxu0 0.0
  %4690 = vmatprep.subr.mxu0 0.0
  %4691 = vmatpush1.msra.mxu0 0.0
  %4692 = vmatprep.subr.mxu0 0.0
  %4693 = vmatpush1.msra.mxu0 0.0
  %4694 = vmatprep.subr.mxu0 0.0
  %4695 = vmatpush1.msra.mxu0 0.0
  %4696 = vmatprep.subr.mxu0 0.0
  %4697 = vmatpush1.msra.mxu0 0.0
  %4698 = vmatprep.subr.mxu0 0.0
  %4699 = vmatpush1.msra.mxu0 0.0
  %4700 = vmatprep.subr.mxu0 0.0
  %4701 = vmatpush1.msra.mxu0 0.0
  %4702 = vmatprep.subr.mxu0 0.0
  %4703 = vmatpush1.msra.mxu0 0.0
  %4704 = vmatprep.subr.mxu0 0.0
  %4705 = vmatpush1.msra.mxu0 0.0
  %4706 = vmatprep.subr.mxu0 0.0
  %4707 = vmatpush1.msra.mxu0 0.0
  %4708 = vmatprep.subr.mxu0 0.0
  %4709 = vmatpush1.msra.mxu0 0.0
  %v4710 = vand.u32 %v4435, 4294901760
  %v4711 = vsub.f32 %v4435, %v4710
  %v4712 = vand.u32 %v4711, 4294901760
  %v4713 = vsub.f32 %v4711, %v4712
  %v4714 = vand.u32 %v4713, 4294901760
  %4715 = vmatprep.subr.mxu0 %v4714
  %v4716 = vand.u32 %v4432, 4294901760
  %v4717 = vsub.f32 %v4432, %v4716
  %v4718 = vand.u32 %v4717, 4294901760
  %v4719 = vsub.f32 %v4717, %v4718
  %v4720 = vand.u32 %v4719, 4294901760
  %4721 = vmatpush1.msra.mxu0 %v4720
  %v4722 = vand.u32 %v4378, 4294901760
  %v4723 = vsub.f32 %v4378, %v4722
  %v4724 = vand.u32 %v4723, 4294901760
  %v4725 = vsub.f32 %v4723, %v4724
  %v4726 = vand.u32 %v4725, 4294901760
  %4727 = vmatprep.subr.mxu0 %v4726
  %v4728 = vand.u32 %v4377, 4294901760
  %v4729 = vsub.f32 %v4377, %v4728
  %v4730 = vand.u32 %v4729, 4294901760
  %v4731 = vsub.f32 %v4729, %v4730
  %v4732 = vand.u32 %v4731, 4294901760
  %4733 = vmatpush1.msra.mxu0 %v4732
  %4734 = vmatprep.subr.mxu0 0.0
  %4735 = vmatpush2.msra.mxu0 0.0
  %4736 = vmatprep.subr.mxu0 0.0
  %4737 = vmatpush2.msra.mxu0 0.0
  %4738 = vmatprep.subr.mxu0 0.0
  %4739 = vmatpush2.msra.mxu0 0.0
  %4740 = vmatprep.subr.mxu0 0.0
  %4741 = vmatpush2.msra.mxu0 0.0
  %4742 = vmatprep.subr.mxu0 0.0
  %4743 = vmatpush2.msra.mxu0 0.0
  %4744 = vmatprep.subr.mxu0 0.0
  %4745 = vmatpush2.msra.mxu0 0.0
  %4746 = vmatprep.subr.mxu0 0.0
  %4747 = vmatpush2.msra.mxu0 0.0
  %4748 = vmatprep.subr.mxu0 0.0
  %4749 = vmatpush2.msra.mxu0 0.0
  %4750 = vmatprep.subr.mxu0 0.0
  %4751 = vmatpush2.msra.mxu0 0.0
  %4752 = vmatprep.subr.mxu0 0.0
  %4753 = vmatpush2.msra.mxu0 0.0
  %4754 = vmatprep.subr.mxu0 0.0
  %4755 = vmatpush2.msra.mxu0 0.0
  %4756 = vmatprep.subr.mxu0 0.0
  %4757 = vmatpush2.msra.mxu0 0.0
  %4758 = vmatprep.subr.mxu0 0.0
  %4759 = vmatpush2.msra.mxu0 0.0
  %4760 = vmatprep.subr.mxu0 0.0
  %4761 = vmatpush2.msra.mxu0 0.0
  %4762 = vmatprep.subr.mxu0 0.0
  %4763 = vmatpush2.msra.mxu0 0.0
  %4764 = vmatprep.subr.mxu0 0.0
  %4765 = vmatpush2.msra.mxu0 0.0
  %4766 = vmatprep.mubr.f32.mxu0 0.0
  %v4767 = vand.u32 %v4383, 4294901760
  %4768 = vmatmul.mubr.f32.gmra.mxu0 %v4767
  %v4769 = vpop.f32.mrf.mxu0
  %v4770 = vadd.f32 %v4513, %v4769
  %v4771 = vpop.f32.mrf.mxu0
  %v4772 = vadd.f32 %v4515, %v4771
  %4773 = vmatprep.mubr.f32.mxu0 0.0
  %v4774 = vand.u32 %v4386, 4294901760
  %4775 = vmatmul.mubr.f32.gmra.mxu0 %v4774
  %v4776 = vpop.f32.mrf.mxu0
  %v4777 = vadd.f32 %v4524, %v4776
  %v4778 = vpop.f32.mrf.mxu0
  %v4779 = vadd.f32 %v4526, %v4778
  %4780 = vmatprep.mubr.f32.mxu0 0.0
  %v4781 = vand.u32 %v4389, 4294901760
  %4782 = vmatmul.mubr.f32.gmra.mxu0 %v4781
  %v4783 = vpop.f32.mrf.mxu0
  %v4784 = vadd.f32 %v4535, %v4783
  %v4785 = vpop.f32.mrf.mxu0
  %v4786 = vadd.f32 %v4537, %v4785
  %4787 = vmatprep.mubr.f32.mxu0 0.0
  %v4788 = vand.u32 %v4392, 4294901760
  %4789 = vmatmul.mubr.f32.gmra.mxu0 %v4788
  %v4790 = vpop.f32.mrf.mxu0
  %v4791 = vadd.f32 %v4546, %v4790
  %v4792 = vpop.f32.mrf.mxu0
  %v4793 = vadd.f32 %v4548, %v4792
  %4794 = vmatprep.mubr.f32.mxu0 0.0
  %v4795 = vand.u32 %v4395, 4294901760
  %4796 = vmatmul.mubr.f32.gmra.mxu0 %v4795
  %v4797 = vpop.f32.mrf.mxu0
  %v4798 = vadd.f32 %v4557, %v4797
  %v4799 = vpop.f32.mrf.mxu0
  %v4800 = vadd.f32 %v4559, %v4799
  %4801 = vmatprep.mubr.f32.mxu0 0.0
  %v4802 = vand.u32 %v4398, 4294901760
  %4803 = vmatmul.mubr.f32.gmra.mxu0 %v4802
  %v4804 = vpop.f32.mrf.mxu0
  %v4805 = vadd.f32 %v4568, %v4804
  %v4806 = vpop.f32.mrf.mxu0
  %v4807 = vadd.f32 %v4570, %v4806
  %4808 = vmatprep.mubr.f32.mxu0 0.0
  %v4809 = vand.u32 %v4401, 4294901760
  %4810 = vmatmul.mubr.f32.gmra.mxu0 %v4809
  %v4811 = vpop.f32.mrf.mxu0
  %v4812 = vadd.f32 %v4579, %v4811
  %v4813 = vpop.f32.mrf.mxu0
  %v4814 = vadd.f32 %v4581, %v4813
  %4815 = vmatprep.mubr.f32.mxu0 0.0
  %v4816 = vand.u32 %v4404, 4294901760
  %4817 = vmatmul.mubr.f32.gmra.mxu0 %v4816
  %v4818 = vpop.f32.mrf.mxu0
  %v4819 = vadd.f32 %v4590, %v4818
  %v4820 = vpop.f32.mrf.mxu0
  %v4821 = vadd.f32 %v4592, %v4820
  %4822 = vmatprep.mubr.f32.mxu0 0.0
  %v4823 = vand.u32 %v4407, 4294901760
  %4824 = vmatmul.mubr.f32.gmra.mxu0 %v4823
  %v4825 = vpop.f32.mrf.mxu0
  %v4826 = vadd.f32 %v4601, %v4825
  %v4827 = vpop.f32.mrf.mxu0
  %v4828 = vadd.f32 %v4603, %v4827
  %4829 = vmatprep.mubr.f32.mxu0 0.0
  %v4830 = vand.u32 %v4410, 4294901760
  %4831 = vmatmul.mubr.f32.gmra.mxu0 %v4830
  %v4832 = vpop.f32.mrf.mxu0
  %v4833 = vadd.f32 %v4612, %v4832
  %v4834 = vpop.f32.mrf.mxu0
  %v4835 = vadd.f32 %v4614, %v4834
  %4836 = vmatprep.mubr.f32.mxu0 0.0
  %v4837 = vand.u32 %v4413, 4294901760
  %4838 = vmatmul.mubr.f32.gmra.mxu0 %v4837
  %v4839 = vpop.f32.mrf.mxu0
  %v4840 = vadd.f32 %v4623, %v4839
  %v4841 = vpop.f32.mrf.mxu0
  %v4842 = vadd.f32 %v4625, %v4841
  %4843 = vmatprep.mubr.f32.mxu0 0.0
  %v4844 = vand.u32 %v4416, 4294901760
  %4845 = vmatmul.mubr.f32.gmra.mxu0 %v4844
  %v4846 = vpop.f32.mrf.mxu0
  %v4847 = vadd.f32 %v4634, %v4846
  %v4848 = vpop.f32.mrf.mxu0
  %v4849 = vadd.f32 %v4636, %v4848
  %4850 = vmatprep.mubr.f32.mxu0 0.0
  %v4851 = vand.u32 %v4419, 4294901760
  %4852 = vmatmul.mubr.f32.gmra.mxu0 %v4851
  %v4853 = vpop.f32.mrf.mxu0
  %v4854 = vadd.f32 %v4645, %v4853
  %v4855 = vpop.f32.mrf.mxu0
  %v4856 = vadd.f32 %v4647, %v4855
  %4857 = vmatprep.mubr.f32.mxu0 0.0
  %v4858 = vand.u32 %v4422, 4294901760
  %4859 = vmatmul.mubr.f32.gmra.mxu0 %v4858
  %v4860 = vpop.f32.mrf.mxu0
  %v4861 = vadd.f32 %v4656, %v4860
  %v4862 = vpop.f32.mrf.mxu0
  %v4863 = vadd.f32 %v4658, %v4862
  %4864 = vmatprep.mubr.f32.mxu0 0.0
  %v4865 = vand.u32 %v4425, 4294901760
  %4866 = vmatmul.mubr.f32.gmra.mxu0 %v4865
  %v4867 = vpop.f32.mrf.mxu0
  %v4868 = vadd.f32 %v4667, %v4867
  %v4869 = vpop.f32.mrf.mxu0
  %v4870 = vadd.f32 %v4669, %v4869
  %4871 = vmatprep.mubr.f32.mxu0 0.0
  %v4872 = vand.u32 %v4428, 4294901760
  %4873 = vmatmul.mubr.f32.gmra.mxu0 %v4872
  %v4874 = vpop.f32.mrf.mxu0
  %v4875 = vadd.f32 %v4678, %v4874
  %v4876 = vpop.f32.mrf.mxu0
  %v4877 = vadd.f32 %v4680, %v4876
  %4878 = vdwg.mxu0
  %4879 = vmatprep.subr.mxu0 0.0
  %4880 = vmatpush1.msra.mxu0 0.0
  %4881 = vmatprep.subr.mxu0 0.0
  %4882 = vmatpush1.msra.mxu0 0.0
  %4883 = vmatprep.subr.mxu0 0.0
  %4884 = vmatpush1.msra.mxu0 0.0
  %4885 = vmatprep.subr.mxu0 0.0
  %4886 = vmatpush1.msra.mxu0 0.0
  %4887 = vmatprep.subr.mxu0 0.0
  %4888 = vmatpush1.msra.mxu0 0.0
  %4889 = vmatprep.subr.mxu0 0.0
  %4890 = vmatpush1.msra.mxu0 0.0
  %4891 = vmatprep.subr.mxu0 0.0
  %4892 = vmatpush1.msra.mxu0 0.0
  %4893 = vmatprep.subr.mxu0 0.0
  %4894 = vmatpush1.msra.mxu0 0.0
  %4895 = vmatprep.subr.mxu0 0.0
  %4896 = vmatpush1.msra.mxu0 0.0
  %4897 = vmatprep.subr.mxu0 0.0
  %4898 = vmatpush1.msra.mxu0 0.0
  %4899 = vmatprep.subr.mxu0 0.0
  %4900 = vmatpush1.msra.mxu0 0.0
  %4901 = vmatprep.subr.mxu0 0.0
  %4902 = vmatpush1.msra.mxu0 0.0
  %4903 = vmatprep.subr.mxu0 0.0
  %4904 = vmatpush1.msra.mxu0 0.0
  %4905 = vmatprep.subr.mxu0 0.0
  %4906 = vmatpush1.msra.mxu0 0.0
  %v4907 = vand.u32 %v4435, 4294901760
  %v4908 = vsub.f32 %v4435, %v4907
  %4909 = vmatprep.subr.mxu0 %v4908
  %v4910 = vand.u32 %v4432, 4294901760
  %v4911 = vsub.f32 %v4432, %v4910
  %4912 = vmatpush1.msra.mxu0 %v4911
  %v4913 = vand.u32 %v4378, 4294901760
  %v4914 = vsub.f32 %v4378, %v4913
  %4915 = vmatprep.subr.mxu0 %v4914
  %v4916 = vand.u32 %v4377, 4294901760
  %v4917 = vsub.f32 %v4377, %v4916
  %4918 = vmatpush1.msra.mxu0 %v4917
  %4919 = vmatprep.subr.mxu0 0.0
  %4920 = vmatpush2.msra.mxu0 0.0
  %4921 = vmatprep.subr.mxu0 0.0
  %4922 = vmatpush2.msra.mxu0 0.0
  %4923 = vmatprep.subr.mxu0 0.0
  %4924 = vmatpush2.msra.mxu0 0.0
  %4925 = vmatprep.subr.mxu0 0.0
  %4926 = vmatpush2.msra.mxu0 0.0
  %4927 = vmatprep.subr.mxu0 0.0
  %4928 = vmatpush2.msra.mxu0 0.0
  %4929 = vmatprep.subr.mxu0 0.0
  %4930 = vmatpush2.msra.mxu0 0.0
  %4931 = vmatprep.subr.mxu0 0.0
  %4932 = vmatpush2.msra.mxu0 0.0
  %4933 = vmatprep.subr.mxu0 0.0
  %4934 = vmatpush2.msra.mxu0 0.0
  %4935 = vmatprep.subr.mxu0 0.0
  %4936 = vmatpush2.msra.mxu0 0.0
  %4937 = vmatprep.subr.mxu0 0.0
  %4938 = vmatpush2.msra.mxu0 0.0
  %4939 = vmatprep.subr.mxu0 0.0
  %4940 = vmatpush2.msra.mxu0 0.0
  %4941 = vmatprep.subr.mxu0 0.0
  %4942 = vmatpush2.msra.mxu0 0.0
  %4943 = vmatprep.subr.mxu0 0.0
  %4944 = vmatpush2.msra.mxu0 0.0
  %4945 = vmatprep.subr.mxu0 0.0
  %4946 = vmatpush2.msra.mxu0 0.0
  %4947 = vmatprep.subr.mxu0 0.0
  %4948 = vmatpush2.msra.mxu0 0.0
  %4949 = vmatprep.subr.mxu0 0.0
  %4950 = vmatpush2.msra.mxu0 0.0
  %4951 = vmatprep.mubr.f32.mxu0 0.0
  %v4952 = vand.u32 %v4383, 4294901760
  %v4953 = vsub.f32 %v4383, %v4952
  %4954 = vmatmul.mubr.f32.gmra.mxu0 %v4953
  %v4955 = vpop.f32.mrf.mxu0
  %v4956 = vadd.f32 %v4770, %v4955
  %v4957 = vpop.f32.mrf.mxu0
  %v4958 = vadd.f32 %v4772, %v4957
  %4959 = vmatprep.mubr.f32.mxu0 0.0
  %v4960 = vand.u32 %v4386, 4294901760
  %v4961 = vsub.f32 %v4386, %v4960
  %4962 = vmatmul.mubr.f32.gmra.mxu0 %v4961
  %v4963 = vpop.f32.mrf.mxu0
  %v4964 = vadd.f32 %v4777, %v4963
  %v4965 = vpop.f32.mrf.mxu0
  %v4966 = vadd.f32 %v4779, %v4965
  %4967 = vmatprep.mubr.f32.mxu0 0.0
  %v4968 = vand.u32 %v4389, 4294901760
  %v4969 = vsub.f32 %v4389, %v4968
  %4970 = vmatmul.mubr.f32.gmra.mxu0 %v4969
  %v4971 = vpop.f32.mrf.mxu0
  %v4972 = vadd.f32 %v4784, %v4971
  %v4973 = vpop.f32.mrf.mxu0
  %v4974 = vadd.f32 %v4786, %v4973
  %4975 = vmatprep.mubr.f32.mxu0 0.0
  %v4976 = vand.u32 %v4392, 4294901760
  %v4977 = vsub.f32 %v4392, %v4976
  %4978 = vmatmul.mubr.f32.gmra.mxu0 %v4977
  %v4979 = vpop.f32.mrf.mxu0
  %v4980 = vadd.f32 %v4791, %v4979
  %v4981 = vpop.f32.mrf.mxu0
  %v4982 = vadd.f32 %v4793, %v4981
  %4983 = vmatprep.mubr.f32.mxu0 0.0
  %v4984 = vand.u32 %v4395, 4294901760
  %v4985 = vsub.f32 %v4395, %v4984
  %4986 = vmatmul.mubr.f32.gmra.mxu0 %v4985
  %v4987 = vpop.f32.mrf.mxu0
  %v4988 = vadd.f32 %v4798, %v4987
  %v4989 = vpop.f32.mrf.mxu0
  %v4990 = vadd.f32 %v4800, %v4989
  %4991 = vmatprep.mubr.f32.mxu0 0.0
  %v4992 = vand.u32 %v4398, 4294901760
  %v4993 = vsub.f32 %v4398, %v4992
  %4994 = vmatmul.mubr.f32.gmra.mxu0 %v4993
  %v4995 = vpop.f32.mrf.mxu0
  %v4996 = vadd.f32 %v4805, %v4995
  %v4997 = vpop.f32.mrf.mxu0
  %v4998 = vadd.f32 %v4807, %v4997
  %4999 = vmatprep.mubr.f32.mxu0 0.0
  %v5000 = vand.u32 %v4401, 4294901760
  %v5001 = vsub.f32 %v4401, %v5000
  %5002 = vmatmul.mubr.f32.gmra.mxu0 %v5001
  %v5003 = vpop.f32.mrf.mxu0
  %v5004 = vadd.f32 %v4812, %v5003
  %v5005 = vpop.f32.mrf.mxu0
  %v5006 = vadd.f32 %v4814, %v5005
  %5007 = vmatprep.mubr.f32.mxu0 0.0
  %v5008 = vand.u32 %v4404, 4294901760
  %v5009 = vsub.f32 %v4404, %v5008
  %5010 = vmatmul.mubr.f32.gmra.mxu0 %v5009
  %v5011 = vpop.f32.mrf.mxu0
  %v5012 = vadd.f32 %v4819, %v5011
  %v5013 = vpop.f32.mrf.mxu0
  %v5014 = vadd.f32 %v4821, %v5013
  %5015 = vmatprep.mubr.f32.mxu0 0.0
  %v5016 = vand.u32 %v4407, 4294901760
  %v5017 = vsub.f32 %v4407, %v5016
  %5018 = vmatmul.mubr.f32.gmra.mxu0 %v5017
  %v5019 = vpop.f32.mrf.mxu0
  %v5020 = vadd.f32 %v4826, %v5019
  %v5021 = vpop.f32.mrf.mxu0
  %v5022 = vadd.f32 %v4828, %v5021
  %5023 = vmatprep.mubr.f32.mxu0 0.0
  %v5024 = vand.u32 %v4410, 4294901760
  %v5025 = vsub.f32 %v4410, %v5024
  %5026 = vmatmul.mubr.f32.gmra.mxu0 %v5025
  %v5027 = vpop.f32.mrf.mxu0
  %v5028 = vadd.f32 %v4833, %v5027
  %v5029 = vpop.f32.mrf.mxu0
  %v5030 = vadd.f32 %v4835, %v5029
  %5031 = vmatprep.mubr.f32.mxu0 0.0
  %v5032 = vand.u32 %v4413, 4294901760
  %v5033 = vsub.f32 %v4413, %v5032
  %5034 = vmatmul.mubr.f32.gmra.mxu0 %v5033
  %v5035 = vpop.f32.mrf.mxu0
  %v5036 = vadd.f32 %v4840, %v5035
  %v5037 = vpop.f32.mrf.mxu0
  %v5038 = vadd.f32 %v4842, %v5037
  %5039 = vmatprep.mubr.f32.mxu0 0.0
  %v5040 = vand.u32 %v4416, 4294901760
  %v5041 = vsub.f32 %v4416, %v5040
  %5042 = vmatmul.mubr.f32.gmra.mxu0 %v5041
  %v5043 = vpop.f32.mrf.mxu0
  %v5044 = vadd.f32 %v4847, %v5043
  %v5045 = vpop.f32.mrf.mxu0
  %v5046 = vadd.f32 %v4849, %v5045
  %5047 = vmatprep.mubr.f32.mxu0 0.0
  %v5048 = vand.u32 %v4419, 4294901760
  %v5049 = vsub.f32 %v4419, %v5048
  %5050 = vmatmul.mubr.f32.gmra.mxu0 %v5049
  %v5051 = vpop.f32.mrf.mxu0
  %v5052 = vadd.f32 %v4854, %v5051
  %v5053 = vpop.f32.mrf.mxu0
  %v5054 = vadd.f32 %v4856, %v5053
  %5055 = vmatprep.mubr.f32.mxu0 0.0
  %v5056 = vand.u32 %v4422, 4294901760
  %v5057 = vsub.f32 %v4422, %v5056
  %5058 = vmatmul.mubr.f32.gmra.mxu0 %v5057
  %v5059 = vpop.f32.mrf.mxu0
  %v5060 = vadd.f32 %v4861, %v5059
  %v5061 = vpop.f32.mrf.mxu0
  %v5062 = vadd.f32 %v4863, %v5061
  %5063 = vmatprep.mubr.f32.mxu0 0.0
  %v5064 = vand.u32 %v4425, 4294901760
  %v5065 = vsub.f32 %v4425, %v5064
  %5066 = vmatmul.mubr.f32.gmra.mxu0 %v5065
  %v5067 = vpop.f32.mrf.mxu0
  %v5068 = vadd.f32 %v4868, %v5067
  %v5069 = vpop.f32.mrf.mxu0
  %v5070 = vadd.f32 %v4870, %v5069
  %5071 = vmatprep.mubr.f32.mxu0 0.0
  %v5072 = vand.u32 %v4428, 4294901760
  %v5073 = vsub.f32 %v4428, %v5072
  %5074 = vmatmul.mubr.f32.gmra.mxu0 %v5073
  %v5075 = vpop.f32.mrf.mxu0
  %v5076 = vadd.f32 %v4875, %v5075
  %v5077 = vpop.f32.mrf.mxu0
  %v5078 = vadd.f32 %v4877, %v5077
  %5079 = vdwg.mxu0
  %5080 = vmatprep.subr.mxu0 0.0
  %5081 = vmatpush1.msra.mxu0 0.0
  %5082 = vmatprep.subr.mxu0 0.0
  %5083 = vmatpush1.msra.mxu0 0.0
  %5084 = vmatprep.subr.mxu0 0.0
  %5085 = vmatpush1.msra.mxu0 0.0
  %5086 = vmatprep.subr.mxu0 0.0
  %5087 = vmatpush1.msra.mxu0 0.0
  %5088 = vmatprep.subr.mxu0 0.0
  %5089 = vmatpush1.msra.mxu0 0.0
  %5090 = vmatprep.subr.mxu0 0.0
  %5091 = vmatpush1.msra.mxu0 0.0
  %5092 = vmatprep.subr.mxu0 0.0
  %5093 = vmatpush1.msra.mxu0 0.0
  %5094 = vmatprep.subr.mxu0 0.0
  %5095 = vmatpush1.msra.mxu0 0.0
  %5096 = vmatprep.subr.mxu0 0.0
  %5097 = vmatpush1.msra.mxu0 0.0
  %5098 = vmatprep.subr.mxu0 0.0
  %5099 = vmatpush1.msra.mxu0 0.0
  %5100 = vmatprep.subr.mxu0 0.0
  %5101 = vmatpush1.msra.mxu0 0.0
  %5102 = vmatprep.subr.mxu0 0.0
  %5103 = vmatpush1.msra.mxu0 0.0
  %5104 = vmatprep.subr.mxu0 0.0
  %5105 = vmatpush1.msra.mxu0 0.0
  %5106 = vmatprep.subr.mxu0 0.0
  %5107 = vmatpush1.msra.mxu0 0.0
  %v5108 = vand.u32 %v4435, 4294901760
  %5109 = vmatprep.subr.mxu0 %v5108
  %v5110 = vand.u32 %v4432, 4294901760
  %5111 = vmatpush1.msra.mxu0 %v5110
  %v5112 = vand.u32 %v4378, 4294901760
  %5113 = vmatprep.subr.mxu0 %v5112
  %v5114 = vand.u32 %v4377, 4294901760
  %5115 = vmatpush1.msra.mxu0 %v5114
  %5116 = vmatprep.subr.mxu0 0.0
  %5117 = vmatpush2.msra.mxu0 0.0
  %5118 = vmatprep.subr.mxu0 0.0
  %5119 = vmatpush2.msra.mxu0 0.0
  %5120 = vmatprep.subr.mxu0 0.0
  %5121 = vmatpush2.msra.mxu0 0.0
  %5122 = vmatprep.subr.mxu0 0.0
  %5123 = vmatpush2.msra.mxu0 0.0
  %5124 = vmatprep.subr.mxu0 0.0
  %5125 = vmatpush2.msra.mxu0 0.0
  %5126 = vmatprep.subr.mxu0 0.0
  %5127 = vmatpush2.msra.mxu0 0.0
  %5128 = vmatprep.subr.mxu0 0.0
  %5129 = vmatpush2.msra.mxu0 0.0
  %5130 = vmatprep.subr.mxu0 0.0
  %5131 = vmatpush2.msra.mxu0 0.0
  %5132 = vmatprep.subr.mxu0 0.0
  %5133 = vmatpush2.msra.mxu0 0.0
  %5134 = vmatprep.subr.mxu0 0.0
  %5135 = vmatpush2.msra.mxu0 0.0
  %5136 = vmatprep.subr.mxu0 0.0
  %5137 = vmatpush2.msra.mxu0 0.0
  %5138 = vmatprep.subr.mxu0 0.0
  %5139 = vmatpush2.msra.mxu0 0.0
  %5140 = vmatprep.subr.mxu0 0.0
  %5141 = vmatpush2.msra.mxu0 0.0
  %5142 = vmatprep.subr.mxu0 0.0
  %5143 = vmatpush2.msra.mxu0 0.0
  %5144 = vmatprep.subr.mxu0 0.0
  %5145 = vmatpush2.msra.mxu0 0.0
  %5146 = vmatprep.subr.mxu0 0.0
  %5147 = vmatpush2.msra.mxu0 0.0
  %5148 = vmatprep.mubr.f32.mxu0 0.0
  %v5149 = vand.u32 %v4383, 4294901760
  %v5150 = vsub.f32 %v4383, %v5149
  %v5151 = vand.u32 %v5150, 4294901760
  %5152 = vmatmul.mubr.f32.gmra.mxu0 %v5151
  %v5153 = vpop.f32.mrf.mxu0
  %v5154 = vadd.f32 %v4956, %v5153
  %v5155 = vpop.f32.mrf.mxu0
  %v5156 = vadd.f32 %v4958, %v5155
  %5157 = vmatprep.mubr.f32.mxu0 0.0
  %v5158 = vand.u32 %v4386, 4294901760
  %v5159 = vsub.f32 %v4386, %v5158
  %v5160 = vand.u32 %v5159, 4294901760
  %5161 = vmatmul.mubr.f32.gmra.mxu0 %v5160
  %v5162 = vpop.f32.mrf.mxu0
  %v5163 = vadd.f32 %v4964, %v5162
  %v5164 = vpop.f32.mrf.mxu0
  %v5165 = vadd.f32 %v4966, %v5164
  %5166 = vmatprep.mubr.f32.mxu0 0.0
  %v5167 = vand.u32 %v4389, 4294901760
  %v5168 = vsub.f32 %v4389, %v5167
  %v5169 = vand.u32 %v5168, 4294901760
  %5170 = vmatmul.mubr.f32.gmra.mxu0 %v5169
  %v5171 = vpop.f32.mrf.mxu0
  %v5172 = vadd.f32 %v4972, %v5171
  %v5173 = vpop.f32.mrf.mxu0
  %v5174 = vadd.f32 %v4974, %v5173
  %5175 = vmatprep.mubr.f32.mxu0 0.0
  %v5176 = vand.u32 %v4392, 4294901760
  %v5177 = vsub.f32 %v4392, %v5176
  %v5178 = vand.u32 %v5177, 4294901760
  %5179 = vmatmul.mubr.f32.gmra.mxu0 %v5178
  %v5180 = vpop.f32.mrf.mxu0
  %v5181 = vadd.f32 %v4980, %v5180
  %v5182 = vpop.f32.mrf.mxu0
  %v5183 = vadd.f32 %v4982, %v5182
  %5184 = vmatprep.mubr.f32.mxu0 0.0
  %v5185 = vand.u32 %v4395, 4294901760
  %v5186 = vsub.f32 %v4395, %v5185
  %v5187 = vand.u32 %v5186, 4294901760
  %5188 = vmatmul.mubr.f32.gmra.mxu0 %v5187
  %v5189 = vpop.f32.mrf.mxu0
  %v5190 = vadd.f32 %v4988, %v5189
  %v5191 = vpop.f32.mrf.mxu0
  %v5192 = vadd.f32 %v4990, %v5191
  %5193 = vmatprep.mubr.f32.mxu0 0.0
  %v5194 = vand.u32 %v4398, 4294901760
  %v5195 = vsub.f32 %v4398, %v5194
  %v5196 = vand.u32 %v5195, 4294901760
  %5197 = vmatmul.mubr.f32.gmra.mxu0 %v5196
  %v5198 = vpop.f32.mrf.mxu0
  %v5199 = vadd.f32 %v4996, %v5198
  %v5200 = vpop.f32.mrf.mxu0
  %v5201 = vadd.f32 %v4998, %v5200
  %5202 = vmatprep.mubr.f32.mxu0 0.0
  %v5203 = vand.u32 %v4401, 4294901760
  %v5204 = vsub.f32 %v4401, %v5203
  %v5205 = vand.u32 %v5204, 4294901760
  %5206 = vmatmul.mubr.f32.gmra.mxu0 %v5205
  %v5207 = vpop.f32.mrf.mxu0
  %v5208 = vadd.f32 %v5004, %v5207
  %v5209 = vpop.f32.mrf.mxu0
  %v5210 = vadd.f32 %v5006, %v5209
  %5211 = vmatprep.mubr.f32.mxu0 0.0
  %v5212 = vand.u32 %v4404, 4294901760
  %v5213 = vsub.f32 %v4404, %v5212
  %v5214 = vand.u32 %v5213, 4294901760
  %5215 = vmatmul.mubr.f32.gmra.mxu0 %v5214
  %v5216 = vpop.f32.mrf.mxu0
  %v5217 = vadd.f32 %v5012, %v5216
  %v5218 = vpop.f32.mrf.mxu0
  %v5219 = vadd.f32 %v5014, %v5218
  %5220 = vmatprep.mubr.f32.mxu0 0.0
  %v5221 = vand.u32 %v4407, 4294901760
  %v5222 = vsub.f32 %v4407, %v5221
  %v5223 = vand.u32 %v5222, 4294901760
  %5224 = vmatmul.mubr.f32.gmra.mxu0 %v5223
  %v5225 = vpop.f32.mrf.mxu0
  %v5226 = vadd.f32 %v5020, %v5225
  %v5227 = vpop.f32.mrf.mxu0
  %v5228 = vadd.f32 %v5022, %v5227
  %5229 = vmatprep.mubr.f32.mxu0 0.0
  %v5230 = vand.u32 %v4410, 4294901760
  %v5231 = vsub.f32 %v4410, %v5230
  %v5232 = vand.u32 %v5231, 4294901760
  %5233 = vmatmul.mubr.f32.gmra.mxu0 %v5232
  %v5234 = vpop.f32.mrf.mxu0
  %v5235 = vadd.f32 %v5028, %v5234
  %v5236 = vpop.f32.mrf.mxu0
  %v5237 = vadd.f32 %v5030, %v5236
  %5238 = vmatprep.mubr.f32.mxu0 0.0
  %v5239 = vand.u32 %v4413, 4294901760
  %v5240 = vsub.f32 %v4413, %v5239
  %v5241 = vand.u32 %v5240, 4294901760
  %5242 = vmatmul.mubr.f32.gmra.mxu0 %v5241
  %v5243 = vpop.f32.mrf.mxu0
  %v5244 = vadd.f32 %v5036, %v5243
  %v5245 = vpop.f32.mrf.mxu0
  %v5246 = vadd.f32 %v5038, %v5245
  %5247 = vmatprep.mubr.f32.mxu0 0.0
  %v5248 = vand.u32 %v4416, 4294901760
  %v5249 = vsub.f32 %v4416, %v5248
  %v5250 = vand.u32 %v5249, 4294901760
  %5251 = vmatmul.mubr.f32.gmra.mxu0 %v5250
  %v5252 = vpop.f32.mrf.mxu0
  %v5253 = vadd.f32 %v5044, %v5252
  %v5254 = vpop.f32.mrf.mxu0
  %v5255 = vadd.f32 %v5046, %v5254
  %5256 = vmatprep.mubr.f32.mxu0 0.0
  %v5257 = vand.u32 %v4419, 4294901760
  %v5258 = vsub.f32 %v4419, %v5257
  %v5259 = vand.u32 %v5258, 4294901760
  %5260 = vmatmul.mubr.f32.gmra.mxu0 %v5259
  %v5261 = vpop.f32.mrf.mxu0
  %v5262 = vadd.f32 %v5052, %v5261
  %v5263 = vpop.f32.mrf.mxu0
  %v5264 = vadd.f32 %v5054, %v5263
  %5265 = vmatprep.mubr.f32.mxu0 0.0
  %v5266 = vand.u32 %v4422, 4294901760
  %v5267 = vsub.f32 %v4422, %v5266
  %v5268 = vand.u32 %v5267, 4294901760
  %5269 = vmatmul.mubr.f32.gmra.mxu0 %v5268
  %v5270 = vpop.f32.mrf.mxu0
  %v5271 = vadd.f32 %v5060, %v5270
  %v5272 = vpop.f32.mrf.mxu0
  %v5273 = vadd.f32 %v5062, %v5272
  %5274 = vmatprep.mubr.f32.mxu0 0.0
  %v5275 = vand.u32 %v4425, 4294901760
  %v5276 = vsub.f32 %v4425, %v5275
  %v5277 = vand.u32 %v5276, 4294901760
  %5278 = vmatmul.mubr.f32.gmra.mxu0 %v5277
  %v5279 = vpop.f32.mrf.mxu0
  %v5280 = vadd.f32 %v5068, %v5279
  %v5281 = vpop.f32.mrf.mxu0
  %v5282 = vadd.f32 %v5070, %v5281
  %5283 = vmatprep.mubr.f32.mxu0 0.0
  %v5284 = vand.u32 %v4428, 4294901760
  %v5285 = vsub.f32 %v4428, %v5284
  %v5286 = vand.u32 %v5285, 4294901760
  %5287 = vmatmul.mubr.f32.gmra.mxu0 %v5286
  %v5288 = vpop.f32.mrf.mxu0
  %v5289 = vadd.f32 %v5076, %v5288
  %v5290 = vpop.f32.mrf.mxu0
  %v5291 = vadd.f32 %v5078, %v5290
  %5292 = vdwg.mxu0
  %5293 = vmatprep.subr.mxu0 0.0
  %5294 = vmatpush1.msra.mxu0 0.0
  %5295 = vmatprep.subr.mxu0 0.0
  %5296 = vmatpush1.msra.mxu0 0.0
  %5297 = vmatprep.subr.mxu0 0.0
  %5298 = vmatpush1.msra.mxu0 0.0
  %5299 = vmatprep.subr.mxu0 0.0
  %5300 = vmatpush1.msra.mxu0 0.0
  %5301 = vmatprep.subr.mxu0 0.0
  %5302 = vmatpush1.msra.mxu0 0.0
  %5303 = vmatprep.subr.mxu0 0.0
  %5304 = vmatpush1.msra.mxu0 0.0
  %5305 = vmatprep.subr.mxu0 0.0
  %5306 = vmatpush1.msra.mxu0 0.0
  %5307 = vmatprep.subr.mxu0 0.0
  %5308 = vmatpush1.msra.mxu0 0.0
  %5309 = vmatprep.subr.mxu0 0.0
  %5310 = vmatpush1.msra.mxu0 0.0
  %5311 = vmatprep.subr.mxu0 0.0
  %5312 = vmatpush1.msra.mxu0 0.0
  %5313 = vmatprep.subr.mxu0 0.0
  %5314 = vmatpush1.msra.mxu0 0.0
  %5315 = vmatprep.subr.mxu0 0.0
  %5316 = vmatpush1.msra.mxu0 0.0
  %5317 = vmatprep.subr.mxu0 0.0
  %5318 = vmatpush1.msra.mxu0 0.0
  %5319 = vmatprep.subr.mxu0 0.0
  %5320 = vmatpush1.msra.mxu0 0.0
  %v5321 = vand.u32 %v4435, 4294901760
  %v5322 = vsub.f32 %v4435, %v5321
  %v5323 = vand.u32 %v5322, 4294901760
  %5324 = vmatprep.subr.mxu0 %v5323
  %v5325 = vand.u32 %v4432, 4294901760
  %v5326 = vsub.f32 %v4432, %v5325
  %v5327 = vand.u32 %v5326, 4294901760
  %5328 = vmatpush1.msra.mxu0 %v5327
  %v5329 = vand.u32 %v4378, 4294901760
  %v5330 = vsub.f32 %v4378, %v5329
  %v5331 = vand.u32 %v5330, 4294901760
  %5332 = vmatprep.subr.mxu0 %v5331
  %v5333 = vand.u32 %v4377, 4294901760
  %v5334 = vsub.f32 %v4377, %v5333
  %v5335 = vand.u32 %v5334, 4294901760
  %5336 = vmatpush1.msra.mxu0 %v5335
  %5337 = vmatprep.subr.mxu0 0.0
  %5338 = vmatpush2.msra.mxu0 0.0
  %5339 = vmatprep.subr.mxu0 0.0
  %5340 = vmatpush2.msra.mxu0 0.0
  %5341 = vmatprep.subr.mxu0 0.0
  %5342 = vmatpush2.msra.mxu0 0.0
  %5343 = vmatprep.subr.mxu0 0.0
  %5344 = vmatpush2.msra.mxu0 0.0
  %5345 = vmatprep.subr.mxu0 0.0
  %5346 = vmatpush2.msra.mxu0 0.0
  %5347 = vmatprep.subr.mxu0 0.0
  %5348 = vmatpush2.msra.mxu0 0.0
  %5349 = vmatprep.subr.mxu0 0.0
  %5350 = vmatpush2.msra.mxu0 0.0
  %5351 = vmatprep.subr.mxu0 0.0
  %5352 = vmatpush2.msra.mxu0 0.0
  %5353 = vmatprep.subr.mxu0 0.0
  %5354 = vmatpush2.msra.mxu0 0.0
  %5355 = vmatprep.subr.mxu0 0.0
  %5356 = vmatpush2.msra.mxu0 0.0
  %5357 = vmatprep.subr.mxu0 0.0
  %5358 = vmatpush2.msra.mxu0 0.0
  %5359 = vmatprep.subr.mxu0 0.0
  %5360 = vmatpush2.msra.mxu0 0.0
  %5361 = vmatprep.subr.mxu0 0.0
  %5362 = vmatpush2.msra.mxu0 0.0
  %5363 = vmatprep.subr.mxu0 0.0
  %5364 = vmatpush2.msra.mxu0 0.0
  %5365 = vmatprep.subr.mxu0 0.0
  %5366 = vmatpush2.msra.mxu0 0.0
  %5367 = vmatprep.subr.mxu0 0.0
  %5368 = vmatpush2.msra.mxu0 0.0
  %5369 = vmatprep.mubr.f32.mxu0 0.0
  %v5370 = vand.u32 %v4383, 4294901760
  %5371 = vmatmul.mubr.f32.gmra.mxu0 %v5370
  %v5372 = vpop.f32.mrf.mxu0
  %v5373 = vadd.f32 %v5154, %v5372
  %v5374 = vpop.f32.mrf.mxu0
  %v5375 = vadd.f32 %v5156, %v5374
  %5376 = vmatprep.mubr.f32.mxu0 0.0
  %v5377 = vand.u32 %v4386, 4294901760
  %5378 = vmatmul.mubr.f32.gmra.mxu0 %v5377
  %v5379 = vpop.f32.mrf.mxu0
  %v5380 = vadd.f32 %v5163, %v5379
  %v5381 = vpop.f32.mrf.mxu0
  %v5382 = vadd.f32 %v5165, %v5381
  %5383 = vmatprep.mubr.f32.mxu0 0.0
  %v5384 = vand.u32 %v4389, 4294901760
  %5385 = vmatmul.mubr.f32.gmra.mxu0 %v5384
  %v5386 = vpop.f32.mrf.mxu0
  %v5387 = vadd.f32 %v5172, %v5386
  %v5388 = vpop.f32.mrf.mxu0
  %v5389 = vadd.f32 %v5174, %v5388
  %5390 = vmatprep.mubr.f32.mxu0 0.0
  %v5391 = vand.u32 %v4392, 4294901760
  %5392 = vmatmul.mubr.f32.gmra.mxu0 %v5391
  %v5393 = vpop.f32.mrf.mxu0
  %v5394 = vadd.f32 %v5181, %v5393
  %v5395 = vpop.f32.mrf.mxu0
  %v5396 = vadd.f32 %v5183, %v5395
  %5397 = vmatprep.mubr.f32.mxu0 0.0
  %v5398 = vand.u32 %v4395, 4294901760
  %5399 = vmatmul.mubr.f32.gmra.mxu0 %v5398
  %v5400 = vpop.f32.mrf.mxu0
  %v5401 = vadd.f32 %v5190, %v5400
  %v5402 = vpop.f32.mrf.mxu0
  %v5403 = vadd.f32 %v5192, %v5402
  %5404 = vmatprep.mubr.f32.mxu0 0.0
  %v5405 = vand.u32 %v4398, 4294901760
  %5406 = vmatmul.mubr.f32.gmra.mxu0 %v5405
  %v5407 = vpop.f32.mrf.mxu0
  %v5408 = vadd.f32 %v5199, %v5407
  %v5409 = vpop.f32.mrf.mxu0
  %v5410 = vadd.f32 %v5201, %v5409
  %5411 = vmatprep.mubr.f32.mxu0 0.0
  %v5412 = vand.u32 %v4401, 4294901760
  %5413 = vmatmul.mubr.f32.gmra.mxu0 %v5412
  %v5414 = vpop.f32.mrf.mxu0
  %v5415 = vadd.f32 %v5208, %v5414
  %v5416 = vpop.f32.mrf.mxu0
  %v5417 = vadd.f32 %v5210, %v5416
  %5418 = vmatprep.mubr.f32.mxu0 0.0
  %v5419 = vand.u32 %v4404, 4294901760
  %5420 = vmatmul.mubr.f32.gmra.mxu0 %v5419
  %v5421 = vpop.f32.mrf.mxu0
  %v5422 = vadd.f32 %v5217, %v5421
  %v5423 = vpop.f32.mrf.mxu0
  %v5424 = vadd.f32 %v5219, %v5423
  %5425 = vmatprep.mubr.f32.mxu0 0.0
  %v5426 = vand.u32 %v4407, 4294901760
  %5427 = vmatmul.mubr.f32.gmra.mxu0 %v5426
  %v5428 = vpop.f32.mrf.mxu0
  %v5429 = vadd.f32 %v5226, %v5428
  %v5430 = vpop.f32.mrf.mxu0
  %v5431 = vadd.f32 %v5228, %v5430
  %5432 = vmatprep.mubr.f32.mxu0 0.0
  %v5433 = vand.u32 %v4410, 4294901760
  %5434 = vmatmul.mubr.f32.gmra.mxu0 %v5433
  %v5435 = vpop.f32.mrf.mxu0
  %v5436 = vadd.f32 %v5235, %v5435
  %v5437 = vpop.f32.mrf.mxu0
  %v5438 = vadd.f32 %v5237, %v5437
  %5439 = vmatprep.mubr.f32.mxu0 0.0
  %v5440 = vand.u32 %v4413, 4294901760
  %5441 = vmatmul.mubr.f32.gmra.mxu0 %v5440
  %v5442 = vpop.f32.mrf.mxu0
  %v5443 = vadd.f32 %v5244, %v5442
  %v5444 = vpop.f32.mrf.mxu0
  %v5445 = vadd.f32 %v5246, %v5444
  %5446 = vmatprep.mubr.f32.mxu0 0.0
  %v5447 = vand.u32 %v4416, 4294901760
  %5448 = vmatmul.mubr.f32.gmra.mxu0 %v5447
  %v5449 = vpop.f32.mrf.mxu0
  %v5450 = vadd.f32 %v5253, %v5449
  %v5451 = vpop.f32.mrf.mxu0
  %v5452 = vadd.f32 %v5255, %v5451
  %5453 = vmatprep.mubr.f32.mxu0 0.0
  %v5454 = vand.u32 %v4419, 4294901760
  %5455 = vmatmul.mubr.f32.gmra.mxu0 %v5454
  %v5456 = vpop.f32.mrf.mxu0
  %v5457 = vadd.f32 %v5262, %v5456
  %v5458 = vpop.f32.mrf.mxu0
  %v5459 = vadd.f32 %v5264, %v5458
  %5460 = vmatprep.mubr.f32.mxu0 0.0
  %v5461 = vand.u32 %v4422, 4294901760
  %5462 = vmatmul.mubr.f32.gmra.mxu0 %v5461
  %v5463 = vpop.f32.mrf.mxu0
  %v5464 = vadd.f32 %v5271, %v5463
  %v5465 = vpop.f32.mrf.mxu0
  %v5466 = vadd.f32 %v5273, %v5465
  %5467 = vmatprep.mubr.f32.mxu0 0.0
  %v5468 = vand.u32 %v4425, 4294901760
  %5469 = vmatmul.mubr.f32.gmra.mxu0 %v5468
  %v5470 = vpop.f32.mrf.mxu0
  %v5471 = vadd.f32 %v5280, %v5470
  %v5472 = vpop.f32.mrf.mxu0
  %v5473 = vadd.f32 %v5282, %v5472
  %5474 = vmatprep.mubr.f32.mxu0 0.0
  %v5475 = vand.u32 %v4428, 4294901760
  %5476 = vmatmul.mubr.f32.gmra.mxu0 %v5475
  %v5477 = vpop.f32.mrf.mxu0
  %v5478 = vadd.f32 %v5289, %v5477
  %v5479 = vpop.f32.mrf.mxu0
  %v5480 = vadd.f32 %v5291, %v5479
  %5481 = vdwg.mxu0
  %5482 = vmatprep.subr.mxu0 0.0
  %5483 = vmatpush1.msra.mxu0 0.0
  %5484 = vmatprep.subr.mxu0 0.0
  %5485 = vmatpush1.msra.mxu0 0.0
  %5486 = vmatprep.subr.mxu0 0.0
  %5487 = vmatpush1.msra.mxu0 0.0
  %5488 = vmatprep.subr.mxu0 0.0
  %5489 = vmatpush1.msra.mxu0 0.0
  %5490 = vmatprep.subr.mxu0 0.0
  %5491 = vmatpush1.msra.mxu0 0.0
  %5492 = vmatprep.subr.mxu0 0.0
  %5493 = vmatpush1.msra.mxu0 0.0
  %5494 = vmatprep.subr.mxu0 0.0
  %5495 = vmatpush1.msra.mxu0 0.0
  %5496 = vmatprep.subr.mxu0 0.0
  %5497 = vmatpush1.msra.mxu0 0.0
  %5498 = vmatprep.subr.mxu0 0.0
  %5499 = vmatpush1.msra.mxu0 0.0
  %5500 = vmatprep.subr.mxu0 0.0
  %5501 = vmatpush1.msra.mxu0 0.0
  %5502 = vmatprep.subr.mxu0 0.0
  %5503 = vmatpush1.msra.mxu0 0.0
  %5504 = vmatprep.subr.mxu0 0.0
  %5505 = vmatpush1.msra.mxu0 0.0
  %5506 = vmatprep.subr.mxu0 0.0
  %5507 = vmatpush1.msra.mxu0 0.0
  %5508 = vmatprep.subr.mxu0 0.0
  %5509 = vmatpush1.msra.mxu0 0.0
  %v5510 = vand.u32 %v4435, 4294901760
  %5511 = vmatprep.subr.mxu0 %v5510
  %v5512 = vand.u32 %v4432, 4294901760
  %5513 = vmatpush1.msra.mxu0 %v5512
  %v5514 = vand.u32 %v4378, 4294901760
  %5515 = vmatprep.subr.mxu0 %v5514
  %v5516 = vand.u32 %v4377, 4294901760
  %5517 = vmatpush1.msra.mxu0 %v5516
  %5518 = vmatprep.subr.mxu0 0.0
  %5519 = vmatpush2.msra.mxu0 0.0
  %5520 = vmatprep.subr.mxu0 0.0
  %5521 = vmatpush2.msra.mxu0 0.0
  %5522 = vmatprep.subr.mxu0 0.0
  %5523 = vmatpush2.msra.mxu0 0.0
  %5524 = vmatprep.subr.mxu0 0.0
  %5525 = vmatpush2.msra.mxu0 0.0
  %5526 = vmatprep.subr.mxu0 0.0
  %5527 = vmatpush2.msra.mxu0 0.0
  %5528 = vmatprep.subr.mxu0 0.0
  %5529 = vmatpush2.msra.mxu0 0.0
  %5530 = vmatprep.subr.mxu0 0.0
  %5531 = vmatpush2.msra.mxu0 0.0
  %5532 = vmatprep.subr.mxu0 0.0
  %5533 = vmatpush2.msra.mxu0 0.0
  %5534 = vmatprep.subr.mxu0 0.0
  %5535 = vmatpush2.msra.mxu0 0.0
  %5536 = vmatprep.subr.mxu0 0.0
  %5537 = vmatpush2.msra.mxu0 0.0
  %5538 = vmatprep.subr.mxu0 0.0
  %5539 = vmatpush2.msra.mxu0 0.0
  %5540 = vmatprep.subr.mxu0 0.0
  %5541 = vmatpush2.msra.mxu0 0.0
  %5542 = vmatprep.subr.mxu0 0.0
  %5543 = vmatpush2.msra.mxu0 0.0
  %5544 = vmatprep.subr.mxu0 0.0
  %5545 = vmatpush2.msra.mxu0 0.0
  %5546 = vmatprep.subr.mxu0 0.0
  %5547 = vmatpush2.msra.mxu0 0.0
  %5548 = vmatprep.subr.mxu0 0.0
  %5549 = vmatpush2.msra.mxu0 0.0
  %5550 = vmatprep.mubr.f32.mxu0 0.0
  %v5551 = vand.u32 %v4383, 4294901760
  %5552 = vmatmul.mubr.f32.gmra.mxu0 %v5551
  %v5553 = vpop.f32.mrf.mxu0
  %v5554 = vadd.f32 %v5373, %v5553
  %v5555 = vpop.f32.mrf.mxu0
  %v5556 = vadd.f32 %v5375, %v5555
  %5557 = vmatprep.mubr.f32.mxu0 0.0
  %v5558 = vand.u32 %v4386, 4294901760
  %5559 = vmatmul.mubr.f32.gmra.mxu0 %v5558
  %v5560 = vpop.f32.mrf.mxu0
  %v5561 = vadd.f32 %v5380, %v5560
  %v5562 = vpop.f32.mrf.mxu0
  %v5563 = vadd.f32 %v5382, %v5562
  %5564 = vmatprep.mubr.f32.mxu0 0.0
  %v5565 = vand.u32 %v4389, 4294901760
  %5566 = vmatmul.mubr.f32.gmra.mxu0 %v5565
  %v5567 = vpop.f32.mrf.mxu0
  %v5568 = vadd.f32 %v5387, %v5567
  %v5569 = vpop.f32.mrf.mxu0
  %v5570 = vadd.f32 %v5389, %v5569
  %5571 = vmatprep.mubr.f32.mxu0 0.0
  %v5572 = vand.u32 %v4392, 4294901760
  %5573 = vmatmul.mubr.f32.gmra.mxu0 %v5572
  %v5574 = vpop.f32.mrf.mxu0
  %v5575 = vadd.f32 %v5394, %v5574
  %v5576 = vpop.f32.mrf.mxu0
  %v5577 = vadd.f32 %v5396, %v5576
  %5578 = vmatprep.mubr.f32.mxu0 0.0
  %v5579 = vand.u32 %v4395, 4294901760
  %5580 = vmatmul.mubr.f32.gmra.mxu0 %v5579
  %v5581 = vpop.f32.mrf.mxu0
  %v5582 = vadd.f32 %v5401, %v5581
  %v5583 = vpop.f32.mrf.mxu0
  %v5584 = vadd.f32 %v5403, %v5583
  %5585 = vmatprep.mubr.f32.mxu0 0.0
  %v5586 = vand.u32 %v4398, 4294901760
  %5587 = vmatmul.mubr.f32.gmra.mxu0 %v5586
  %v5588 = vpop.f32.mrf.mxu0
  %v5589 = vadd.f32 %v5408, %v5588
  %v5590 = vpop.f32.mrf.mxu0
  %v5591 = vadd.f32 %v5410, %v5590
  %5592 = vmatprep.mubr.f32.mxu0 0.0
  %v5593 = vand.u32 %v4401, 4294901760
  %5594 = vmatmul.mubr.f32.gmra.mxu0 %v5593
  %v5595 = vpop.f32.mrf.mxu0
  %v5596 = vadd.f32 %v5415, %v5595
  %v5597 = vpop.f32.mrf.mxu0
  %v5598 = vadd.f32 %v5417, %v5597
  %5599 = vmatprep.mubr.f32.mxu0 0.0
  %v5600 = vand.u32 %v4404, 4294901760
  %5601 = vmatmul.mubr.f32.gmra.mxu0 %v5600
  %v5602 = vpop.f32.mrf.mxu0
  %v5603 = vadd.f32 %v5422, %v5602
  %v5604 = vpop.f32.mrf.mxu0
  %v5605 = vadd.f32 %v5424, %v5604
  %5606 = vmatprep.mubr.f32.mxu0 0.0
  %v5607 = vand.u32 %v4407, 4294901760
  %5608 = vmatmul.mubr.f32.gmra.mxu0 %v5607
  %v5609 = vpop.f32.mrf.mxu0
  %v5610 = vadd.f32 %v5429, %v5609
  %v5611 = vpop.f32.mrf.mxu0
  %v5612 = vadd.f32 %v5431, %v5611
  %5613 = vmatprep.mubr.f32.mxu0 0.0
  %v5614 = vand.u32 %v4410, 4294901760
  %5615 = vmatmul.mubr.f32.gmra.mxu0 %v5614
  %v5616 = vpop.f32.mrf.mxu0
  %v5617 = vadd.f32 %v5436, %v5616
  %v5618 = vpop.f32.mrf.mxu0
  %v5619 = vadd.f32 %v5438, %v5618
  %5620 = vmatprep.mubr.f32.mxu0 0.0
  %v5621 = vand.u32 %v4413, 4294901760
  %5622 = vmatmul.mubr.f32.gmra.mxu0 %v5621
  %v5623 = vpop.f32.mrf.mxu0
  %v5624 = vadd.f32 %v5443, %v5623
  %v5625 = vpop.f32.mrf.mxu0
  %v5626 = vadd.f32 %v5445, %v5625
  %5627 = vmatprep.mubr.f32.mxu0 0.0
  %v5628 = vand.u32 %v4416, 4294901760
  %5629 = vmatmul.mubr.f32.gmra.mxu0 %v5628
  %v5630 = vpop.f32.mrf.mxu0
  %v5631 = vadd.f32 %v5450, %v5630
  %v5632 = vpop.f32.mrf.mxu0
  %v5633 = vadd.f32 %v5452, %v5632
  %5634 = vmatprep.mubr.f32.mxu0 0.0
  %v5635 = vand.u32 %v4419, 4294901760
  %5636 = vmatmul.mubr.f32.gmra.mxu0 %v5635
  %v5637 = vpop.f32.mrf.mxu0
  %v5638 = vadd.f32 %v5457, %v5637
  %v5639 = vpop.f32.mrf.mxu0
  %v5640 = vadd.f32 %v5459, %v5639
  %5641 = vmatprep.mubr.f32.mxu0 0.0
  %v5642 = vand.u32 %v4422, 4294901760
  %5643 = vmatmul.mubr.f32.gmra.mxu0 %v5642
  %v5644 = vpop.f32.mrf.mxu0
  %v5645 = vadd.f32 %v5464, %v5644
  %v5646 = vpop.f32.mrf.mxu0
  %v5647 = vadd.f32 %v5466, %v5646
  %5648 = vmatprep.mubr.f32.mxu0 0.0
  %v5649 = vand.u32 %v4425, 4294901760
  %5650 = vmatmul.mubr.f32.gmra.mxu0 %v5649
  %v5651 = vpop.f32.mrf.mxu0
  %v5652 = vadd.f32 %v5471, %v5651
  %v5653 = vpop.f32.mrf.mxu0
  %v5654 = vadd.f32 %v5473, %v5653
  %5655 = vmatprep.mubr.f32.mxu0 0.0
  %v5656 = vand.u32 %v4428, 4294901760
  %5657 = vmatmul.mubr.f32.gmra.mxu0 %v5656
  %v5658 = vpop.f32.mrf.mxu0
  %v5659 = vadd.f32 %v5478, %v5658
  %v5660 = vpop.f32.mrf.mxu0
  %v5661 = vadd.f32 %v5480, %v5660
  %5662 = vdwg.mxu0
  %v5663 = vmul.f32 %v5554, %v4247
  %v5664 = vmul.f32 %v5556, %v4249
  %v5665 = vmul.f32 %v5561, %v4254
  %v5666 = vmul.f32 %v5563, %v4256
  %v5667 = vmul.f32 %v5568, %v4261
  %v5668 = vmul.f32 %v5570, %v4263
  %v5669 = vmul.f32 %v5575, %v4268
  %v5670 = vmul.f32 %v5577, %v4270
  %v5671 = vmul.f32 %v5582, %v4275
  %v5672 = vmul.f32 %v5584, %v4277
  %v5673 = vmul.f32 %v5589, %v4282
  %v5674 = vmul.f32 %v5591, %v4284
  %v5675 = vmul.f32 %v5596, %v4289
  %v5676 = vmul.f32 %v5598, %v4291
  %v5677 = vmul.f32 %v5603, %v4296
  %v5678 = vmul.f32 %v5605, %v4298
  %v5679 = vmul.f32 %v5610, %v4303
  %v5680 = vmul.f32 %v5612, %v4305
  %v5681 = vmul.f32 %v5617, %v4310
  %v5682 = vmul.f32 %v5619, %v4312
  %v5683 = vmul.f32 %v5624, %v4317
  %v5684 = vmul.f32 %v5626, %v4319
  %v5685 = vmul.f32 %v5631, %v4324
  %v5686 = vmul.f32 %v5633, %v4326
  %v5687 = vmul.f32 %v5638, %v4331
  %v5688 = vmul.f32 %v5640, %v4333
  %v5689 = vmul.f32 %v5645, %v4338
  %v5690 = vmul.f32 %v5647, %v4340
  %v5691 = vmul.f32 %v5652, %v4345
  %v5692 = vmul.f32 %v5654, %v4347
  %v5693 = vmul.f32 %v5659, %v4352
  %v5694 = vmul.f32 %v5661, %v4354
  %5695 = vst [vmem:[%s6] sm:$0xff] %v5663
  %vm5696 = vcmask 523264
  %5697 = vst.msk [vmem:[%s6 + $0x8] sm:$0xff] %vm5696, %v5664
  %5698 = vst [vmem:[%s6 + $0x10] sm:$0xff] %v5665
  %5699 = vst.msk [vmem:[%s6 + $0x18] sm:$0xff] %vm5696, %v5666
  %5700 = vst [vmem:[%s6 + $0x20] sm:$0xff] %v5667
  %5701 = vst.msk [vmem:[%s6 + $0x28] sm:$0xff] %vm5696, %v5668
  %5702 = vst [vmem:[%s6 + $0x30] sm:$0xff] %v5669
  %5703 = vst.msk [vmem:[%s6 + $0x38] sm:$0xff] %vm5696, %v5670
  %5704 = vst [vmem:[%s6 + $0x40] sm:$0xff] %v5671
  %5705 = vst.msk [vmem:[%s6 + $0x48] sm:$0xff] %vm5696, %v5672
  %5706 = vst [vmem:[%s6 + $0x50] sm:$0xff] %v5673
  %5707 = vst.msk [vmem:[%s6 + $0x58] sm:$0xff] %vm5696, %v5674
  %5708 = vst [vmem:[%s6 + $0x60] sm:$0xff] %v5675
  %5709 = vst.msk [vmem:[%s6 + $0x68] sm:$0xff] %vm5696, %v5676
  %5710 = vst [vmem:[%s6 + $0x70] sm:$0xff] %v5677
  %5711 = vst.msk [vmem:[%s6 + $0x78] sm:$0xff] %vm5696, %v5678
  %5712 = vst [vmem:[%s6 + $0x80] sm:$0xff] %v5679
  %5713 = vst.msk [vmem:[%s6 + $0x88] sm:$0xff] %vm5696, %v5680
  %5714 = vst [vmem:[%s6 + $0x90] sm:$0xff] %v5681
  %5715 = vst.msk [vmem:[%s6 + $0x98] sm:$0xff] %vm5696, %v5682
  %5716 = vst [vmem:[%s6 + $0xa0] sm:$0xff] %v5683
  %5717 = vst.msk [vmem:[%s6 + $0xa8] sm:$0xff] %vm5696, %v5684
  %5718 = vst [vmem:[%s6 + $0xb0] sm:$0xff] %v5685
  %5719 = vst.msk [vmem:[%s6 + $0xb8] sm:$0xff] %vm5696, %v5686
  %5720 = vst [vmem:[%s6 + $0xc0] sm:$0xff] %v5687
  %5721 = vst.msk [vmem:[%s6 + $0xc8] sm:$0xff] %vm5696, %v5688
  %5722 = vst [vmem:[%s6 + $0xd0] sm:$0xff] %v5689
  %5723 = vst.msk [vmem:[%s6 + $0xd8] sm:$0xff] %vm5696, %v5690
  %5724 = vst [vmem:[%s6 + $0xe0] sm:$0xff] %v5691
  %5725 = vst.msk [vmem:[%s6 + $0xe8] sm:$0xff] %vm5696, %v5692
  %5726 = vst [vmem:[%s6 + $0xf0] sm:$0xff] %v5693
  %5727 = vst.msk [vmem:[%s6 + $0xf8] sm:$0xff] %vm5696, %v5694
  // Predicated region
  $region26: #{tpu_custom_call.1} parent=0 // pred_check
    _
  $region27: #{tpu_custom_call.1} parent=0 // pred_check_branch
    %5729 = sbr.rel (0) target = $region29
  $region28: #{tpu_custom_call.1} parent=0 // pred_region
    _
  $region29: #{tpu_custom_call.1} parent=0 // pred_fallthru
    _
  // Predicated region
  $region30: #{tpu_custom_call.1} parent=0 // pred_check
    _
  $region31: #{tpu_custom_call.1} parent=0 // pred_check_branch
    %5731 = sbr.rel (0) target = $region33
  $region32: #{tpu_custom_call.1} parent=0 // pred_region
    _
  $region33: #{tpu_custom_call.1} parent=0 // pred_fallthru
    _

</llo_original>
